<compile_context>
chip_gen: v5e
topology: v5e:2x2
jax: 0.10.0
libtpu: 0.0.40
codegen_flags: <defaults>
</compile_context>

<pallas_src>
import functools
import math

import jax
import jax.numpy as jnp
from jax.experimental import pallas as pl
from jax.experimental.pallas import tpu as pltpu


# ----------------------------------------------------------------------------
# Kernel: one grid step == (one batch element, one decoder layer)
# ----------------------------------------------------------------------------
def _decoder_layer_kernel(
    x_ref, mem_ref, src_bias_ref, tgt_bias_ref,
    # self-attention (layer-stacked, full-width)
    sa_wq, sa_bq, sa_wk, sa_bk, sa_wv, sa_bv, sa_wo, sa_bo,
    # cross-attention (layer-stacked, full-width)
    ca_wq, ca_bq, ca_wk, ca_bk, ca_wv, ca_bv, ca_wo, ca_bo,
    # feed-forward (layer-stacked)
    ff_w1, ff_b1, ff_w2, ff_b2,
    # per-layer layer norms
    ln0_a, ln0_b, ln1_a, ln1_b, ln2_a, ln2_b,
    # final norm
    fn_a, fn_b,
    o_ref,
    x_sc,
    *, n_heads, eps):
  _, s_q, d_model = x_ref.shape
  dk = d_model // n_heads
  scale = 1.0 / math.sqrt(dk)

  l = pl.program_id(1)
  last = pl.num_programs(1) - 1

  def layer_norm(v, a, b):
    # Annotated-Transformer LayerNorm: a*(x-mean)/(std+eps)+b, unbiased std.
    mean = jnp.mean(v, axis=-1, keepdims=True)
    c = v - mean
    var = jnp.sum(c * c, axis=-1, keepdims=True) * (1.0 / (d_model - 1))
    inv = pl.reciprocal(jnp.sqrt(var) + eps, approx=True)   # EUP slot
    return a * c * inv + b

  def softmax(s):
    m = jnp.max(s, axis=-1, keepdims=True)
    e = jnp.exp(s - m)
    return e * pl.reciprocal(jnp.sum(e, axis=-1, keepdims=True), approx=True)

  def split_heads(t, rows):           # (rows, D) f32 -> (H, rows, dk) bf16
    return jnp.transpose(t.reshape(rows, n_heads, dk),
                         (1, 0, 2)).astype(jnp.bfloat16)

  def mha(q_in, kv_in, bias, wq, bq, wk, bk, wv, bv, wo, bo):
    rows_q, rows_k = q_in.shape[0], kv_in.shape[0]
    qb = q_in.astype(jnp.bfloat16)
    kb = kv_in.astype(jnp.bfloat16)
    # Full-width, lane-dense projections (one MXU dot each).
    q = jnp.dot(qb, wq, preferred_element_type=jnp.float32) + bq
    k = jnp.dot(kb, wk, preferred_element_type=jnp.float32) + bk
    v = jnp.dot(kb, wv, preferred_element_type=jnp.float32) + bv
    qh = split_heads(q, rows_q)        # (H, Sq, dk)
    kh = split_heads(k, rows_k)        # (H, Sk, dk)
    vh = split_heads(v, rows_k)        # (H, Sk, dk)
    # Batched-over-heads scores; contracts last dims -> no explicit K.T.
    s = jnp.einsum("hqd,hkd->hqk", qh, kh,
                   preferred_element_type=jnp.float32) * scale
    p = softmax(s + bias)              # additive 0/-1e9 mask bias
    ctx = jnp.einsum("hqk,hkd->hqd", p.astype(jnp.bfloat16), vh,
                     preferred_element_type=jnp.float32)
    ctx = jnp.transpose(ctx, (1, 0, 2)).reshape(rows_q, d_model)
    # Single full-width output projection (== concat-heads-then-project).
    return jnp.dot(ctx.astype(jnp.bfloat16), wo,
                   preferred_element_type=jnp.float32) + bo

  # Load / carry the running activation across the layer grid axis.
  @pl.when(l == 0)
  def _():
    x_sc[...] = x_ref[0].astype(jnp.float32)

  x = x_sc[...]                               # (Sq, D) f32
  mem = mem_ref[0].astype(jnp.float32)        # (Sk, D)
  src_bias = src_bias_ref[0]                  # (1, Sk)  broadcasts over H, Sq
  tgt_bias = tgt_bias_ref[0]                  # (Sq, Sq) broadcasts over H

  # --- self-attention sublayer: x + self_attn(norm(x)) ---
  nx = layer_norm(x, ln0_a[0], ln0_b[0])
  x = x + mha(nx, nx, tgt_bias,
              sa_wq[0], sa_bq[0], sa_wk[0], sa_bk[0],
              sa_wv[0], sa_bv[0], sa_wo[0], sa_bo[0])

  # --- cross-attention sublayer: x + src_attn(norm(x), memory, memory) ---
  nx = layer_norm(x, ln1_a[0], ln1_b[0])
  x = x + mha(nx, mem, src_bias,
              ca_wq[0], ca_bq[0], ca_wk[0], ca_bk[0],
              ca_wv[0], ca_bv[0], ca_wo[0], ca_bo[0])

  # --- feed-forward sublayer: x + w2(relu(w1(norm(x)))) ---
  nx = layer_norm(x, ln2_a[0], ln2_b[0])
  hid = jnp.maximum(
      jnp.dot(nx.astype(jnp.bfloat16), ff_w1[0],
              preferred_element_type=jnp.float32) + ff_b1[0], 0.0)
  x = x + jnp.dot(hid.astype(jnp.bfloat16), ff_w2[0],
                  preferred_element_type=jnp.float32) + ff_b2[0]

  x_sc[...] = x
  o_ref[0] = x.astype(o_ref.dtype)

  @pl.when(l == last)
  def _():
    # final LayerNorm only after the last layer
    o_ref[0] = layer_norm(x, fn_a[...], fn_b[...]).astype(o_ref.dtype)


# ----------------------------------------------------------------------------
# Host-side weight packing: layer-stacked, full-width, bf16 matmul weights
# ----------------------------------------------------------------------------
def _pack_params(params):
  layers = params["layers"]
  bf = jnp.bfloat16

  def attn_pack(name):
    wq = jnp.stack([lp[name]["wq"] for lp in layers]).astype(bf)   # (N, D, D)
    bq = jnp.stack([lp[name]["bq"].reshape(1, -1) for lp in layers])
    wk = jnp.stack([lp[name]["wk"] for lp in layers]).astype(bf)
    bk = jnp.stack([lp[name]["bk"].reshape(1, -1) for lp in layers])
    wv = jnp.stack([lp[name]["wv"] for lp in layers]).astype(bf)
    bv = jnp.stack([lp[name]["bv"].reshape(1, -1) for lp in layers])
    wo = jnp.stack([lp[name]["wo"] for lp in layers]).astype(bf)
    bo = jnp.stack([lp[name]["bo"].reshape(1, -1) for lp in layers])
    return (wq, bq, wk, bk, wv, bv, wo, bo)

  sa = attn_pack("self_attn")
  ca = attn_pack("src_attn")
  ff_w1 = jnp.stack([lp["ff"]["w1"] for lp in layers]).astype(bf)
  ff_b1 = jnp.stack([lp["ff"]["b1"].reshape(1, -1) for lp in layers])
  ff_w2 = jnp.stack([lp["ff"]["w2"] for lp in layers]).astype(bf)
  ff_b2 = jnp.stack([lp["ff"]["b2"].reshape(1, -1) for lp in layers])
  lns = tuple(
      jnp.stack([lp[k].reshape(1, -1) for lp in layers])
      for k in ("ln0_a", "ln0_b", "ln1_a", "ln1_b", "ln2_a", "ln2_b"))
  per_layer = (*sa, *ca, ff_w1, ff_b1, ff_w2, ff_b2, *lns)
  final = (params["norm_a"].reshape(1, -1), params["norm_b"].reshape(1, -1))
  return per_layer, final


# ----------------------------------------------------------------------------
# Decoder forward: single pallas_call, grid=(batch, layer)
# ----------------------------------------------------------------------------
@functools.partial(jax.jit, static_argnames=("n_heads",))
def decoder_forward(params, x, memory, src_mask, tgt_mask, *, n_heads):
  B, Sq, D = x.shape
  Sk = memory.shape[1]
  n_layers = len(params["layers"])
  assert D % n_heads == 0

  per_layer, final = _pack_params(params)

  # Additive mask bias (0 where attended, -1e9 where masked), f32.
  src_bias = jnp.where(src_mask.reshape(B, 1, Sk) == 0,
                       jnp.float32(-1e9), jnp.float32(0.0))
  tm = tgt_mask if tgt_mask.ndim == 3 else tgt_mask[None]
  tgt_bias = jnp.where(tm == 0, jnp.float32(-1e9), jnp.float32(0.0))
  bt = tgt_bias.shape[0]              # 1 (shared causal mask) or B

  kern = functools.partial(_decoder_layer_kernel, n_heads=n_heads, eps=1e-6)

  def layer_spec(a):                  # stream one layer's block per l step
    nd = a.ndim
    return pl.BlockSpec((1,) + a.shape[1:],
                        lambda b, l, _nd=nd: (l,) + (0,) * (_nd - 1))

  def const_spec(a):                  # grid-invariant block, fetched once
    nd = a.ndim
    return pl.BlockSpec(a.shape, lambda b, l, _nd=nd: (0,) * _nd)

  tgt_idx = (lambda b, l: (0, 0, 0)) if bt == 1 else (lambda b, l: (b, 0, 0))

  in_specs = [
      pl.BlockSpec((1, Sq, D), lambda b, l: (b, 0, 0)),    # x
      pl.BlockSpec((1, Sk, D), lambda b, l: (b, 0, 0)),    # memory
      pl.BlockSpec((1, 1, Sk), lambda b, l: (b, 0, 0)),    # src additive bias
      pl.BlockSpec((1, Sq, Sq), tgt_idx),                  # tgt additive bias
  ] + [layer_spec(a) for a in per_layer] + [const_spec(a) for a in final]

  return pl.pallas_call(
      kern,
      out_shape=jax.ShapeDtypeStruct((B, Sq, D), x.dtype),
      grid=(B, n_layers),
      in_specs=in_specs,
      out_specs=pl.BlockSpec((1, Sq, D), lambda b, l: (b, 0, 0)),
      scratch_shapes=[pltpu.VMEM((Sq, D), jnp.float32)],   # activation carry
      compiler_params=pltpu.CompilerParams(
          dimension_semantics=("parallel", "arbitrary"),
          vmem_limit_bytes=32 * 1024 * 1024),
  )(x, memory, src_bias, tgt_bias, *per_layer, *final)


# ----------------------------------------------------------------------------
# Pure-JAX reference (mirrors the PyTorch module) for a correctness check
# ----------------------------------------------------------------------------
def _ref_layernorm(x, a, b, eps=1e-6):
  mean = x.mean(-1, keepdims=True)
  var = ((x - mean) ** 2).sum(-1, keepdims=True) / (x.shape[-1] - 1)
  return a * (x - mean) / (jnp.sqrt(var) + eps) + b


def _ref_mha(p, q_in, kv_in, mask, h):
  B, Sq, D = q_in.shape
  Sk = kv_in.shape[1]
  dk = D // h
  q = (q_in @ p["wq"] + p["bq"]).reshape(B, Sq, h, dk).transpose(0, 2, 1, 3)
  k = (kv_in @ p["wk"] + p["bk"]).reshape(B, Sk, h, dk).transpose(0, 2, 1, 3)
  v = (kv_in @ p["wv"] + p["bv"]).reshape(B, Sk, h, dk).transpose(0, 2, 1, 3)
  s = jnp.einsum("bhqd,bhkd->bhqk", q, k) / math.sqrt(dk)
  s = jnp.where(mask[:, None] == 0, -1e9, s)
  a = jax.nn.softmax(s, axis=-1)
  o = jnp.einsum("bhqk,bhkd->bhqd", a, v).transpose(0, 2, 1, 3).reshape(B, Sq, D)
  return o @ p["wo"] + p["bo"]


def decoder_forward_ref(params, x, memory, src_mask, tgt_mask, h):
  for lp in params["layers"]:
    nx = _ref_layernorm(x, lp["ln0_a"], lp["ln0_b"])
    x = x + _ref_mha(lp["self_attn"], nx, nx, tgt_mask, h)
    nx = _ref_layernorm(x, lp["ln1_a"], lp["ln1_b"])
    x = x + _ref_mha(lp["src_attn"], nx, memory, src_mask, h)
    nx = _ref_layernorm(x, lp["ln2_a"], lp["ln2_b"])
    hid = jnp.maximum(nx @ lp["ff"]["w1"] + lp["ff"]["b1"], 0.0)
    x = x + (hid @ lp["ff"]["w2"] + lp["ff"]["b2"])
  return _ref_layernorm(x, params["norm_a"], params["norm_b"])


# ----------------------------------------------------------------------------
# Deterministic parameter init
# ----------------------------------------------------------------------------
def _init_linear(key, din, dout, scale=0.05):
  w = scale * jax.random.normal(key, (din, dout), jnp.float32)
  b = jnp.zeros((dout,), jnp.float32)
  return w, b


def _init_attn(key, d_model):
  ks = jax.random.split(key, 4)
  wq, bq = _init_linear(ks[0], d_model, d_model)
  wk, bk = _init_linear(ks[1], d_model, d_model)
  wv, bv = _init_linear(ks[2], d_model, d_model)
  wo, bo = _init_linear(ks[3], d_model, d_model)
  return dict(wq=wq, bq=bq, wk=wk, bk=bk, wv=wv, bv=bv, wo=wo, bo=bo)


def init_decoder_params(key, n_layers, d_model, d_ff):
  layers = []
  keys = jax.random.split(key, n_layers + 1)
  ones = jnp.ones((d_model,), jnp.float32)
  zeros = jnp.zeros((d_model,), jnp.float32)
  for i in range(n_layers):
    ks = jax.random.split(keys[i], 4)
    w1, b1 = _init_linear(ks[2], d_model, d_ff)
    w2, b2 = _init_linear(ks[3], d_ff, d_model)
    layers.append(dict(
        self_attn=_init_attn(ks[0], d_model),
        src_attn=_init_attn(ks[1], d_model),
        ff=dict(w1=w1, b1=b1, w2=w2, b2=b2),
        ln0_a=ones, ln0_b=zeros,
        ln1_a=ones, ln1_b=zeros,
        ln2_a=ones, ln2_b=zeros,
    ))
  return dict(layers=layers, norm_a=ones, norm_b=zeros)


# ----------------------------------------------------------------------------
# main
# ----------------------------------------------------------------------------
if __name__ == "__main__":
  B, S_TGT, S_SRC = 2, 8, 12
  D_MODEL, D_FF, HEADS, N_LAYERS = 32, 64, 4, 2

  root = jax.random.PRNGKey(0)
  k_params, k_x, k_mem = jax.random.split(root, 3)

  params = init_decoder_params(k_params, N_LAYERS, D_MODEL, D_FF)

  x = jax.random.normal(k_x, (B, S_TGT, D_MODEL), jnp.float32)
  memory = jax.random.normal(k_mem, (B, S_SRC, D_MODEL), jnp.float32)

  # src_mask: all source positions valid; tgt_mask: causal (subsequent) mask
  # shaped (1, Sq, Sq) like the Annotated Transformer's subsequent_mask.
  src_mask = jnp.ones((B, 1, S_SRC), dtype=jnp.int32)
  tgt_mask = jnp.tril(jnp.ones((S_TGT, S_TGT), dtype=jnp.int32))[None]

  out = decoder_forward(params, x, memory, src_mask, tgt_mask, n_heads=HEADS)
  out = jax.block_until_ready(out)

  assert out.shape == (B, S_TGT, D_MODEL)
  assert bool(jnp.all(jnp.isfinite(out)))

  # Correctness check against a pure-JAX reference (tolerance absorbs bf16 MXU
  # operands and approx-reciprocal vs the f32 reference).
  with jax.default_matmul_precision("highest"):
    ref = decoder_forward_ref(params, x, memory, src_mask, tgt_mask, HEADS)
  ref = jax.block_until_ready(ref)
  max_err = float(jnp.max(jnp.abs(out - ref)))
  assert max_err < 5e-2, f"mismatch vs reference: max abs err = {max_err}"

  print("KERNEL_OK")
</pallas_src>

<mosaic_0001>
module attributes {stable_mosaic.version = 11 : i64} {
  func.func @_decoder_layer_kernel(%arg0: i32, %arg1: i32, %arg2: memref<1x8x32xf32, #tpu.memory_space<vmem>>, %arg3: memref<1x12x32xf32, #tpu.memory_space<vmem>>, %arg4: memref<1x1x12xf32, #tpu.memory_space<vmem>>, %arg5: memref<1x8x8xf32, #tpu.memory_space<vmem>>, %arg6: memref<1x32x32xbf16, #tpu.memory_space<vmem>>, %arg7: memref<1x1x32xf32, #tpu.memory_space<vmem>>, %arg8: memref<1x32x32xbf16, #tpu.memory_space<vmem>>, %arg9: memref<1x1x32xf32, #tpu.memory_space<vmem>>, %arg10: memref<1x32x32xbf16, #tpu.memory_space<vmem>>, %arg11: memref<1x1x32xf32, #tpu.memory_space<vmem>>, %arg12: memref<1x32x32xbf16, #tpu.memory_space<vmem>>, %arg13: memref<1x1x32xf32, #tpu.memory_space<vmem>>, %arg14: memref<1x32x32xbf16, #tpu.memory_space<vmem>>, %arg15: memref<1x1x32xf32, #tpu.memory_space<vmem>>, %arg16: memref<1x32x32xbf16, #tpu.memory_space<vmem>>, %arg17: memref<1x1x32xf32, #tpu.memory_space<vmem>>, %arg18: memref<1x32x32xbf16, #tpu.memory_space<vmem>>, %arg19: memref<1x1x32xf32, #tpu.memory_space<vmem>>, %arg20: memref<1x32x32xbf16, #tpu.memory_space<vmem>>, %arg21: memref<1x1x32xf32, #tpu.memory_space<vmem>>, %arg22: memref<1x32x64xbf16, #tpu.memory_space<vmem>>, %arg23: memref<1x1x64xf32, #tpu.memory_space<vmem>>, %arg24: memref<1x64x32xbf16, #tpu.memory_space<vmem>>, %arg25: memref<1x1x32xf32, #tpu.memory_space<vmem>>, %arg26: memref<1x1x32xf32, #tpu.memory_space<vmem>>, %arg27: memref<1x1x32xf32, #tpu.memory_space<vmem>>, %arg28: memref<1x1x32xf32, #tpu.memory_space<vmem>>, %arg29: memref<1x1x32xf32, #tpu.memory_space<vmem>>, %arg30: memref<1x1x32xf32, #tpu.memory_space<vmem>>, %arg31: memref<1x1x32xf32, #tpu.memory_space<vmem>>, %arg32: memref<1x32xf32, #tpu.memory_space<vmem>>, %arg33: memref<1x32xf32, #tpu.memory_space<vmem>>, %arg34: memref<1x8x32xf32, #tpu.memory_space<vmem>>, %arg35: memref<8x32xf32, #tpu.memory_space<vmem>>) attributes {dimension_semantics = [#tpu.dimension_semantics<parallel>, #tpu.dimension_semantics<arbitrary>], iteration_bounds = array<i64: 2, 2>, scalar_prefetch = 0 : i64, scratch_operands = 1 : i64, tpu.core_type = #tpu.core_type<tc>, window_params = [{transform_indices = @transform_0, window_bounds = array<i64: 1, 8, 32>}, {transform_indices = @transform_1, window_bounds = array<i64: 1, 12, 32>}, {transform_indices = @transform_2, window_bounds = array<i64: 1, 1, 12>}, {pipeline_mode = #tpu.pipeline_mode<synchronous>, transform_indices = @transform_3, window_bounds = array<i64: 1, 8, 8>}, {transform_indices = @transform_4, window_bounds = array<i64: 1, 32, 32>}, {transform_indices = @transform_5, window_bounds = array<i64: 1, 1, 32>}, {transform_indices = @transform_6, window_bounds = array<i64: 1, 32, 32>}, {transform_indices = @transform_7, window_bounds = array<i64: 1, 1, 32>}, {transform_indices = @transform_8, window_bounds = array<i64: 1, 32, 32>}, {transform_indices = @transform_9, window_bounds = array<i64: 1, 1, 32>}, {transform_indices = @transform_10, window_bounds = array<i64: 1, 32, 32>}, {transform_indices = @transform_11, window_bounds = array<i64: 1, 1, 32>}, {transform_indices = @transform_12, window_bounds = array<i64: 1, 32, 32>}, {transform_indices = @transform_13, window_bounds = array<i64: 1, 1, 32>}, {transform_indices = @transform_14, window_bounds = array<i64: 1, 32, 32>}, {transform_indices = @transform_15, window_bounds = array<i64: 1, 1, 32>}, {transform_indices = @transform_16, window_bounds = array<i64: 1, 32, 32>}, {transform_indices = @transform_17, window_bounds = array<i64: 1, 1, 32>}, {transform_indices = @transform_18, window_bounds = array<i64: 1, 32, 32>}, {transform_indices = @transform_19, window_bounds = array<i64: 1, 1, 32>}, {transform_indices = @transform_20, window_bounds = array<i64: 1, 32, 64>}, {transform_indices = @transform_21, window_bounds = array<i64: 1, 1, 64>}, {transform_indices = @transform_22, window_bounds = array<i64: 1, 64, 32>}, {transform_indices = @transform_23, window_bounds = array<i64: 1, 1, 32>}, {transform_indices = @transform_24, window_bounds = array<i64: 1, 1, 32>}, {transform_indices = @transform_25, window_bounds = array<i64: 1, 1, 32>}, {transform_indices = @transform_26, window_bounds = array<i64: 1, 1, 32>}, {transform_indices = @transform_27, window_bounds = array<i64: 1, 1, 32>}, {transform_indices = @transform_28, window_bounds = array<i64: 1, 1, 32>}, {transform_indices = @transform_29, window_bounds = array<i64: 1, 1, 32>}, {pipeline_mode = #tpu.pipeline_mode<synchronous>, transform_indices = @transform_30, window_bounds = array<i64: 1, 32>}, {pipeline_mode = #tpu.pipeline_mode<synchronous>, transform_indices = @transform_31, window_bounds = array<i64: 1, 32>}, {transform_indices = @transform_32, window_bounds = array<i64: 1, 8, 32>}]} {
    %c0_i32 = arith.constant 0 : i32
    %0 = arith.cmpi eq, %arg1, %c0_i32 : i32
    %1 = arith.extui %0 : i1 to i32
    %c0_i32_0 = arith.constant 0 : i32
    %2 = arith.cmpi ne, %1, %c0_i32_0 : i32
    scf.if %2 {
      %c0_130 = arith.constant 0 : index
      %c0_131 = arith.constant 0 : index
      %c0_132 = arith.constant 0 : index
      %233 = vector.load %arg2[%c0_130, %c0_131, %c0_132] : memref<1x8x32xf32, #tpu.memory_space<vmem>>, vector<1x8x32xf32>
      %234 = vector.shape_cast %233 : vector<1x8x32xf32> to vector<8x32xf32>
      %c0_133 = arith.constant 0 : index
      %c0_134 = arith.constant 0 : index
      %235 = vector.load %arg35[%c0_133, %c0_134] : memref<8x32xf32, #tpu.memory_space<vmem>>, vector<8x32xf32>
      tpu.vector_store %arg35[%c0_133, %c0_134], %234 {strides = array<i32>} : memref<8x32xf32, #tpu.memory_space<vmem>>, vector<8x32xf32>,
    } else {
    }
    %c0 = arith.constant 0 : index
    %c0_1 = arith.constant 0 : index
    %3 = vector.load %arg35[%c0, %c0_1] : memref<8x32xf32, #tpu.memory_space<vmem>>, vector<8x32xf32>
    %c0_2 = arith.constant 0 : index
    %c0_3 = arith.constant 0 : index
    %c0_4 = arith.constant 0 : index
    %4 = vector.load %arg3[%c0_2, %c0_3, %c0_4] : memref<1x12x32xf32, #tpu.memory_space<vmem>>, vector<1x12x32xf32>
    %5 = vector.shape_cast %4 : vector<1x12x32xf32> to vector<12x32xf32>
    %c0_5 = arith.constant 0 : index
    %c0_6 = arith.constant 0 : index
    %c0_7 = arith.constant 0 : index
    %6 = vector.load %arg4[%c0_5, %c0_6, %c0_7] : memref<1x1x12xf32, #tpu.memory_space<vmem>>, vector<1x1x12xf32>
    %7 = vector.shape_cast %6 : vector<1x1x12xf32> to vector<1x12xf32>
    %c0_8 = arith.constant 0 : index
    %c0_9 = arith.constant 0 : index
    %c0_10 = arith.constant 0 : index
    %8 = vector.load %arg5[%c0_8, %c0_9, %c0_10] : memref<1x8x8xf32, #tpu.memory_space<vmem>>, vector<1x8x8xf32>
    %9 = vector.shape_cast %8 : vector<1x8x8xf32> to vector<8x8xf32>
    %c0_11 = arith.constant 0 : index
    %c0_12 = arith.constant 0 : index
    %c0_13 = arith.constant 0 : index
    %10 = vector.load %arg26[%c0_11, %c0_12, %c0_13] : memref<1x1x32xf32, #tpu.memory_space<vmem>>, vector<1x1x32xf32>
    %11 = vector.shape_cast %10 : vector<1x1x32xf32> to vector<1x32xf32>
    %c0_14 = arith.constant 0 : index
    %c0_15 = arith.constant 0 : index
    %c0_16 = arith.constant 0 : index
    %12 = vector.load %arg27[%c0_14, %c0_15, %c0_16] : memref<1x1x32xf32, #tpu.memory_space<vmem>>, vector<1x1x32xf32>
    %13 = vector.shape_cast %12 : vector<1x1x32xf32> to vector<1x32xf32>
    %cst = arith.constant dense<0.000000e+00> : vector<8xf32>
    %14 = vector.multi_reduction <add>, %3, %cst [1] : vector<8x32xf32> to vector<8xf32>
    %15 = vector.shape_cast %14 : vector<8xf32> to vector<8x1xf32>
    %cst_17 = arith.constant 3.200000e+01 : f32
    %16 = vector.broadcast %cst_17 : f32 to vector<8x1xf32>
    %17 = arith.divf %15, %16 : vector<8x1xf32>
    %18 = vector.broadcast %17 : vector<8x1xf32> to vector<8x32xf32>
    %19 = arith.subf %3, %18 : vector<8x32xf32>
    %20 = arith.mulf %19, %19 : vector<8x32xf32>
    %cst_18 = arith.constant dense<0.000000e+00> : vector<8xf32>
    %21 = vector.multi_reduction <add>, %20, %cst_18 [1] : vector<8x32xf32> to vector<8xf32>
    %22 = vector.shape_cast %21 : vector<8xf32> to vector<8x1xf32>
    %cst_19 = arith.constant 0.0322580636 : f32
    %23 = vector.broadcast %cst_19 : f32 to vector<8x1xf32>
    %24 = arith.mulf %22, %23 : vector<8x1xf32>
    %25 = math.sqrt %24 : vector<8x1xf32>
    %cst_20 = arith.constant 9.99999997E-7 : f32
    %26 = vector.broadcast %cst_20 : f32 to vector<8x1xf32>
    %27 = arith.addf %25, %26 : vector<8x1xf32>
    %28 = tpu.reciprocal %27 {approx = true} : vector<8x1xf32> -> vector<8x1xf32>
    %29 = vector.broadcast %11 : vector<1x32xf32> to vector<8x32xf32>
    %30 = arith.mulf %29, %19 : vector<8x32xf32>
    %31 = vector.broadcast %28 : vector<8x1xf32> to vector<8x32xf32>
    %32 = arith.mulf %30, %31 : vector<8x32xf32>
    %33 = vector.broadcast %13 : vector<1x32xf32> to vector<8x32xf32>
    %34 = arith.addf %32, %33 : vector<8x32xf32>
    %c0_21 = arith.constant 0 : index
    %c0_22 = arith.constant 0 : index
    %c0_23 = arith.constant 0 : index
    %35 = vector.load %arg6[%c0_21, %c0_22, %c0_23] : memref<1x32x32xbf16, #tpu.memory_space<vmem>>, vector<1x32x32xbf16>
    %36 = vector.shape_cast %35 : vector<1x32x32xbf16> to vector<32x32xbf16>
    %c0_24 = arith.constant 0 : index
    %c0_25 = arith.constant 0 : index
    %c0_26 = arith.constant 0 : index
    %37 = vector.load %arg7[%c0_24, %c0_25, %c0_26] : memref<1x1x32xf32, #tpu.memory_space<vmem>>, vector<1x1x32xf32>
    %38 = vector.shape_cast %37 : vector<1x1x32xf32> to vector<1x32xf32>
    %c0_27 = arith.constant 0 : index
    %c0_28 = arith.constant 0 : index
    %c0_29 = arith.constant 0 : index
    %39 = vector.load %arg8[%c0_27, %c0_28, %c0_29] : memref<1x32x32xbf16, #tpu.memory_space<vmem>>, vector<1x32x32xbf16>
    %40 = vector.shape_cast %39 : vector<1x32x32xbf16> to vector<32x32xbf16>
    %c0_30 = arith.constant 0 : index
    %c0_31 = arith.constant 0 : index
    %c0_32 = arith.constant 0 : index
    %41 = vector.load %arg9[%c0_30, %c0_31, %c0_32] : memref<1x1x32xf32, #tpu.memory_space<vmem>>, vector<1x1x32xf32>
    %42 = vector.shape_cast %41 : vector<1x1x32xf32> to vector<1x32xf32>
    %c0_33 = arith.constant 0 : index
    %c0_34 = arith.constant 0 : index
    %c0_35 = arith.constant 0 : index
    %43 = vector.load %arg10[%c0_33, %c0_34, %c0_35] : memref<1x32x32xbf16, #tpu.memory_space<vmem>>, vector<1x32x32xbf16>
    %44 = vector.shape_cast %43 : vector<1x32x32xbf16> to vector<32x32xbf16>
    %c0_36 = arith.constant 0 : index
    %c0_37 = arith.constant 0 : index
    %c0_38 = arith.constant 0 : index
    %45 = vector.load %arg11[%c0_36, %c0_37, %c0_38] : memref<1x1x32xf32, #tpu.memory_space<vmem>>, vector<1x1x32xf32>
    %46 = vector.shape_cast %45 : vector<1x1x32xf32> to vector<1x32xf32>
    %c0_39 = arith.constant 0 : index
    %c0_40 = arith.constant 0 : index
    %c0_41 = arith.constant 0 : index
    %47 = vector.load %arg12[%c0_39, %c0_40, %c0_41] : memref<1x32x32xbf16, #tpu.memory_space<vmem>>, vector<1x32x32xbf16>
    %48 = vector.shape_cast %47 : vector<1x32x32xbf16> to vector<32x32xbf16>
    %c0_42 = arith.constant 0 : index
    %c0_43 = arith.constant 0 : index
    %c0_44 = arith.constant 0 : index
    %49 = vector.load %arg13[%c0_42, %c0_43, %c0_44] : memref<1x1x32xf32, #tpu.memory_space<vmem>>, vector<1x1x32xf32>
    %50 = vector.shape_cast %49 : vector<1x1x32xf32> to vector<1x32xf32>
    %51 = arith.truncf %34 : vector<8x32xf32> to vector<8x32xbf16>
    %52 = arith.truncf %34 : vector<8x32xf32> to vector<8x32xbf16>
    %cst_45 = arith.constant dense<0.000000e+00> : vector<8x32xf32>
    %53 = tpu.matmul %51, %36, %cst_45 {dimension_numbers = #tpu.dot_dimension_numbers<[1], [0], [0], [1], [0, 0, 1, 1], [], []>} : vector<8x32xbf16>, vector<32x32xbf16>, vector<8x32xf32> -> vector<8x32xf32>
    %54 = vector.broadcast %38 : vector<1x32xf32> to vector<8x32xf32>
    %55 = arith.addf %53, %54 : vector<8x32xf32>
    %cst_46 = arith.constant dense<0.000000e+00> : vector<8x32xf32>
    %56 = tpu.matmul %52, %40, %cst_46 {dimension_numbers = #tpu.dot_dimension_numbers<[1], [0], [0], [1], [0, 0, 1, 1], [], []>} : vector<8x32xbf16>, vector<32x32xbf16>, vector<8x32xf32> -> vector<8x32xf32>
    %57 = vector.broadcast %42 : vector<1x32xf32> to vector<8x32xf32>
    %58 = arith.addf %56, %57 : vector<8x32xf32>
    %cst_47 = arith.constant dense<0.000000e+00> : vector<8x32xf32>
    %59 = tpu.matmul %52, %44, %cst_47 {dimension_numbers = #tpu.dot_dimension_numbers<[1], [0], [0], [1], [0, 0, 1, 1], [], []>} : vector<8x32xbf16>, vector<32x32xbf16>, vector<8x32xf32> -> vector<8x32xf32>
    %60 = vector.broadcast %46 : vector<1x32xf32> to vector<8x32xf32>
    %61 = arith.addf %59, %60 : vector<8x32xf32>
    %62 = vector.shape_cast %55 : vector<8x32xf32> to vector<8x4x8xf32>
    %63 = tpu.transpose %62, [1, 0, 2] : vector<8x4x8xf32> -> vector<4x8x8xf32>
    %64 = arith.truncf %63 : vector<4x8x8xf32> to vector<4x8x8xbf16>
    %65 = vector.shape_cast %58 : vector<8x32xf32> to vector<8x4x8xf32>
    %66 = tpu.transpose %65, [1, 0, 2] : vector<8x4x8xf32> -> vector<4x8x8xf32>
    %67 = arith.truncf %66 : vector<4x8x8xf32> to vector<4x8x8xbf16>
    %68 = vector.shape_cast %61 : vector<8x32xf32> to vector<8x4x8xf32>
    %69 = tpu.transpose %68, [1, 0, 2] : vector<8x4x8xf32> -> vector<4x8x8xf32>
    %70 = arith.truncf %69 : vector<4x8x8xf32> to vector<4x8x8xbf16>
    "tpu.trace_start"() <{level = 10 : i32, message = "hqd,hkd->hqk"}> : () -> ()
    %cst_48 = arith.constant dense<0.000000e+00> : vector<4x8x8xf32>
    %71 = tpu.matmul %64, %67, %cst_48 {dimension_numbers = #tpu.dot_dimension_numbers<[2], [2], [1], [1], [0, 0, 0, 1, 1, 1], [0], [0]>} : vector<4x8x8xbf16>, vector<4x8x8xbf16>, vector<4x8x8xf32> -> vector<4x8x8xf32>
    "tpu.trace_stop"() : () -> ()
    %cst_49 = arith.constant 0.353553385 : f32
    %72 = vector.broadcast %cst_49 : f32 to vector<4x8x8xf32>
    %73 = arith.mulf %71, %72 : vector<4x8x8xf32>
    %74 = vector.shape_cast %9 : vector<8x8xf32> to vector<1x8x8xf32>
    %75 = vector.broadcast %74 : vector<1x8x8xf32> to vector<4x8x8xf32>
    %76 = arith.addf %73, %75 : vector<4x8x8xf32>
    %cst_50 = arith.constant dense<0xFF800000> : vector<4x8xf32>
    %77 = vector.multi_reduction <maximumf>, %76, %cst_50 [2] : vector<4x8x8xf32> to vector<4x8xf32>
    %78 = vector.shape_cast %77 : vector<4x8xf32> to vector<4x8x1xf32>
    %79 = vector.broadcast %78 : vector<4x8x1xf32> to vector<4x8x8xf32>
    %80 = arith.subf %76, %79 : vector<4x8x8xf32>
    %81 = math.exp %80 : vector<4x8x8xf32>
    %cst_51 = arith.constant dense<0.000000e+00> : vector<4x8xf32>
    %82 = vector.multi_reduction <add>, %81, %cst_51 [2] : vector<4x8x8xf32> to vector<4x8xf32>
    %83 = vector.shape_cast %82 : vector<4x8xf32> to vector<4x8x1xf32>
    %84 = tpu.reciprocal %83 {approx = true} : vector<4x8x1xf32> -> vector<4x8x1xf32>
    %85 = vector.broadcast %84 : vector<4x8x1xf32> to vector<4x8x8xf32>
    %86 = arith.mulf %81, %85 : vector<4x8x8xf32>
    %87 = arith.truncf %86 : vector<4x8x8xf32> to vector<4x8x8xbf16>
    "tpu.trace_start"() <{level = 10 : i32, message = "hqk,hkd->hqd"}> : () -> ()
    %cst_52 = arith.constant dense<0.000000e+00> : vector<4x8x8xf32>
    %88 = tpu.matmul %87, %70, %cst_52 {dimension_numbers = #tpu.dot_dimension_numbers<[2], [1], [1], [2], [0, 0, 0, 1, 1, 2], [0], [0]>} : vector<4x8x8xbf16>, vector<4x8x8xbf16>, vector<4x8x8xf32> -> vector<4x8x8xf32>
    "tpu.trace_stop"() : () -> ()
    %89 = tpu.transpose %88, [1, 0, 2] : vector<4x8x8xf32> -> vector<8x4x8xf32>
    %90 = vector.shape_cast %89 : vector<8x4x8xf32> to vector<8x32xf32>
    %91 = arith.truncf %90 : vector<8x32xf32> to vector<8x32xbf16>
    %cst_53 = arith.constant dense<0.000000e+00> : vector<8x32xf32>
    %92 = tpu.matmul %91, %48, %cst_53 {dimension_numbers = #tpu.dot_dimension_numbers<[1], [0], [0], [1], [0, 0, 1, 1], [], []>} : vector<8x32xbf16>, vector<32x32xbf16>, vector<8x32xf32> -> vector<8x32xf32>
    %93 = vector.broadcast %50 : vector<1x32xf32> to vector<8x32xf32>
    %94 = arith.addf %92, %93 : vector<8x32xf32>
    %95 = arith.addf %3, %94 : vector<8x32xf32>
    %c0_54 = arith.constant 0 : index
    %c0_55 = arith.constant 0 : index
    %c0_56 = arith.constant 0 : index
    %96 = vector.load %arg28[%c0_54, %c0_55, %c0_56] : memref<1x1x32xf32, #tpu.memory_space<vmem>>, vector<1x1x32xf32>
    %97 = vector.shape_cast %96 : vector<1x1x32xf32> to vector<1x32xf32>
    %c0_57 = arith.constant 0 : index
    %c0_58 = arith.constant 0 : index
    %c0_59 = arith.constant 0 : index
    %98 = vector.load %arg29[%c0_57, %c0_58, %c0_59] : memref<1x1x32xf32, #tpu.memory_space<vmem>>, vector<1x1x32xf32>
    %99 = vector.shape_cast %98 : vector<1x1x32xf32> to vector<1x32xf32>
    %cst_60 = arith.constant dense<0.000000e+00> : vector<8xf32>
    %100 = vector.multi_reduction <add>, %95, %cst_60 [1] : vector<8x32xf32> to vector<8xf32>
    %101 = vector.shape_cast %100 : vector<8xf32> to vector<8x1xf32>
    %cst_61 = arith.constant 3.200000e+01 : f32
    %102 = vector.broadcast %cst_61 : f32 to vector<8x1xf32>
    %103 = arith.divf %101, %102 : vector<8x1xf32>
    %104 = vector.broadcast %103 : vector<8x1xf32> to vector<8x32xf32>
    %105 = arith.subf %95, %104 : vector<8x32xf32>
    %106 = arith.mulf %105, %105 : vector<8x32xf32>
    %cst_62 = arith.constant dense<0.000000e+00> : vector<8xf32>
    %107 = vector.multi_reduction <add>, %106, %cst_62 [1] : vector<8x32xf32> to vector<8xf32>
    %108 = vector.shape_cast %107 : vector<8xf32> to vector<8x1xf32>
    %cst_63 = arith.constant 0.0322580636 : f32
    %109 = vector.broadcast %cst_63 : f32 to vector<8x1xf32>
    %110 = arith.mulf %108, %109 : vector<8x1xf32>
    %111 = math.sqrt %110 : vector<8x1xf32>
    %cst_64 = arith.constant 9.99999997E-7 : f32
    %112 = vector.broadcast %cst_64 : f32 to vector<8x1xf32>
    %113 = arith.addf %111, %112 : vector<8x1xf32>
    %114 = tpu.reciprocal %113 {approx = true} : vector<8x1xf32> -> vector<8x1xf32>
    %115 = vector.broadcast %97 : vector<1x32xf32> to vector<8x32xf32>
    %116 = arith.mulf %115, %105 : vector<8x32xf32>
    %117 = vector.broadcast %114 : vector<8x1xf32> to vector<8x32xf32>
    %118 = arith.mulf %116, %117 : vector<8x32xf32>
    %119 = vector.broadcast %99 : vector<1x32xf32> to vector<8x32xf32>
    %120 = arith.addf %118, %119 : vector<8x32xf32>
    %c0_65 = arith.constant 0 : index
    %c0_66 = arith.constant 0 : index
    %c0_67 = arith.constant 0 : index
    %121 = vector.load %arg14[%c0_65, %c0_66, %c0_67] : memref<1x32x32xbf16, #tpu.memory_space<vmem>>, vector<1x32x32xbf16>
    %122 = vector.shape_cast %121 : vector<1x32x32xbf16> to vector<32x32xbf16>
    %c0_68 = arith.constant 0 : index
    %c0_69 = arith.constant 0 : index
    %c0_70 = arith.constant 0 : index
    %123 = vector.load %arg15[%c0_68, %c0_69, %c0_70] : memref<1x1x32xf32, #tpu.memory_space<vmem>>, vector<1x1x32xf32>
    %124 = vector.shape_cast %123 : vector<1x1x32xf32> to vector<1x32xf32>
    %c0_71 = arith.constant 0 : index
    %c0_72 = arith.constant 0 : index
    %c0_73 = arith.constant 0 : index
    %125 = vector.load %arg16[%c0_71, %c0_72, %c0_73] : memref<1x32x32xbf16, #tpu.memory_space<vmem>>, vector<1x32x32xbf16>
    %126 = vector.shape_cast %125 : vector<1x32x32xbf16> to vector<32x32xbf16>
    %c0_74 = arith.constant 0 : index
    %c0_75 = arith.constant 0 : index
    %c0_76 = arith.constant 0 : index
    %127 = vector.load %arg17[%c0_74, %c0_75, %c0_76] : memref<1x1x32xf32, #tpu.memory_space<vmem>>, vector<1x1x32xf32>
    %128 = vector.shape_cast %127 : vector<1x1x32xf32> to vector<1x32xf32>
    %c0_77 = arith.constant 0 : index
    %c0_78 = arith.constant 0 : index
    %c0_79 = arith.constant 0 : index
    %129 = vector.load %arg18[%c0_77, %c0_78, %c0_79] : memref<1x32x32xbf16, #tpu.memory_space<vmem>>, vector<1x32x32xbf16>
    %130 = vector.shape_cast %129 : vector<1x32x32xbf16> to vector<32x32xbf16>
    %c0_80 = arith.constant 0 : index
    %c0_81 = arith.constant 0 : index
    %c0_82 = arith.constant 0 : index
    %131 = vector.load %arg19[%c0_80, %c0_81, %c0_82] : memref<1x1x32xf32, #tpu.memory_space<vmem>>, vector<1x1x32xf32>
    %132 = vector.shape_cast %131 : vector<1x1x32xf32> to vector<1x32xf32>
    %c0_83 = arith.constant 0 : index
    %c0_84 = arith.constant 0 : index
    %c0_85 = arith.constant 0 : index
    %133 = vector.load %arg20[%c0_83, %c0_84, %c0_85] : memref<1x32x32xbf16, #tpu.memory_space<vmem>>, vector<1x32x32xbf16>
    %134 = vector.shape_cast %133 : vector<1x32x32xbf16> to vector<32x32xbf16>
    %c0_86 = arith.constant 0 : index
    %c0_87 = arith.constant 0 : index
    %c0_88 = arith.constant 0 : index
    %135 = vector.load %arg21[%c0_86, %c0_87, %c0_88] : memref<1x1x32xf32, #tpu.memory_space<vmem>>, vector<1x1x32xf32>
    %136 = vector.shape_cast %135 : vector<1x1x32xf32> to vector<1x32xf32>
    %137 = arith.truncf %120 : vector<8x32xf32> to vector<8x32xbf16>
    %138 = arith.truncf %5 : vector<12x32xf32> to vector<12x32xbf16>
    %cst_89 = arith.constant dense<0.000000e+00> : vector<8x32xf32>
    %139 = tpu.matmul %137, %122, %cst_89 {dimension_numbers = #tpu.dot_dimension_numbers<[1], [0], [0], [1], [0, 0, 1, 1], [], []>} : vector<8x32xbf16>, vector<32x32xbf16>, vector<8x32xf32> -> vector<8x32xf32>
    %140 = vector.broadcast %124 : vector<1x32xf32> to vector<8x32xf32>
    %141 = arith.addf %139, %140 : vector<8x32xf32>
    %cst_90 = arith.constant dense<0.000000e+00> : vector<12x32xf32>
    %142 = tpu.matmul %138, %126, %cst_90 {dimension_numbers = #tpu.dot_dimension_numbers<[1], [0], [0], [1], [0, 0, 1, 1], [], []>} : vector<12x32xbf16>, vector<32x32xbf16>, vector<12x32xf32> -> vector<12x32xf32>
    %143 = vector.broadcast %128 : vector<1x32xf32> to vector<12x32xf32>
    %144 = arith.addf %142, %143 : vector<12x32xf32>
    %cst_91 = arith.constant dense<0.000000e+00> : vector<12x32xf32>
    %145 = tpu.matmul %138, %130, %cst_91 {dimension_numbers = #tpu.dot_dimension_numbers<[1], [0], [0], [1], [0, 0, 1, 1], [], []>} : vector<12x32xbf16>, vector<32x32xbf16>, vector<12x32xf32> -> vector<12x32xf32>
    %146 = vector.broadcast %132 : vector<1x32xf32> to vector<12x32xf32>
    %147 = arith.addf %145, %146 : vector<12x32xf32>
    %148 = vector.shape_cast %141 : vector<8x32xf32> to vector<8x4x8xf32>
    %149 = tpu.transpose %148, [1, 0, 2] : vector<8x4x8xf32> -> vector<4x8x8xf32>
    %150 = arith.truncf %149 : vector<4x8x8xf32> to vector<4x8x8xbf16>
    %151 = vector.shape_cast %144 : vector<12x32xf32> to vector<12x4x8xf32>
    %152 = tpu.transpose %151, [1, 0, 2] : vector<12x4x8xf32> -> vector<4x12x8xf32>
    %153 = arith.truncf %152 : vector<4x12x8xf32> to vector<4x12x8xbf16>
    %154 = vector.shape_cast %147 : vector<12x32xf32> to vector<12x4x8xf32>
    %155 = tpu.transpose %154, [1, 0, 2] : vector<12x4x8xf32> -> vector<4x12x8xf32>
    %156 = arith.truncf %155 : vector<4x12x8xf32> to vector<4x12x8xbf16>
    "tpu.trace_start"() <{level = 10 : i32, message = "hqd,hkd->hqk"}> : () -> ()
    %cst_92 = arith.constant dense<0.000000e+00> : vector<4x8x12xf32>
    %157 = tpu.matmul %150, %153, %cst_92 {dimension_numbers = #tpu.dot_dimension_numbers<[2], [2], [1], [1], [0, 0, 0, 1, 1, 1], [0], [0]>} : vector<4x8x8xbf16>, vector<4x12x8xbf16>, vector<4x8x12xf32> -> vector<4x8x12xf32>
    "tpu.trace_stop"() : () -> ()
    %cst_93 = arith.constant 0.353553385 : f32
    %158 = vector.broadcast %cst_93 : f32 to vector<4x8x12xf32>
    %159 = arith.mulf %157, %158 : vector<4x8x12xf32>
    %160 = vector.shape_cast %7 : vector<1x12xf32> to vector<1x1x12xf32>
    %161 = vector.broadcast %160 : vector<1x1x12xf32> to vector<4x8x12xf32>
    %162 = arith.addf %159, %161 : vector<4x8x12xf32>
    %cst_94 = arith.constant dense<0xFF800000> : vector<4x8xf32>
    %163 = vector.multi_reduction <maximumf>, %162, %cst_94 [2] : vector<4x8x12xf32> to vector<4x8xf32>
    %164 = vector.shape_cast %163 : vector<4x8xf32> to vector<4x8x1xf32>
    %165 = vector.broadcast %164 : vector<4x8x1xf32> to vector<4x8x12xf32>
    %166 = arith.subf %162, %165 : vector<4x8x12xf32>
    %167 = math.exp %166 : vector<4x8x12xf32>
    %cst_95 = arith.constant dense<0.000000e+00> : vector<4x8xf32>
    %168 = vector.multi_reduction <add>, %167, %cst_95 [2] : vector<4x8x12xf32> to vector<4x8xf32>
    %169 = vector.shape_cast %168 : vector<4x8xf32> to vector<4x8x1xf32>
    %170 = tpu.reciprocal %169 {approx = true} : vector<4x8x1xf32> -> vector<4x8x1xf32>
    %171 = vector.broadcast %170 : vector<4x8x1xf32> to vector<4x8x12xf32>
    %172 = arith.mulf %167, %171 : vector<4x8x12xf32>
    %173 = arith.truncf %172 : vector<4x8x12xf32> to vector<4x8x12xbf16>
    "tpu.trace_start"() <{level = 10 : i32, message = "hqk,hkd->hqd"}> : () -> ()
    %cst_96 = arith.constant dense<0.000000e+00> : vector<4x8x8xf32>
    %174 = tpu.matmul %173, %156, %cst_96 {dimension_numbers = #tpu.dot_dimension_numbers<[2], [1], [1], [2], [0, 0, 0, 1, 1, 2], [0], [0]>} : vector<4x8x12xbf16>, vector<4x12x8xbf16>, vector<4x8x8xf32> -> vector<4x8x8xf32>
    "tpu.trace_stop"() : () -> ()
    %175 = tpu.transpose %174, [1, 0, 2] : vector<4x8x8xf32> -> vector<8x4x8xf32>
    %176 = vector.shape_cast %175 : vector<8x4x8xf32> to vector<8x32xf32>
    %177 = arith.truncf %176 : vector<8x32xf32> to vector<8x32xbf16>
    %cst_97 = arith.constant dense<0.000000e+00> : vector<8x32xf32>
    %178 = tpu.matmul %177, %134, %cst_97 {dimension_numbers = #tpu.dot_dimension_numbers<[1], [0], [0], [1], [0, 0, 1, 1], [], []>} : vector<8x32xbf16>, vector<32x32xbf16>, vector<8x32xf32> -> vector<8x32xf32>
    %179 = vector.broadcast %136 : vector<1x32xf32> to vector<8x32xf32>
    %180 = arith.addf %178, %179 : vector<8x32xf32>
    %181 = arith.addf %95, %180 : vector<8x32xf32>
    %c0_98 = arith.constant 0 : index
    %c0_99 = arith.constant 0 : index
    %c0_100 = arith.constant 0 : index
    %182 = vector.load %arg30[%c0_98, %c0_99, %c0_100] : memref<1x1x32xf32, #tpu.memory_space<vmem>>, vector<1x1x32xf32>
    %183 = vector.shape_cast %182 : vector<1x1x32xf32> to vector<1x32xf32>
    %c0_101 = arith.constant 0 : index
    %c0_102 = arith.constant 0 : index
    %c0_103 = arith.constant 0 : index
    %184 = vector.load %arg31[%c0_101, %c0_102, %c0_103] : memref<1x1x32xf32, #tpu.memory_space<vmem>>, vector<1x1x32xf32>
    %185 = vector.shape_cast %184 : vector<1x1x32xf32> to vector<1x32xf32>
    %cst_104 = arith.constant dense<0.000000e+00> : vector<8xf32>
    %186 = vector.multi_reduction <add>, %181, %cst_104 [1] : vector<8x32xf32> to vector<8xf32>
    %187 = vector.shape_cast %186 : vector<8xf32> to vector<8x1xf32>
    %cst_105 = arith.constant 3.200000e+01 : f32
    %188 = vector.broadcast %cst_105 : f32 to vector<8x1xf32>
    %189 = arith.divf %187, %188 : vector<8x1xf32>
    %190 = vector.broadcast %189 : vector<8x1xf32> to vector<8x32xf32>
    %191 = arith.subf %181, %190 : vector<8x32xf32>
    %192 = arith.mulf %191, %191 : vector<8x32xf32>
    %cst_106 = arith.constant dense<0.000000e+00> : vector<8xf32>
    %193 = vector.multi_reduction <add>, %192, %cst_106 [1] : vector<8x32xf32> to vector<8xf32>
    %194 = vector.shape_cast %193 : vector<8xf32> to vector<8x1xf32>
    %cst_107 = arith.constant 0.0322580636 : f32
    %195 = vector.broadcast %cst_107 : f32 to vector<8x1xf32>
    %196 = arith.mulf %194, %195 : vector<8x1xf32>
    %197 = math.sqrt %196 : vector<8x1xf32>
    %cst_108 = arith.constant 9.99999997E-7 : f32
    %198 = vector.broadcast %cst_108 : f32 to vector<8x1xf32>
    %199 = arith.addf %197, %198 : vector<8x1xf32>
    %200 = tpu.reciprocal %199 {approx = true} : vector<8x1xf32> -> vector<8x1xf32>
    %201 = vector.broadcast %183 : vector<1x32xf32> to vector<8x32xf32>
    %202 = arith.mulf %201, %191 : vector<8x32xf32>
    %203 = vector.broadcast %200 : vector<8x1xf32> to vector<8x32xf32>
    %204 = arith.mulf %202, %203 : vector<8x32xf32>
    %205 = vector.broadcast %185 : vector<1x32xf32> to vector<8x32xf32>
    %206 = arith.addf %204, %205 : vector<8x32xf32>
    %207 = arith.truncf %206 : vector<8x32xf32> to vector<8x32xbf16>
    %c0_109 = arith.constant 0 : index
    %c0_110 = arith.constant 0 : index
    %c0_111 = arith.constant 0 : index
    %208 = vector.load %arg22[%c0_109, %c0_110, %c0_111] : memref<1x32x64xbf16, #tpu.memory_space<vmem>>, vector<1x32x64xbf16>
    %209 = vector.shape_cast %208 : vector<1x32x64xbf16> to vector<32x64xbf16>
    %cst_112 = arith.constant dense<0.000000e+00> : vector<8x64xf32>
    %210 = tpu.matmul %207, %209, %cst_112 {dimension_numbers = #tpu.dot_dimension_numbers<[1], [0], [0], [1], [0, 0, 1, 1], [], []>} : vector<8x32xbf16>, vector<32x64xbf16>, vector<8x64xf32> -> vector<8x64xf32>
    %c0_113 = arith.constant 0 : index
    %c0_114 = arith.constant 0 : index
    %c0_115 = arith.constant 0 : index
    %211 = vector.load %arg23[%c0_113, %c0_114, %c0_115] : memref<1x1x64xf32, #tpu.memory_space<vmem>>, vector<1x1x64xf32>
    %212 = vector.shape_cast %211 : vector<1x1x64xf32> to vector<1x64xf32>
    %213 = vector.broadcast %212 : vector<1x64xf32> to vector<8x64xf32>
    %214 = arith.addf %210, %213 : vector<8x64xf32>
    %cst_116 = arith.constant 0.000000e+00 : f32
    %215 = vector.broadcast %cst_116 : f32 to vector<8x64xf32>
    %216 = arith.maximumf %214, %215 : vector<8x64xf32>
    %217 = arith.truncf %216 : vector<8x64xf32> to vector<8x64xbf16>
    %c0_117 = arith.constant 0 : index
    %c0_118 = arith.constant 0 : index
    %c0_119 = arith.constant 0 : index
    %218 = vector.load %arg24[%c0_117, %c0_118, %c0_119] : memref<1x64x32xbf16, #tpu.memory_space<vmem>>, vector<1x64x32xbf16>
    %219 = vector.shape_cast %218 : vector<1x64x32xbf16> to vector<64x32xbf16>
    %cst_120 = arith.constant dense<0.000000e+00> : vector<8x32xf32>
    %220 = tpu.matmul %217, %219, %cst_120 {dimension_numbers = #tpu.dot_dimension_numbers<[1], [0], [0], [1], [0, 0, 1, 1], [], []>} : vector<8x64xbf16>, vector<64x32xbf16>, vector<8x32xf32> -> vector<8x32xf32>
    %221 = arith.addf %181, %220 : vector<8x32xf32>
    %c0_121 = arith.constant 0 : index
    %c0_122 = arith.constant 0 : index
    %c0_123 = arith.constant 0 : index
    %222 = vector.load %arg25[%c0_121, %c0_122, %c0_123] : memref<1x1x32xf32, #tpu.memory_space<vmem>>, vector<1x1x32xf32>
    %223 = vector.shape_cast %222 : vector<1x1x32xf32> to vector<1x32xf32>
    %224 = vector.broadcast %223 : vector<1x32xf32> to vector<8x32xf32>
    %225 = arith.addf %221, %224 : vector<8x32xf32>
    %c0_124 = arith.constant 0 : index
    %c0_125 = arith.constant 0 : index
    %226 = vector.load %arg35[%c0_124, %c0_125] : memref<8x32xf32, #tpu.memory_space<vmem>>, vector<8x32xf32>
    tpu.vector_store %arg35[%c0_124, %c0_125], %225 {strides = array<i32>} : memref<8x32xf32, #tpu.memory_space<vmem>>, vector<8x32xf32>,
    %c0_126 = arith.constant 0 : index
    %c0_127 = arith.constant 0 : index
    %c0_128 = arith.constant 0 : index
    %227 = vector.load %arg34[%c0_126, %c0_127, %c0_128] : memref<1x8x32xf32, #tpu.memory_space<vmem>>, vector<1x8x32xf32>
    %228 = vector.shape_cast %227 : vector<1x8x32xf32> to vector<8x32xf32>
    %229 = vector.shape_cast %225 : vector<8x32xf32> to vector<1x8x32xf32>
    tpu.vector_store %arg34[%c0_126, %c0_127, %c0_128], %229 {strides = array<i32>} : memref<1x8x32xf32, #tpu.memory_space<vmem>>, vector<1x8x32xf32>,
    %c1_i32 = arith.constant 1 : i32
    %230 = arith.cmpi eq, %arg1, %c1_i32 : i32
    %231 = arith.extui %230 : i1 to i32
    %c0_i32_129 = arith.constant 0 : i32
    %232 = arith.cmpi ne, %231, %c0_i32_129 : i32
    scf.if %232 {
      %c0_130 = arith.constant 0 : index
      %c0_131 = arith.constant 0 : index
      %233 = vector.load %arg32[%c0_130, %c0_131] : memref<1x32xf32, #tpu.memory_space<vmem>>, vector<1x32xf32>
      %c0_132 = arith.constant 0 : index
      %c0_133 = arith.constant 0 : index
      %234 = vector.load %arg33[%c0_132, %c0_133] : memref<1x32xf32, #tpu.memory_space<vmem>>, vector<1x32xf32>
      %cst_134 = arith.constant dense<0.000000e+00> : vector<8xf32>
      %235 = vector.multi_reduction <add>, %225, %cst_134 [1] : vector<8x32xf32> to vector<8xf32>
      %236 = vector.shape_cast %235 : vector<8xf32> to vector<8x1xf32>
      %cst_135 = arith.constant 3.200000e+01 : f32
      %237 = vector.broadcast %cst_135 : f32 to vector<8x1xf32>
      %238 = arith.divf %236, %237 : vector<8x1xf32>
      %239 = vector.broadcast %238 : vector<8x1xf32> to vector<8x32xf32>
      %240 = arith.subf %225, %239 : vector<8x32xf32>
      %241 = arith.mulf %240, %240 : vector<8x32xf32>
      %cst_136 = arith.constant dense<0.000000e+00> : vector<8xf32>
      %242 = vector.multi_reduction <add>, %241, %cst_136 [1] : vector<8x32xf32> to vector<8xf32>
      %243 = vector.shape_cast %242 : vector<8xf32> to vector<8x1xf32>
      %cst_137 = arith.constant 0.0322580636 : f32
      %244 = vector.broadcast %cst_137 : f32 to vector<8x1xf32>
      %245 = arith.mulf %243, %244 : vector<8x1xf32>
      %246 = math.sqrt %245 : vector<8x1xf32>
      %cst_138 = arith.constant 9.99999997E-7 : f32
      %247 = vector.broadcast %cst_138 : f32 to vector<8x1xf32>
      %248 = arith.addf %246, %247 : vector<8x1xf32>
      %249 = tpu.reciprocal %248 {approx = true} : vector<8x1xf32> -> vector<8x1xf32>
      %250 = vector.broadcast %233 : vector<1x32xf32> to vector<8x32xf32>
      %251 = arith.mulf %250, %240 : vector<8x32xf32>
      %252 = vector.broadcast %249 : vector<8x1xf32> to vector<8x32xf32>
      %253 = arith.mulf %251, %252 : vector<8x32xf32>
      %254 = vector.broadcast %234 : vector<1x32xf32> to vector<8x32xf32>
      %255 = arith.addf %253, %254 : vector<8x32xf32>
      %c0_139 = arith.constant 0 : index
      %c0_140 = arith.constant 0 : index
      %c0_141 = arith.constant 0 : index
      %256 = vector.load %arg34[%c0_139, %c0_140, %c0_141] : memref<1x8x32xf32, #tpu.memory_space<vmem>>, vector<1x8x32xf32>
      %257 = vector.shape_cast %256 : vector<1x8x32xf32> to vector<8x32xf32>
      %258 = vector.shape_cast %255 : vector<8x32xf32> to vector<1x8x32xf32>
      tpu.vector_store %arg34[%c0_139, %c0_140, %c0_141], %258 {strides = array<i32>} : memref<1x8x32xf32, #tpu.memory_space<vmem>>, vector<1x8x32xf32>,
    } else {
    }
    return
  }
  func.func @transform_0(%arg0: i32, %arg1: i32) -> (i32, i32, i32) {
    %c0_i32 = arith.constant 0 : i32
    %c0_i32_0 = arith.constant 0 : i32
    %c0_i32_1 = arith.constant 0 : i32
    return %arg0, %c0_i32, %c0_i32_0 : i32, i32, i32
  }
  func.func @transform_1(%arg0: i32, %arg1: i32) -> (i32, i32, i32) {
    %c0_i32 = arith.constant 0 : i32
    %c0_i32_0 = arith.constant 0 : i32
    %c0_i32_1 = arith.constant 0 : i32
    return %arg0, %c0_i32, %c0_i32_0 : i32, i32, i32
  }
  func.func @transform_2(%arg0: i32, %arg1: i32) -> (i32, i32, i32) {
    %c0_i32 = arith.constant 0 : i32
    %c0_i32_0 = arith.constant 0 : i32
    %c0_i32_1 = arith.constant 0 : i32
    return %arg0, %c0_i32, %c0_i32_0 : i32, i32, i32
  }
  func.func @transform_3(%arg0: i32, %arg1: i32) -> (i32, i32, i32) {
    %c0_i32 = arith.constant 0 : i32
    %c0_i32_0 = arith.constant 0 : i32
    %c0_i32_1 = arith.constant 0 : i32
    %c0_i32_2 = arith.constant 0 : i32
    return %c0_i32, %c0_i32_0, %c0_i32_1 : i32, i32, i32
  }
  func.func @transform_4(%arg0: i32, %arg1: i32) -> (i32, i32, i32) {
    %c0_i32 = arith.constant 0 : i32
    %c0_i32_0 = arith.constant 0 : i32
    %c0_i32_1 = arith.constant 0 : i32
    return %arg1, %c0_i32, %c0_i32_0 : i32, i32, i32
  }
  func.func @transform_5(%arg0: i32, %arg1: i32) -> (i32, i32, i32) {
    %c0_i32 = arith.constant 0 : i32
    %c0_i32_0 = arith.constant 0 : i32
    %c0_i32_1 = arith.constant 0 : i32
    return %arg1, %c0_i32, %c0_i32_0 : i32, i32, i32
  }
  func.func @transform_6(%arg0: i32, %arg1: i32) -> (i32, i32, i32) {
    %c0_i32 = arith.constant 0 : i32
    %c0_i32_0 = arith.constant 0 : i32
    %c0_i32_1 = arith.constant 0 : i32
    return %arg1, %c0_i32, %c0_i32_0 : i32, i32, i32
  }
  func.func @transform_7(%arg0: i32, %arg1: i32) -> (i32, i32, i32) {
    %c0_i32 = arith.constant 0 : i32
    %c0_i32_0 = arith.constant 0 : i32
    %c0_i32_1 = arith.constant 0 : i32
    return %arg1, %c0_i32, %c0_i32_0 : i32, i32, i32
  }
  func.func @transform_8(%arg0: i32, %arg1: i32) -> (i32, i32, i32) {
    %c0_i32 = arith.constant 0 : i32
    %c0_i32_0 = arith.constant 0 : i32
    %c0_i32_1 = arith.constant 0 : i32
    return %arg1, %c0_i32, %c0_i32_0 : i32, i32, i32
  }
  func.func @transform_9(%arg0: i32, %arg1: i32) -> (i32, i32, i32) {
    %c0_i32 = arith.constant 0 : i32
    %c0_i32_0 = arith.constant 0 : i32
    %c0_i32_1 = arith.constant 0 : i32
    return %arg1, %c0_i32, %c0_i32_0 : i32, i32, i32
  }
  func.func @transform_10(%arg0: i32, %arg1: i32) -> (i32, i32, i32) {
    %c0_i32 = arith.constant 0 : i32
    %c0_i32_0 = arith.constant 0 : i32
    %c0_i32_1 = arith.constant 0 : i32
    return %arg1, %c0_i32, %c0_i32_0 : i32, i32, i32
  }
  func.func @transform_11(%arg0: i32, %arg1: i32) -> (i32, i32, i32) {
    %c0_i32 = arith.constant 0 : i32
    %c0_i32_0 = arith.constant 0 : i32
    %c0_i32_1 = arith.constant 0 : i32
    return %arg1, %c0_i32, %c0_i32_0 : i32, i32, i32
  }
  func.func @transform_12(%arg0: i32, %arg1: i32) -> (i32, i32, i32) {
    %c0_i32 = arith.constant 0 : i32
    %c0_i32_0 = arith.constant 0 : i32
    %c0_i32_1 = arith.constant 0 : i32
    return %arg1, %c0_i32, %c0_i32_0 : i32, i32, i32
  }
  func.func @transform_13(%arg0: i32, %arg1: i32) -> (i32, i32, i32) {
    %c0_i32 = arith.constant 0 : i32
    %c0_i32_0 = arith.constant 0 : i32
    %c0_i32_1 = arith.constant 0 : i32
    return %arg1, %c0_i32, %c0_i32_0 : i32, i32, i32
  }
  func.func @transform_14(%arg0: i32, %arg1: i32) -> (i32, i32, i32) {
    %c0_i32 = arith.constant 0 : i32
    %c0_i32_0 = arith.constant 0 : i32
    %c0_i32_1 = arith.constant 0 : i32
    return %arg1, %c0_i32, %c0_i32_0 : i32, i32, i32
  }
  func.func @transform_15(%arg0: i32, %arg1: i32) -> (i32, i32, i32) {
    %c0_i32 = arith.constant 0 : i32
    %c0_i32_0 = arith.constant 0 : i32
    %c0_i32_1 = arith.constant 0 : i32
    return %arg1, %c0_i32, %c0_i32_0 : i32, i32, i32
  }
  func.func @transform_16(%arg0: i32, %arg1: i32) -> (i32, i32, i32) {
    %c0_i32 = arith.constant 0 : i32
    %c0_i32_0 = arith.constant 0 : i32
    %c0_i32_1 = arith.constant 0 : i32
    return %arg1, %c0_i32, %c0_i32_0 : i32, i32, i32
  }
  func.func @transform_17(%arg0: i32, %arg1: i32) -> (i32, i32, i32) {
    %c0_i32 = arith.constant 0 : i32
    %c0_i32_0 = arith.constant 0 : i32
    %c0_i32_1 = arith.constant 0 : i32
    return %arg1, %c0_i32, %c0_i32_0 : i32, i32, i32
  }
  func.func @transform_18(%arg0: i32, %arg1: i32) -> (i32, i32, i32) {
    %c0_i32 = arith.constant 0 : i32
    %c0_i32_0 = arith.constant 0 : i32
    %c0_i32_1 = arith.constant 0 : i32
    return %arg1, %c0_i32, %c0_i32_0 : i32, i32, i32
  }
  func.func @transform_19(%arg0: i32, %arg1: i32) -> (i32, i32, i32) {
    %c0_i32 = arith.constant 0 : i32
    %c0_i32_0 = arith.constant 0 : i32
    %c0_i32_1 = arith.constant 0 : i32
    return %arg1, %c0_i32, %c0_i32_0 : i32, i32, i32
  }
  func.func @transform_20(%arg0: i32, %arg1: i32) -> (i32, i32, i32) {
    %c0_i32 = arith.constant 0 : i32
    %c0_i32_0 = arith.constant 0 : i32
    %c0_i32_1 = arith.constant 0 : i32
    return %arg1, %c0_i32, %c0_i32_0 : i32, i32, i32
  }
  func.func @transform_21(%arg0: i32, %arg1: i32) -> (i32, i32, i32) {
    %c0_i32 = arith.constant 0 : i32
    %c0_i32_0 = arith.constant 0 : i32
    %c0_i32_1 = arith.constant 0 : i32
    return %arg1, %c0_i32, %c0_i32_0 : i32, i32, i32
  }
  func.func @transform_22(%arg0: i32, %arg1: i32) -> (i32, i32, i32) {
    %c0_i32 = arith.constant 0 : i32
    %c0_i32_0 = arith.constant 0 : i32
    %c0_i32_1 = arith.constant 0 : i32
    return %arg1, %c0_i32, %c0_i32_0 : i32, i32, i32
  }
  func.func @transform_23(%arg0: i32, %arg1: i32) -> (i32, i32, i32) {
    %c0_i32 = arith.constant 0 : i32
    %c0_i32_0 = arith.constant 0 : i32
    %c0_i32_1 = arith.constant 0 : i32
    return %arg1, %c0_i32, %c0_i32_0 : i32, i32, i32
  }
  func.func @transform_24(%arg0: i32, %arg1: i32) -> (i32, i32, i32) {
    %c0_i32 = arith.constant 0 : i32
    %c0_i32_0 = arith.constant 0 : i32
    %c0_i32_1 = arith.constant 0 : i32
    return %arg1, %c0_i32, %c0_i32_0 : i32, i32, i32
  }
  func.func @transform_25(%arg0: i32, %arg1: i32) -> (i32, i32, i32) {
    %c0_i32 = arith.constant 0 : i32
    %c0_i32_0 = arith.constant 0 : i32
    %c0_i32_1 = arith.constant 0 : i32
    return %arg1, %c0_i32, %c0_i32_0 : i32, i32, i32
  }
  func.func @transform_26(%arg0: i32, %arg1: i32) -> (i32, i32, i32) {
    %c0_i32 = arith.constant 0 : i32
    %c0_i32_0 = arith.constant 0 : i32
    %c0_i32_1 = arith.constant 0 : i32
    return %arg1, %c0_i32, %c0_i32_0 : i32, i32, i32
  }
  func.func @transform_27(%arg0: i32, %arg1: i32) -> (i32, i32, i32) {
    %c0_i32 = arith.constant 0 : i32
    %c0_i32_0 = arith.constant 0 : i32
    %c0_i32_1 = arith.constant 0 : i32
    return %arg1, %c0_i32, %c0_i32_0 : i32, i32, i32
  }
  func.func @transform_28(%arg0: i32, %arg1: i32) -> (i32, i32, i32) {
    %c0_i32 = arith.constant 0 : i32
    %c0_i32_0 = arith.constant 0 : i32
    %c0_i32_1 = arith.constant 0 : i32
    return %arg1, %c0_i32, %c0_i32_0 : i32, i32, i32
  }
  func.func @transform_29(%arg0: i32, %arg1: i32) -> (i32, i32, i32) {
    %c0_i32 = arith.constant 0 : i32
    %c0_i32_0 = arith.constant 0 : i32
    %c0_i32_1 = arith.constant 0 : i32
    return %arg1, %c0_i32, %c0_i32_0 : i32, i32, i32
  }
  func.func @transform_30(%arg0: i32, %arg1: i32) -> (i32, i32) {
    %c0_i32 = arith.constant 0 : i32
    %c0_i32_0 = arith.constant 0 : i32
    %c0_i32_1 = arith.constant 0 : i32
    return %c0_i32, %c0_i32_0 : i32, i32
  }
  func.func @transform_31(%arg0: i32, %arg1: i32) -> (i32, i32) {
    %c0_i32 = arith.constant 0 : i32
    %c0_i32_0 = arith.constant 0 : i32
    %c0_i32_1 = arith.constant 0 : i32
    return %c0_i32, %c0_i32_0 : i32, i32
  }
  func.func @transform_32(%arg0: i32, %arg1: i32) -> (i32, i32, i32) {
    %c0_i32 = arith.constant 0 : i32
    %c0_i32_0 = arith.constant 0 : i32
    %c0_i32_1 = arith.constant 0 : i32
    return %arg0, %c0_i32, %c0_i32_0 : i32, i32, i32
  }
}

</mosaic_0001>

<llo_original>
// kernel: decoder_forward.1
$region0: #{decoder_forward.1}
  #allocation0 [shape = 'u32[]', space=smem, size = 0x4, offset = 0x4, fixed_abs, tag = 'smem constant byte address 0x4 - core index']
  #allocation1 [shape = 'u32[72,128]{1,0:T(1,128)}', space=vmem, size = 0x9000, scoped, tag = 'internal scratch']
  #allocation2 [shape = 'f32[8,32]{1,0:T(8,128)}', space=vmem, size = 0x1000, scoped, tag = 'scratch operand']
  %s0 = inlined_call_operand.smem [shape: u32[33], index: -1, kind: input, shape index: {}]
  %s1 = sld [smem:[%s0]]
  %s2 = scalar_lea.smem %s0, 1
  %s3 = sld [smem:[%s2]]
  %s4 = scalar_lea.smem %s0, 2
  %s5 = sld [smem:[%s4]]
  %s6 = scalar_lea.smem %s0, 3
  %s7 = sld [smem:[%s6]]
  %s8 = scalar_lea.smem %s0, 4
  %s9 = sld [smem:[%s8]]
  %s10 = scalar_lea.smem %s0, 5
  %s11 = sld [smem:[%s10]]
  %s12 = scalar_lea.smem %s0, 6
  %s13 = sld [smem:[%s12]]
  %s14 = scalar_lea.smem %s0, 7
  %s15 = sld [smem:[%s14]]
  %s16 = scalar_lea.smem %s0, 8
  %s17 = sld [smem:[%s16]]
  %s18 = scalar_lea.smem %s0, 9
  %s19 = sld [smem:[%s18]]
  %s20 = scalar_lea.smem %s0, 10
  %s21 = sld [smem:[%s20]]
  %s22 = scalar_lea.smem %s0, 11
  %s23 = sld [smem:[%s22]]
  %s24 = scalar_lea.smem %s0, 12
  %s25 = sld [smem:[%s24]]
  %s26 = scalar_lea.smem %s0, 13
  %s27 = sld [smem:[%s26]]
  %s28 = scalar_lea.smem %s0, 14
  %s29 = sld [smem:[%s28]]
  %s30 = scalar_lea.smem %s0, 15
  %s31 = sld [smem:[%s30]]
  %s32 = scalar_lea.smem %s0, 16
  %s33 = sld [smem:[%s32]]
  %s34 = scalar_lea.smem %s0, 17
  %s35 = sld [smem:[%s34]]
  %s36 = scalar_lea.smem %s0, 18
  %s37 = sld [smem:[%s36]]
  %s38 = scalar_lea.smem %s0, 19
  %s39 = sld [smem:[%s38]]
  %s40 = scalar_lea.smem %s0, 20
  %s41 = sld [smem:[%s40]]
  %s42 = scalar_lea.smem %s0, 21
  %s43 = sld [smem:[%s42]]
  %s44 = scalar_lea.smem %s0, 22
  %s45 = sld [smem:[%s44]]
  %s46 = scalar_lea.smem %s0, 23
  %s47 = sld [smem:[%s46]]
  %s48 = scalar_lea.smem %s0, 24
  %s49 = sld [smem:[%s48]]
  %s50 = scalar_lea.smem %s0, 25
  %s51 = sld [smem:[%s50]]
  %s52 = scalar_lea.smem %s0, 26
  %s53 = sld [smem:[%s52]]
  %s54 = scalar_lea.smem %s0, 27
  %s55 = sld [smem:[%s54]]
  %s56 = scalar_lea.smem %s0, 28
  %s57 = sld [smem:[%s56]]
  %s58 = scalar_lea.smem %s0, 29
  %s59 = sld [smem:[%s58]]
  %s60 = scalar_lea.smem %s0, 30
  %s61 = sld [smem:[%s60]]
  %s62 = scalar_lea.smem %s0, 31
  %s63 = sld [smem:[%s62]]
  %s64 = scalar_lea.smem %s0, 32
  %s65 = sld [smem:[%s64]]
  %s66 = sld [smem:[#allocation0]]
  $region169: #{decoder_forward.1} parent=0
    _
  %s68 = ssub.s32 1, %s66
  %s69 = scalar_select 0, %s68, %s66
  $region1: #{decoder_forward.1} parent=0
    #allocation3 [shape = 'u8[8192]{0}', space=vmem, size = 0x2000, scoped, tag = 'output window, operand 0']
    #allocation4 [shape = 's32[2]{0}', space=sflag, size = 0x8, scoped, tag = 'scoped memory for decoder_forward.1']
    %70 = vsyncpa [#allocation4], 0
    %s71 = scalar_lea.sflag [#allocation4], 1
    %72 = vsyncpa %s71, 0
    loop: start=0, step=1, limit=6
    $region2: #{decoder_forward.1} parent=1 // loop_pre_header
      _
    $region3: #{decoder_forward.1} parent=1 // loop_header
      %s74 = sphi 0, %s78
      %p75 = scmp.ge.s32.totalorder %s74, 6
      %s81 = sphi 0, %s93
      %s82 = sphi 0, %s89
      %s83 = sphi 0, %s81
      %s84 = sphi 0, %s82
      %s85 = sphi 0, %s83
      %s86 = sphi 0, %s84
      %s96 = sphi 0, %s98
      %s99 = sphi 0, %s96
      %s100 = sphi 0, %s99
      %s116 = sphi 0, %s100
      %s122 = sphi 0, %s124
      %s125 = sphi 0, %s122
      %s126 = sphi 0, %s125
      %s142 = sphi 0, %s126
      %s148 = sphi 0, %s150
      %s151 = sphi 0, %s148
      %s152 = sphi 0, %s151
      %s168 = sphi 0, %s152
      %s172 = sphi 0, %s172
      %s174 = sphi 0, %s172
      %s175 = sphi 0, %s174
      %s189 = sphi 0, %s175
      %s195 = sphi 0, %s197
      %s198 = sphi 0, %s195
      %s199 = sphi 0, %s198
      %s215 = sphi 0, %s199
      %s221 = sphi 0, %s223
      %s224 = sphi 0, %s221
      %s225 = sphi 0, %s224
      %s241 = sphi 0, %s225
      %s247 = sphi 0, %s249
      %s250 = sphi 0, %s247
      %s251 = sphi 0, %s250
      %s267 = sphi 0, %s251
      %s273 = sphi 0, %s275
      %s276 = sphi 0, %s273
      %s277 = sphi 0, %s276
      %s293 = sphi 0, %s277
      %s299 = sphi 0, %s301
      %s302 = sphi 0, %s299
      %s303 = sphi 0, %s302
      %s319 = sphi 0, %s303
      %s325 = sphi 0, %s327
      %s328 = sphi 0, %s325
      %s329 = sphi 0, %s328
      %s345 = sphi 0, %s329
      %s351 = sphi 0, %s353
      %s354 = sphi 0, %s351
      %s355 = sphi 0, %s354
      %s371 = sphi 0, %s355
      %s377 = sphi 0, %s379
      %s380 = sphi 0, %s377
      %s381 = sphi 0, %s380
      %s397 = sphi 0, %s381
      %s403 = sphi 0, %s405
      %s406 = sphi 0, %s403
      %s407 = sphi 0, %s406
      %s423 = sphi 0, %s407
      %s429 = sphi 0, %s431
      %s432 = sphi 0, %s429
      %s433 = sphi 0, %s432
      %s449 = sphi 0, %s433
      %s455 = sphi 0, %s457
      %s458 = sphi 0, %s455
      %s459 = sphi 0, %s458
      %s475 = sphi 0, %s459
      %s481 = sphi 0, %s483
      %s484 = sphi 0, %s481
      %s485 = sphi 0, %s484
      %s501 = sphi 0, %s485
      %s507 = sphi 0, %s509
      %s510 = sphi 0, %s507
      %s511 = sphi 0, %s510
      %s527 = sphi 0, %s511
      %s533 = sphi 0, %s535
      %s536 = sphi 0, %s533
      %s537 = sphi 0, %s536
      %s553 = sphi 0, %s537
      %s559 = sphi 0, %s561
      %s562 = sphi 0, %s559
      %s563 = sphi 0, %s562
      %s579 = sphi 0, %s563
      %s585 = sphi 0, %s587
      %s588 = sphi 0, %s585
      %s589 = sphi 0, %s588
      %s605 = sphi 0, %s589
      %s611 = sphi 0, %s613
      %s614 = sphi 0, %s611
      %s615 = sphi 0, %s614
      %s631 = sphi 0, %s615
      %s637 = sphi 0, %s639
      %s640 = sphi 0, %s637
      %s641 = sphi 0, %s640
      %s657 = sphi 0, %s641
      %s663 = sphi 0, %s665
      %s666 = sphi 0, %s663
      %s667 = sphi 0, %s666
      %s683 = sphi 0, %s667
      %s689 = sphi 0, %s691
      %s692 = sphi 0, %s689
      %s693 = sphi 0, %s692
      %s709 = sphi 0, %s693
      %s715 = sphi 0, %s717
      %s718 = sphi 0, %s715
      %s719 = sphi 0, %s718
      %s735 = sphi 0, %s719
      %s741 = sphi 0, %s743
      %s744 = sphi 0, %s741
      %s745 = sphi 0, %s744
      %s761 = sphi 0, %s745
      %s767 = sphi 0, %s769
      %s770 = sphi 0, %s767
      %s771 = sphi 0, %s770
      %s787 = sphi 0, %s771
      %s793 = sphi 0, %s795
      %s796 = sphi 0, %s793
      %s797 = sphi 0, %s796
      %s813 = sphi 0, %s797
      %s819 = sphi 0, %s821
      %s822 = sphi 0, %s819
      %s823 = sphi 0, %s822
      %s839 = sphi 0, %s823
      %s845 = sphi 0, %s847
      %s848 = sphi 0, %s845
      %s849 = sphi 0, %s848
      %s865 = sphi 0, %s849
      %s869 = sphi 0, %s869
      %s871 = sphi 0, %s869
      %s872 = sphi 0, %s871
      %s886 = sphi 0, %s872
      %s890 = sphi 0, %s890
      %s892 = sphi 0, %s890
      %s893 = sphi 0, %s892
      %s907 = sphi 0, %s893
      %s913 = sphi 0, %s915
      %s916 = sphi 0, %s913
      %s917 = sphi 0, %s916
      %s933 = sphi 0, %s917
    $region4: #{decoder_forward.1} parent=1 // loop_header_branch
      %77 = sbr.rel (%p75) target = $region8
    $region5: #{decoder_forward.1} parent=1 // loop_body
      %s79 = ssub.s32 %s74, 1
      %s80 = ssub.s32 %s74, 2
      %s87 = sadd.s32 1, %s82
      %p88 = scmp.ge.s32.totalorder %s87, 2
      %s89 = scalar_select %p88, 0, %s87
      %s90 = sadd.s32 1, %s81
      %s91 = scalar_select %p88, %s90, %s81
      %p92 = scmp.ge.s32.totalorder %s91, 2
      %s93 = scalar_select %p92, 0, %s91
      %s94 = ssub.s32 %s81, %s93
      %p95 = scmp.eq.s32.totalorder %s94, 0
      %s97 = sadd.s32 %s96, 1
      %s98 = scalar_select %p95, %s96, %s97
      %p101 = pneg %p95
      %p102 = scmp.eq.s32.totalorder %s74, 3
      %p103 = por %p101, %p102
      %p104 = scmp.ne.s32.totalorder %s96, %s99
      %p105 = scmp.eq.s32.totalorder %s74, 0
      %p106 = por %p104, %p105
      %p107 = scmp.ne.s32.totalorder %s96, %s99
      %p108 = scmp.eq.s32.totalorder %s79, 3
      %p109 = por %p107, %p108
      %p110 = scmp.ne.s32.totalorder %s99, %s100
      %p111 = scmp.eq.s32.totalorder %s79, 0
      %p112 = por %p110, %p111
      %p113 = scmp.ne.s32.totalorder %s99, %s100
      %p114 = scmp.eq.s32.totalorder %s80, 3
      %p115 = por %p113, %p114
      %p117 = scmp.ne.s32.totalorder %s100, %s116
      %p118 = scmp.eq.s32.totalorder %s80, 0
      %p119 = por %p117, %p118
      %s120 = ssub.s32 %s81, %s93
      %p121 = scmp.eq.s32.totalorder %s120, 0
      %s123 = sadd.s32 %s122, 1
      %s124 = scalar_select %p121, %s122, %s123
      %p127 = pneg %p121
      %p128 = scmp.eq.s32.totalorder %s74, 3
      %p129 = por %p127, %p128
      %p130 = scmp.ne.s32.totalorder %s122, %s125
      %p131 = scmp.eq.s32.totalorder %s74, 0
      %p132 = por %p130, %p131
      %p133 = scmp.ne.s32.totalorder %s122, %s125
      %p134 = scmp.eq.s32.totalorder %s79, 3
      %p135 = por %p133, %p134
      %p136 = scmp.ne.s32.totalorder %s125, %s126
      %p137 = scmp.eq.s32.totalorder %s79, 0
      %p138 = por %p136, %p137
      %p139 = scmp.ne.s32.totalorder %s125, %s126
      %p140 = scmp.eq.s32.totalorder %s80, 3
      %p141 = por %p139, %p140
      %p143 = scmp.ne.s32.totalorder %s126, %s142
      %p144 = scmp.eq.s32.totalorder %s80, 0
      %p145 = por %p143, %p144
      %s146 = ssub.s32 %s81, %s93
      %p147 = scmp.eq.s32.totalorder %s146, 0
      %s149 = sadd.s32 %s148, 1
      %s150 = scalar_select %p147, %s148, %s149
      %p153 = pneg %p147
      %p154 = scmp.eq.s32.totalorder %s74, 3
      %p155 = por %p153, %p154
      %p156 = scmp.ne.s32.totalorder %s148, %s151
      %p157 = scmp.eq.s32.totalorder %s74, 0
      %p158 = por %p156, %p157
      %p159 = scmp.ne.s32.totalorder %s148, %s151
      %p160 = scmp.eq.s32.totalorder %s79, 3
      %p161 = por %p159, %p160
      %p162 = scmp.ne.s32.totalorder %s151, %s152
      %p163 = scmp.eq.s32.totalorder %s79, 0
      %p164 = por %p162, %p163
      %p165 = scmp.ne.s32.totalorder %s151, %s152
      %p166 = scmp.eq.s32.totalorder %s80, 3
      %p167 = por %p165, %p166
      %p169 = scmp.ne.s32.totalorder %s152, %s168
      %p170 = scmp.eq.s32.totalorder %s80, 0
      %p171 = por %p169, %p170
      %s173 = sadd.s32 %s172, 1
      %p176 = scmp.eq.s32.totalorder %s74, 3
      %p177 = scmp.ne.s32.totalorder %s172, %s174
      %p178 = scmp.eq.s32.totalorder %s74, 0
      %p179 = por %p177, %p178
      %p180 = scmp.ne.s32.totalorder %s172, %s174
      %p181 = scmp.eq.s32.totalorder %s79, 3
      %p182 = por %p180, %p181
      %p183 = scmp.ne.s32.totalorder %s174, %s175
      %p184 = scmp.eq.s32.totalorder %s79, 0
      %p185 = por %p183, %p184
      %p186 = scmp.ne.s32.totalorder %s174, %s175
      %p187 = scmp.eq.s32.totalorder %s80, 3
      %p188 = por %p186, %p187
      %p190 = scmp.ne.s32.totalorder %s175, %s189
      %p191 = scmp.eq.s32.totalorder %s80, 0
      %p192 = por %p190, %p191
      %s193 = ssub.s32 %s82, %s89
      %p194 = scmp.eq.s32.totalorder %s193, 0
      %s196 = sadd.s32 %s195, 1
      %s197 = scalar_select %p194, %s195, %s196
      %p200 = pneg %p194
      %p201 = scmp.eq.s32.totalorder %s74, 3
      %p202 = por %p200, %p201
      %p203 = scmp.ne.s32.totalorder %s195, %s198
      %p204 = scmp.eq.s32.totalorder %s74, 0
      %p205 = por %p203, %p204
      %p206 = scmp.ne.s32.totalorder %s195, %s198
      %p207 = scmp.eq.s32.totalorder %s79, 3
      %p208 = por %p206, %p207
      %p209 = scmp.ne.s32.totalorder %s198, %s199
      %p210 = scmp.eq.s32.totalorder %s79, 0
      %p211 = por %p209, %p210
      %p212 = scmp.ne.s32.totalorder %s198, %s199
      %p213 = scmp.eq.s32.totalorder %s80, 3
      %p214 = por %p212, %p213
      %p216 = scmp.ne.s32.totalorder %s199, %s215
      %p217 = scmp.eq.s32.totalorder %s80, 0
      %p218 = por %p216, %p217
      %s219 = ssub.s32 %s82, %s89
      %p220 = scmp.eq.s32.totalorder %s219, 0
      %s222 = sadd.s32 %s221, 1
      %s223 = scalar_select %p220, %s221, %s222
      %p226 = pneg %p220
      %p227 = scmp.eq.s32.totalorder %s74, 3
      %p228 = por %p226, %p227
      %p229 = scmp.ne.s32.totalorder %s221, %s224
      %p230 = scmp.eq.s32.totalorder %s74, 0
      %p231 = por %p229, %p230
      %p232 = scmp.ne.s32.totalorder %s221, %s224
      %p233 = scmp.eq.s32.totalorder %s79, 3
      %p234 = por %p232, %p233
      %p235 = scmp.ne.s32.totalorder %s224, %s225
      %p236 = scmp.eq.s32.totalorder %s79, 0
      %p237 = por %p235, %p236
      %p238 = scmp.ne.s32.totalorder %s224, %s225
      %p239 = scmp.eq.s32.totalorder %s80, 3
      %p240 = por %p238, %p239
      %p242 = scmp.ne.s32.totalorder %s225, %s241
      %p243 = scmp.eq.s32.totalorder %s80, 0
      %p244 = por %p242, %p243
      %s245 = ssub.s32 %s82, %s89
      %p246 = scmp.eq.s32.totalorder %s245, 0
      %s248 = sadd.s32 %s247, 1
      %s249 = scalar_select %p246, %s247, %s248
      %p252 = pneg %p246
      %p253 = scmp.eq.s32.totalorder %s74, 3
      %p254 = por %p252, %p253
      %p255 = scmp.ne.s32.totalorder %s247, %s250
      %p256 = scmp.eq.s32.totalorder %s74, 0
      %p257 = por %p255, %p256
      %p258 = scmp.ne.s32.totalorder %s247, %s250
      %p259 = scmp.eq.s32.totalorder %s79, 3
      %p260 = por %p258, %p259
      %p261 = scmp.ne.s32.totalorder %s250, %s251
      %p262 = scmp.eq.s32.totalorder %s79, 0
      %p263 = por %p261, %p262
      %p264 = scmp.ne.s32.totalorder %s250, %s251
      %p265 = scmp.eq.s32.totalorder %s80, 3
      %p266 = por %p264, %p265
      %p268 = scmp.ne.s32.totalorder %s251, %s267
      %p269 = scmp.eq.s32.totalorder %s80, 0
      %p270 = por %p268, %p269
      %s271 = ssub.s32 %s82, %s89
      %p272 = scmp.eq.s32.totalorder %s271, 0
      %s274 = sadd.s32 %s273, 1
      %s275 = scalar_select %p272, %s273, %s274
      %p278 = pneg %p272
      %p279 = scmp.eq.s32.totalorder %s74, 3
      %p280 = por %p278, %p279
      %p281 = scmp.ne.s32.totalorder %s273, %s276
      %p282 = scmp.eq.s32.totalorder %s74, 0
      %p283 = por %p281, %p282
      %p284 = scmp.ne.s32.totalorder %s273, %s276
      %p285 = scmp.eq.s32.totalorder %s79, 3
      %p286 = por %p284, %p285
      %p287 = scmp.ne.s32.totalorder %s276, %s277
      %p288 = scmp.eq.s32.totalorder %s79, 0
      %p289 = por %p287, %p288
      %p290 = scmp.ne.s32.totalorder %s276, %s277
      %p291 = scmp.eq.s32.totalorder %s80, 3
      %p292 = por %p290, %p291
      %p294 = scmp.ne.s32.totalorder %s277, %s293
      %p295 = scmp.eq.s32.totalorder %s80, 0
      %p296 = por %p294, %p295
      %s297 = ssub.s32 %s82, %s89
      %p298 = scmp.eq.s32.totalorder %s297, 0
      %s300 = sadd.s32 %s299, 1
      %s301 = scalar_select %p298, %s299, %s300
      %p304 = pneg %p298
      %p305 = scmp.eq.s32.totalorder %s74, 3
      %p306 = por %p304, %p305
      %p307 = scmp.ne.s32.totalorder %s299, %s302
      %p308 = scmp.eq.s32.totalorder %s74, 0
      %p309 = por %p307, %p308
      %p310 = scmp.ne.s32.totalorder %s299, %s302
      %p311 = scmp.eq.s32.totalorder %s79, 3
      %p312 = por %p310, %p311
      %p313 = scmp.ne.s32.totalorder %s302, %s303
      %p314 = scmp.eq.s32.totalorder %s79, 0
      %p315 = por %p313, %p314
      %p316 = scmp.ne.s32.totalorder %s302, %s303
      %p317 = scmp.eq.s32.totalorder %s80, 3
      %p318 = por %p316, %p317
      %p320 = scmp.ne.s32.totalorder %s303, %s319
      %p321 = scmp.eq.s32.totalorder %s80, 0
      %p322 = por %p320, %p321
      %s323 = ssub.s32 %s82, %s89
      %p324 = scmp.eq.s32.totalorder %s323, 0
      %s326 = sadd.s32 %s325, 1
      %s327 = scalar_select %p324, %s325, %s326
      %p330 = pneg %p324
      %p331 = scmp.eq.s32.totalorder %s74, 3
      %p332 = por %p330, %p331
      %p333 = scmp.ne.s32.totalorder %s325, %s328
      %p334 = scmp.eq.s32.totalorder %s74, 0
      %p335 = por %p333, %p334
      %p336 = scmp.ne.s32.totalorder %s325, %s328
      %p337 = scmp.eq.s32.totalorder %s79, 3
      %p338 = por %p336, %p337
      %p339 = scmp.ne.s32.totalorder %s328, %s329
      %p340 = scmp.eq.s32.totalorder %s79, 0
      %p341 = por %p339, %p340
      %p342 = scmp.ne.s32.totalorder %s328, %s329
      %p343 = scmp.eq.s32.totalorder %s80, 3
      %p344 = por %p342, %p343
      %p346 = scmp.ne.s32.totalorder %s329, %s345
      %p347 = scmp.eq.s32.totalorder %s80, 0
      %p348 = por %p346, %p347
      %s349 = ssub.s32 %s82, %s89
      %p350 = scmp.eq.s32.totalorder %s349, 0
      %s352 = sadd.s32 %s351, 1
      %s353 = scalar_select %p350, %s351, %s352
      %p356 = pneg %p350
      %p357 = scmp.eq.s32.totalorder %s74, 3
      %p358 = por %p356, %p357
      %p359 = scmp.ne.s32.totalorder %s351, %s354
      %p360 = scmp.eq.s32.totalorder %s74, 0
      %p361 = por %p359, %p360
      %p362 = scmp.ne.s32.totalorder %s351, %s354
      %p363 = scmp.eq.s32.totalorder %s79, 3
      %p364 = por %p362, %p363
      %p365 = scmp.ne.s32.totalorder %s354, %s355
      %p366 = scmp.eq.s32.totalorder %s79, 0
      %p367 = por %p365, %p366
      %p368 = scmp.ne.s32.totalorder %s354, %s355
      %p369 = scmp.eq.s32.totalorder %s80, 3
      %p370 = por %p368, %p369
      %p372 = scmp.ne.s32.totalorder %s355, %s371
      %p373 = scmp.eq.s32.totalorder %s80, 0
      %p374 = por %p372, %p373
      %s375 = ssub.s32 %s82, %s89
      %p376 = scmp.eq.s32.totalorder %s375, 0
      %s378 = sadd.s32 %s377, 1
      %s379 = scalar_select %p376, %s377, %s378
      %p382 = pneg %p376
      %p383 = scmp.eq.s32.totalorder %s74, 3
      %p384 = por %p382, %p383
      %p385 = scmp.ne.s32.totalorder %s377, %s380
      %p386 = scmp.eq.s32.totalorder %s74, 0
      %p387 = por %p385, %p386
      %p388 = scmp.ne.s32.totalorder %s377, %s380
      %p389 = scmp.eq.s32.totalorder %s79, 3
      %p390 = por %p388, %p389
      %p391 = scmp.ne.s32.totalorder %s380, %s381
      %p392 = scmp.eq.s32.totalorder %s79, 0
      %p393 = por %p391, %p392
      %p394 = scmp.ne.s32.totalorder %s380, %s381
      %p395 = scmp.eq.s32.totalorder %s80, 3
      %p396 = por %p394, %p395
      %p398 = scmp.ne.s32.totalorder %s381, %s397
      %p399 = scmp.eq.s32.totalorder %s80, 0
      %p400 = por %p398, %p399
      %s401 = ssub.s32 %s82, %s89
      %p402 = scmp.eq.s32.totalorder %s401, 0
      %s404 = sadd.s32 %s403, 1
      %s405 = scalar_select %p402, %s403, %s404
      %p408 = pneg %p402
      %p409 = scmp.eq.s32.totalorder %s74, 3
      %p410 = por %p408, %p409
      %p411 = scmp.ne.s32.totalorder %s403, %s406
      %p412 = scmp.eq.s32.totalorder %s74, 0
      %p413 = por %p411, %p412
      %p414 = scmp.ne.s32.totalorder %s403, %s406
      %p415 = scmp.eq.s32.totalorder %s79, 3
      %p416 = por %p414, %p415
      %p417 = scmp.ne.s32.totalorder %s406, %s407
      %p418 = scmp.eq.s32.totalorder %s79, 0
      %p419 = por %p417, %p418
      %p420 = scmp.ne.s32.totalorder %s406, %s407
      %p421 = scmp.eq.s32.totalorder %s80, 3
      %p422 = por %p420, %p421
      %p424 = scmp.ne.s32.totalorder %s407, %s423
      %p425 = scmp.eq.s32.totalorder %s80, 0
      %p426 = por %p424, %p425
      %s427 = ssub.s32 %s82, %s89
      %p428 = scmp.eq.s32.totalorder %s427, 0
      %s430 = sadd.s32 %s429, 1
      %s431 = scalar_select %p428, %s429, %s430
      %p434 = pneg %p428
      %p435 = scmp.eq.s32.totalorder %s74, 3
      %p436 = por %p434, %p435
      %p437 = scmp.ne.s32.totalorder %s429, %s432
      %p438 = scmp.eq.s32.totalorder %s74, 0
      %p439 = por %p437, %p438
      %p440 = scmp.ne.s32.totalorder %s429, %s432
      %p441 = scmp.eq.s32.totalorder %s79, 3
      %p442 = por %p440, %p441
      %p443 = scmp.ne.s32.totalorder %s432, %s433
      %p444 = scmp.eq.s32.totalorder %s79, 0
      %p445 = por %p443, %p444
      %p446 = scmp.ne.s32.totalorder %s432, %s433
      %p447 = scmp.eq.s32.totalorder %s80, 3
      %p448 = por %p446, %p447
      %p450 = scmp.ne.s32.totalorder %s433, %s449
      %p451 = scmp.eq.s32.totalorder %s80, 0
      %p452 = por %p450, %p451
      %s453 = ssub.s32 %s82, %s89
      %p454 = scmp.eq.s32.totalorder %s453, 0
      %s456 = sadd.s32 %s455, 1
      %s457 = scalar_select %p454, %s455, %s456
      %p460 = pneg %p454
      %p461 = scmp.eq.s32.totalorder %s74, 3
      %p462 = por %p460, %p461
      %p463 = scmp.ne.s32.totalorder %s455, %s458
      %p464 = scmp.eq.s32.totalorder %s74, 0
      %p465 = por %p463, %p464
      %p466 = scmp.ne.s32.totalorder %s455, %s458
      %p467 = scmp.eq.s32.totalorder %s79, 3
      %p468 = por %p466, %p467
      %p469 = scmp.ne.s32.totalorder %s458, %s459
      %p470 = scmp.eq.s32.totalorder %s79, 0
      %p471 = por %p469, %p470
      %p472 = scmp.ne.s32.totalorder %s458, %s459
      %p473 = scmp.eq.s32.totalorder %s80, 3
      %p474 = por %p472, %p473
      %p476 = scmp.ne.s32.totalorder %s459, %s475
      %p477 = scmp.eq.s32.totalorder %s80, 0
      %p478 = por %p476, %p477
      %s479 = ssub.s32 %s82, %s89
      %p480 = scmp.eq.s32.totalorder %s479, 0
      %s482 = sadd.s32 %s481, 1
      %s483 = scalar_select %p480, %s481, %s482
      %p486 = pneg %p480
      %p487 = scmp.eq.s32.totalorder %s74, 3
      %p488 = por %p486, %p487
      %p489 = scmp.ne.s32.totalorder %s481, %s484
      %p490 = scmp.eq.s32.totalorder %s74, 0
      %p491 = por %p489, %p490
      %p492 = scmp.ne.s32.totalorder %s481, %s484
      %p493 = scmp.eq.s32.totalorder %s79, 3
      %p494 = por %p492, %p493
      %p495 = scmp.ne.s32.totalorder %s484, %s485
      %p496 = scmp.eq.s32.totalorder %s79, 0
      %p497 = por %p495, %p496
      %p498 = scmp.ne.s32.totalorder %s484, %s485
      %p499 = scmp.eq.s32.totalorder %s80, 3
      %p500 = por %p498, %p499
      %p502 = scmp.ne.s32.totalorder %s485, %s501
      %p503 = scmp.eq.s32.totalorder %s80, 0
      %p504 = por %p502, %p503
      %s505 = ssub.s32 %s82, %s89
      %p506 = scmp.eq.s32.totalorder %s505, 0
      %s508 = sadd.s32 %s507, 1
      %s509 = scalar_select %p506, %s507, %s508
      %p512 = pneg %p506
      %p513 = scmp.eq.s32.totalorder %s74, 3
      %p514 = por %p512, %p513
      %p515 = scmp.ne.s32.totalorder %s507, %s510
      %p516 = scmp.eq.s32.totalorder %s74, 0
      %p517 = por %p515, %p516
      %p518 = scmp.ne.s32.totalorder %s507, %s510
      %p519 = scmp.eq.s32.totalorder %s79, 3
      %p520 = por %p518, %p519
      %p521 = scmp.ne.s32.totalorder %s510, %s511
      %p522 = scmp.eq.s32.totalorder %s79, 0
      %p523 = por %p521, %p522
      %p524 = scmp.ne.s32.totalorder %s510, %s511
      %p525 = scmp.eq.s32.totalorder %s80, 3
      %p526 = por %p524, %p525
      %p528 = scmp.ne.s32.totalorder %s511, %s527
      %p529 = scmp.eq.s32.totalorder %s80, 0
      %p530 = por %p528, %p529
      %s531 = ssub.s32 %s82, %s89
      %p532 = scmp.eq.s32.totalorder %s531, 0
      %s534 = sadd.s32 %s533, 1
      %s535 = scalar_select %p532, %s533, %s534
      %p538 = pneg %p532
      %p539 = scmp.eq.s32.totalorder %s74, 3
      %p540 = por %p538, %p539
      %p541 = scmp.ne.s32.totalorder %s533, %s536
      %p542 = scmp.eq.s32.totalorder %s74, 0
      %p543 = por %p541, %p542
      %p544 = scmp.ne.s32.totalorder %s533, %s536
      %p545 = scmp.eq.s32.totalorder %s79, 3
      %p546 = por %p544, %p545
      %p547 = scmp.ne.s32.totalorder %s536, %s537
      %p548 = scmp.eq.s32.totalorder %s79, 0
      %p549 = por %p547, %p548
      %p550 = scmp.ne.s32.totalorder %s536, %s537
      %p551 = scmp.eq.s32.totalorder %s80, 3
      %p552 = por %p550, %p551
      %p554 = scmp.ne.s32.totalorder %s537, %s553
      %p555 = scmp.eq.s32.totalorder %s80, 0
      %p556 = por %p554, %p555
      %s557 = ssub.s32 %s82, %s89
      %p558 = scmp.eq.s32.totalorder %s557, 0
      %s560 = sadd.s32 %s559, 1
      %s561 = scalar_select %p558, %s559, %s560
      %p564 = pneg %p558
      %p565 = scmp.eq.s32.totalorder %s74, 3
      %p566 = por %p564, %p565
      %p567 = scmp.ne.s32.totalorder %s559, %s562
      %p568 = scmp.eq.s32.totalorder %s74, 0
      %p569 = por %p567, %p568
      %p570 = scmp.ne.s32.totalorder %s559, %s562
      %p571 = scmp.eq.s32.totalorder %s79, 3
      %p572 = por %p570, %p571
      %p573 = scmp.ne.s32.totalorder %s562, %s563
      %p574 = scmp.eq.s32.totalorder %s79, 0
      %p575 = por %p573, %p574
      %p576 = scmp.ne.s32.totalorder %s562, %s563
      %p577 = scmp.eq.s32.totalorder %s80, 3
      %p578 = por %p576, %p577
      %p580 = scmp.ne.s32.totalorder %s563, %s579
      %p581 = scmp.eq.s32.totalorder %s80, 0
      %p582 = por %p580, %p581
      %s583 = ssub.s32 %s82, %s89
      %p584 = scmp.eq.s32.totalorder %s583, 0
      %s586 = sadd.s32 %s585, 1
      %s587 = scalar_select %p584, %s585, %s586
      %p590 = pneg %p584
      %p591 = scmp.eq.s32.totalorder %s74, 3
      %p592 = por %p590, %p591
      %p593 = scmp.ne.s32.totalorder %s585, %s588
      %p594 = scmp.eq.s32.totalorder %s74, 0
      %p595 = por %p593, %p594
      %p596 = scmp.ne.s32.totalorder %s585, %s588
      %p597 = scmp.eq.s32.totalorder %s79, 3
      %p598 = por %p596, %p597
      %p599 = scmp.ne.s32.totalorder %s588, %s589
      %p600 = scmp.eq.s32.totalorder %s79, 0
      %p601 = por %p599, %p600
      %p602 = scmp.ne.s32.totalorder %s588, %s589
      %p603 = scmp.eq.s32.totalorder %s80, 3
      %p604 = por %p602, %p603
      %p606 = scmp.ne.s32.totalorder %s589, %s605
      %p607 = scmp.eq.s32.totalorder %s80, 0
      %p608 = por %p606, %p607
      %s609 = ssub.s32 %s82, %s89
      %p610 = scmp.eq.s32.totalorder %s609, 0
      %s612 = sadd.s32 %s611, 1
      %s613 = scalar_select %p610, %s611, %s612
      %p616 = pneg %p610
      %p617 = scmp.eq.s32.totalorder %s74, 3
      %p618 = por %p616, %p617
      %p619 = scmp.ne.s32.totalorder %s611, %s614
      %p620 = scmp.eq.s32.totalorder %s74, 0
      %p621 = por %p619, %p620
      %p622 = scmp.ne.s32.totalorder %s611, %s614
      %p623 = scmp.eq.s32.totalorder %s79, 3
      %p624 = por %p622, %p623
      %p625 = scmp.ne.s32.totalorder %s614, %s615
      %p626 = scmp.eq.s32.totalorder %s79, 0
      %p627 = por %p625, %p626
      %p628 = scmp.ne.s32.totalorder %s614, %s615
      %p629 = scmp.eq.s32.totalorder %s80, 3
      %p630 = por %p628, %p629
      %p632 = scmp.ne.s32.totalorder %s615, %s631
      %p633 = scmp.eq.s32.totalorder %s80, 0
      %p634 = por %p632, %p633
      %s635 = ssub.s32 %s82, %s89
      %p636 = scmp.eq.s32.totalorder %s635, 0
      %s638 = sadd.s32 %s637, 1
      %s639 = scalar_select %p636, %s637, %s638
      %p642 = pneg %p636
      %p643 = scmp.eq.s32.totalorder %s74, 3
      %p644 = por %p642, %p643
      %p645 = scmp.ne.s32.totalorder %s637, %s640
      %p646 = scmp.eq.s32.totalorder %s74, 0
      %p647 = por %p645, %p646
      %p648 = scmp.ne.s32.totalorder %s637, %s640
      %p649 = scmp.eq.s32.totalorder %s79, 3
      %p650 = por %p648, %p649
      %p651 = scmp.ne.s32.totalorder %s640, %s641
      %p652 = scmp.eq.s32.totalorder %s79, 0
      %p653 = por %p651, %p652
      %p654 = scmp.ne.s32.totalorder %s640, %s641
      %p655 = scmp.eq.s32.totalorder %s80, 3
      %p656 = por %p654, %p655
      %p658 = scmp.ne.s32.totalorder %s641, %s657
      %p659 = scmp.eq.s32.totalorder %s80, 0
      %p660 = por %p658, %p659
      %s661 = ssub.s32 %s82, %s89
      %p662 = scmp.eq.s32.totalorder %s661, 0
      %s664 = sadd.s32 %s663, 1
      %s665 = scalar_select %p662, %s663, %s664
      %p668 = pneg %p662
      %p669 = scmp.eq.s32.totalorder %s74, 3
      %p670 = por %p668, %p669
      %p671 = scmp.ne.s32.totalorder %s663, %s666
      %p672 = scmp.eq.s32.totalorder %s74, 0
      %p673 = por %p671, %p672
      %p674 = scmp.ne.s32.totalorder %s663, %s666
      %p675 = scmp.eq.s32.totalorder %s79, 3
      %p676 = por %p674, %p675
      %p677 = scmp.ne.s32.totalorder %s666, %s667
      %p678 = scmp.eq.s32.totalorder %s79, 0
      %p679 = por %p677, %p678
      %p680 = scmp.ne.s32.totalorder %s666, %s667
      %p681 = scmp.eq.s32.totalorder %s80, 3
      %p682 = por %p680, %p681
      %p684 = scmp.ne.s32.totalorder %s667, %s683
      %p685 = scmp.eq.s32.totalorder %s80, 0
      %p686 = por %p684, %p685
      %s687 = ssub.s32 %s82, %s89
      %p688 = scmp.eq.s32.totalorder %s687, 0
      %s690 = sadd.s32 %s689, 1
      %s691 = scalar_select %p688, %s689, %s690
      %p694 = pneg %p688
      %p695 = scmp.eq.s32.totalorder %s74, 3
      %p696 = por %p694, %p695
      %p697 = scmp.ne.s32.totalorder %s689, %s692
      %p698 = scmp.eq.s32.totalorder %s74, 0
      %p699 = por %p697, %p698
      %p700 = scmp.ne.s32.totalorder %s689, %s692
      %p701 = scmp.eq.s32.totalorder %s79, 3
      %p702 = por %p700, %p701
      %p703 = scmp.ne.s32.totalorder %s692, %s693
      %p704 = scmp.eq.s32.totalorder %s79, 0
      %p705 = por %p703, %p704
      %p706 = scmp.ne.s32.totalorder %s692, %s693
      %p707 = scmp.eq.s32.totalorder %s80, 3
      %p708 = por %p706, %p707
      %p710 = scmp.ne.s32.totalorder %s693, %s709
      %p711 = scmp.eq.s32.totalorder %s80, 0
      %p712 = por %p710, %p711
      %s713 = ssub.s32 %s82, %s89
      %p714 = scmp.eq.s32.totalorder %s713, 0
      %s716 = sadd.s32 %s715, 1
      %s717 = scalar_select %p714, %s715, %s716
      %p720 = pneg %p714
      %p721 = scmp.eq.s32.totalorder %s74, 3
      %p722 = por %p720, %p721
      %p723 = scmp.ne.s32.totalorder %s715, %s718
      %p724 = scmp.eq.s32.totalorder %s74, 0
      %p725 = por %p723, %p724
      %p726 = scmp.ne.s32.totalorder %s715, %s718
      %p727 = scmp.eq.s32.totalorder %s79, 3
      %p728 = por %p726, %p727
      %p729 = scmp.ne.s32.totalorder %s718, %s719
      %p730 = scmp.eq.s32.totalorder %s79, 0
      %p731 = por %p729, %p730
      %p732 = scmp.ne.s32.totalorder %s718, %s719
      %p733 = scmp.eq.s32.totalorder %s80, 3
      %p734 = por %p732, %p733
      %p736 = scmp.ne.s32.totalorder %s719, %s735
      %p737 = scmp.eq.s32.totalorder %s80, 0
      %p738 = por %p736, %p737
      %s739 = ssub.s32 %s82, %s89
      %p740 = scmp.eq.s32.totalorder %s739, 0
      %s742 = sadd.s32 %s741, 1
      %s743 = scalar_select %p740, %s741, %s742
      %p746 = pneg %p740
      %p747 = scmp.eq.s32.totalorder %s74, 3
      %p748 = por %p746, %p747
      %p749 = scmp.ne.s32.totalorder %s741, %s744
      %p750 = scmp.eq.s32.totalorder %s74, 0
      %p751 = por %p749, %p750
      %p752 = scmp.ne.s32.totalorder %s741, %s744
      %p753 = scmp.eq.s32.totalorder %s79, 3
      %p754 = por %p752, %p753
      %p755 = scmp.ne.s32.totalorder %s744, %s745
      %p756 = scmp.eq.s32.totalorder %s79, 0
      %p757 = por %p755, %p756
      %p758 = scmp.ne.s32.totalorder %s744, %s745
      %p759 = scmp.eq.s32.totalorder %s80, 3
      %p760 = por %p758, %p759
      %p762 = scmp.ne.s32.totalorder %s745, %s761
      %p763 = scmp.eq.s32.totalorder %s80, 0
      %p764 = por %p762, %p763
      %s765 = ssub.s32 %s82, %s89
      %p766 = scmp.eq.s32.totalorder %s765, 0
      %s768 = sadd.s32 %s767, 1
      %s769 = scalar_select %p766, %s767, %s768
      %p772 = pneg %p766
      %p773 = scmp.eq.s32.totalorder %s74, 3
      %p774 = por %p772, %p773
      %p775 = scmp.ne.s32.totalorder %s767, %s770
      %p776 = scmp.eq.s32.totalorder %s74, 0
      %p777 = por %p775, %p776
      %p778 = scmp.ne.s32.totalorder %s767, %s770
      %p779 = scmp.eq.s32.totalorder %s79, 3
      %p780 = por %p778, %p779
      %p781 = scmp.ne.s32.totalorder %s770, %s771
      %p782 = scmp.eq.s32.totalorder %s79, 0
      %p783 = por %p781, %p782
      %p784 = scmp.ne.s32.totalorder %s770, %s771
      %p785 = scmp.eq.s32.totalorder %s80, 3
      %p786 = por %p784, %p785
      %p788 = scmp.ne.s32.totalorder %s771, %s787
      %p789 = scmp.eq.s32.totalorder %s80, 0
      %p790 = por %p788, %p789
      %s791 = ssub.s32 %s82, %s89
      %p792 = scmp.eq.s32.totalorder %s791, 0
      %s794 = sadd.s32 %s793, 1
      %s795 = scalar_select %p792, %s793, %s794
      %p798 = pneg %p792
      %p799 = scmp.eq.s32.totalorder %s74, 3
      %p800 = por %p798, %p799
      %p801 = scmp.ne.s32.totalorder %s793, %s796
      %p802 = scmp.eq.s32.totalorder %s74, 0
      %p803 = por %p801, %p802
      %p804 = scmp.ne.s32.totalorder %s793, %s796
      %p805 = scmp.eq.s32.totalorder %s79, 3
      %p806 = por %p804, %p805
      %p807 = scmp.ne.s32.totalorder %s796, %s797
      %p808 = scmp.eq.s32.totalorder %s79, 0
      %p809 = por %p807, %p808
      %p810 = scmp.ne.s32.totalorder %s796, %s797
      %p811 = scmp.eq.s32.totalorder %s80, 3
      %p812 = por %p810, %p811
      %p814 = scmp.ne.s32.totalorder %s797, %s813
      %p815 = scmp.eq.s32.totalorder %s80, 0
      %p816 = por %p814, %p815
      %s817 = ssub.s32 %s82, %s89
      %p818 = scmp.eq.s32.totalorder %s817, 0
      %s820 = sadd.s32 %s819, 1
      %s821 = scalar_select %p818, %s819, %s820
      %p824 = pneg %p818
      %p825 = scmp.eq.s32.totalorder %s74, 3
      %p826 = por %p824, %p825
      %p827 = scmp.ne.s32.totalorder %s819, %s822
      %p828 = scmp.eq.s32.totalorder %s74, 0
      %p829 = por %p827, %p828
      %p830 = scmp.ne.s32.totalorder %s819, %s822
      %p831 = scmp.eq.s32.totalorder %s79, 3
      %p832 = por %p830, %p831
      %p833 = scmp.ne.s32.totalorder %s822, %s823
      %p834 = scmp.eq.s32.totalorder %s79, 0
      %p835 = por %p833, %p834
      %p836 = scmp.ne.s32.totalorder %s822, %s823
      %p837 = scmp.eq.s32.totalorder %s80, 3
      %p838 = por %p836, %p837
      %p840 = scmp.ne.s32.totalorder %s823, %s839
      %p841 = scmp.eq.s32.totalorder %s80, 0
      %p842 = por %p840, %p841
      %s843 = ssub.s32 %s82, %s89
      %p844 = scmp.eq.s32.totalorder %s843, 0
      %s846 = sadd.s32 %s845, 1
      %s847 = scalar_select %p844, %s845, %s846
      %p850 = pneg %p844
      %p851 = scmp.eq.s32.totalorder %s74, 3
      %p852 = por %p850, %p851
      %p853 = scmp.ne.s32.totalorder %s845, %s848
      %p854 = scmp.eq.s32.totalorder %s74, 0
      %p855 = por %p853, %p854
      %p856 = scmp.ne.s32.totalorder %s845, %s848
      %p857 = scmp.eq.s32.totalorder %s79, 3
      %p858 = por %p856, %p857
      %p859 = scmp.ne.s32.totalorder %s848, %s849
      %p860 = scmp.eq.s32.totalorder %s79, 0
      %p861 = por %p859, %p860
      %p862 = scmp.ne.s32.totalorder %s848, %s849
      %p863 = scmp.eq.s32.totalorder %s80, 3
      %p864 = por %p862, %p863
      %p866 = scmp.ne.s32.totalorder %s849, %s865
      %p867 = scmp.eq.s32.totalorder %s80, 0
      %p868 = por %p866, %p867
      %s870 = sadd.s32 %s869, 1
      %p873 = scmp.eq.s32.totalorder %s74, 3
      %p874 = scmp.ne.s32.totalorder %s869, %s871
      %p875 = scmp.eq.s32.totalorder %s74, 0
      %p876 = por %p874, %p875
      %p877 = scmp.ne.s32.totalorder %s869, %s871
      %p878 = scmp.eq.s32.totalorder %s79, 3
      %p879 = por %p877, %p878
      %p880 = scmp.ne.s32.totalorder %s871, %s872
      %p881 = scmp.eq.s32.totalorder %s79, 0
      %p882 = por %p880, %p881
      %p883 = scmp.ne.s32.totalorder %s871, %s872
      %p884 = scmp.eq.s32.totalorder %s80, 3
      %p885 = por %p883, %p884
      %p887 = scmp.ne.s32.totalorder %s872, %s886
      %p888 = scmp.eq.s32.totalorder %s80, 0
      %p889 = por %p887, %p888
      %s891 = sadd.s32 %s890, 1
      %p894 = scmp.eq.s32.totalorder %s74, 3
      %p895 = scmp.ne.s32.totalorder %s890, %s892
      %p896 = scmp.eq.s32.totalorder %s74, 0
      %p897 = por %p895, %p896
      %p898 = scmp.ne.s32.totalorder %s890, %s892
      %p899 = scmp.eq.s32.totalorder %s79, 3
      %p900 = por %p898, %p899
      %p901 = scmp.ne.s32.totalorder %s892, %s893
      %p902 = scmp.eq.s32.totalorder %s79, 0
      %p903 = por %p901, %p902
      %p904 = scmp.ne.s32.totalorder %s892, %s893
      %p905 = scmp.eq.s32.totalorder %s80, 3
      %p906 = por %p904, %p905
      %p908 = scmp.ne.s32.totalorder %s893, %s907
      %p909 = scmp.eq.s32.totalorder %s80, 0
      %p910 = por %p908, %p909
      %s911 = ssub.s32 %s81, %s93
      %p912 = scmp.eq.s32.totalorder %s911, 0
      %s914 = sadd.s32 %s913, 1
      %s915 = scalar_select %p912, %s913, %s914
      %p918 = pneg %p912
      %p919 = scmp.eq.s32.totalorder %s74, 3
      %p920 = por %p918, %p919
      %p921 = scmp.ne.s32.totalorder %s913, %s916
      %p922 = scmp.eq.s32.totalorder %s74, 0
      %p923 = por %p921, %p922
      %p924 = scmp.ne.s32.totalorder %s913, %s916
      %p925 = scmp.eq.s32.totalorder %s79, 3
      %p926 = por %p924, %p925
      %p927 = scmp.ne.s32.totalorder %s916, %s917
      %p928 = scmp.eq.s32.totalorder %s79, 0
      %p929 = por %p927, %p928
      %p930 = scmp.ne.s32.totalorder %s916, %s917
      %p931 = scmp.eq.s32.totalorder %s80, 3
      %p932 = por %p930, %p931
      %p934 = scmp.ne.s32.totalorder %s917, %s933
      %p935 = scmp.eq.s32.totalorder %s80, 0
      %p936 = por %p934, %p935
      %p937 = scmp.le.s32.totalorder 1, %s74
      %p938 = scmp.lt.s32.totalorder %s74, 5
      %p939 = pnand %p937, %p938
      %p940 = pneg %p939
      // Predicated region
      $region9: #{decoder_forward.1} parent=5 // pred_check
        _
      $region10: #{decoder_forward.1} parent=5 // pred_check_branch
        %942 = sbr.rel (%p939) target = $region12
      $region11: #{decoder_forward.1} parent=5 // pred_region
        %s943 = ssub.s32 %s74, 1
        // Predicated region
        $region13: #{decoder_forward.1} parent=11 // pred_check
          %p944 = pneg %p185
        $region14: #{decoder_forward.1} parent=11 // pred_check_branch
          %946 = sbr.rel (%p944) target = $region16
        $region15: #{decoder_forward.1} parent=11 // pred_region
          _
        $region16: #{decoder_forward.1} parent=11 // pred_fallthru
          _
        // Predicated region
        $region17: #{decoder_forward.1} parent=11 // pred_check
          %p947 = pneg %p882
        $region18: #{decoder_forward.1} parent=11 // pred_check_branch
          %949 = sbr.rel (%p947) target = $region20
        $region19: #{decoder_forward.1} parent=11 // pred_region
          _
        $region20: #{decoder_forward.1} parent=11 // pred_fallthru
          _
        // Predicated region
        $region21: #{decoder_forward.1} parent=11 // pred_check
          %p950 = pneg %p903
        $region22: #{decoder_forward.1} parent=11 // pred_check_branch
          %952 = sbr.rel (%p950) target = $region24
        $region23: #{decoder_forward.1} parent=11 // pred_region
          _
        $region24: #{decoder_forward.1} parent=11 // pred_fallthru
          _
      $region12: #{decoder_forward.1} parent=5 // pred_fallthru
        _
      %p953 = scmp.lt.s32.totalorder %s74, 4
      // Predicated region
      $region25: #{decoder_forward.1} parent=5 // pred_check
        %p954 = pneg %p953
      $region26: #{decoder_forward.1} parent=5 // pred_check_branch
        %956 = sbr.rel (%p954) target = $region28
      $region27: #{decoder_forward.1} parent=5 // pred_region
        // Predicated region
        $region29: #{decoder_forward.1} parent=27 // pred_check
          %p957 = pneg %p106
        $region30: #{decoder_forward.1} parent=27 // pred_check_branch
          %959 = sbr.rel (%p957) target = $region32
        $region31: #{decoder_forward.1} parent=27 // pred_region
          %p960 = scmp.lt.s32.totalorder %s81, 1
          %s961 = scalar_select %p960, %s81, 1
          %s962 = smul.addr %s961, 8
          %s963 = scalar_lea.vmem %s1, %s962
        $region32: #{decoder_forward.1} parent=27 // pred_fallthru
          _
        // Predicated region
        $region33: #{decoder_forward.1} parent=27 // pred_check
          %p964 = pneg %p132
        $region34: #{decoder_forward.1} parent=27 // pred_check_branch
          %966 = sbr.rel (%p964) target = $region36
        $region35: #{decoder_forward.1} parent=27 // pred_region
          %p967 = scmp.lt.s32.totalorder %s81, 1
          %s968 = scalar_select %p967, %s81, 1
          %s969 = smul.addr %s968, 2
          %s970 = smul.addr %s969, 8
          %s971 = scalar_lea.vmem %s3, %s970
        $region36: #{decoder_forward.1} parent=27 // pred_fallthru
          _
        // Predicated region
        $region37: #{decoder_forward.1} parent=27 // pred_check
          %p972 = pneg %p158
        $region38: #{decoder_forward.1} parent=27 // pred_check_branch
          %974 = sbr.rel (%p972) target = $region40
        $region39: #{decoder_forward.1} parent=27 // pred_region
          %p975 = scmp.lt.s32.totalorder %s81, 1
          %s976 = scalar_select %p975, %s81, 1
          %s977 = scalar_lea.vmem %s5, %s976
        $region40: #{decoder_forward.1} parent=27 // pred_fallthru
          _
        // Predicated region
        $region41: #{decoder_forward.1} parent=27 // pred_check
          %p978 = pneg %p205
        $region42: #{decoder_forward.1} parent=27 // pred_check_branch
          %980 = sbr.rel (%p978) target = $region44
        $region43: #{decoder_forward.1} parent=27 // pred_region
          %p981 = scmp.lt.s32.totalorder %s82, 1
          %s982 = scalar_select %p981, %s82, 1
          %s983 = smul.addr %s982, 4
          %s984 = smul.addr %s983, 4
          %s985 = scalar_lea.vmem %s9, %s984
        $region44: #{decoder_forward.1} parent=27 // pred_fallthru
          _
        // Predicated region
        $region45: #{decoder_forward.1} parent=27 // pred_check
          %p986 = pneg %p231
        $region46: #{decoder_forward.1} parent=27 // pred_check_branch
          %988 = sbr.rel (%p986) target = $region48
        $region47: #{decoder_forward.1} parent=27 // pred_region
          %p989 = scmp.lt.s32.totalorder %s82, 1
          %s990 = scalar_select %p989, %s82, 1
          %s991 = scalar_lea.vmem %s11, %s990
        $region48: #{decoder_forward.1} parent=27 // pred_fallthru
          _
        // Predicated region
        $region49: #{decoder_forward.1} parent=27 // pred_check
          %p992 = pneg %p257
        $region50: #{decoder_forward.1} parent=27 // pred_check_branch
          %994 = sbr.rel (%p992) target = $region52
        $region51: #{decoder_forward.1} parent=27 // pred_region
          %p995 = scmp.lt.s32.totalorder %s82, 1
          %s996 = scalar_select %p995, %s82, 1
          %s997 = smul.addr %s996, 4
          %s998 = smul.addr %s997, 4
          %s999 = scalar_lea.vmem %s13, %s998
        $region52: #{decoder_forward.1} parent=27 // pred_fallthru
          _
        // Predicated region
        $region53: #{decoder_forward.1} parent=27 // pred_check
          %p1000 = pneg %p283
        $region54: #{decoder_forward.1} parent=27 // pred_check_branch
          %1002 = sbr.rel (%p1000) target = $region56
        $region55: #{decoder_forward.1} parent=27 // pred_region
          %p1003 = scmp.lt.s32.totalorder %s82, 1
          %s1004 = scalar_select %p1003, %s82, 1
          %s1005 = scalar_lea.vmem %s15, %s1004
        $region56: #{decoder_forward.1} parent=27 // pred_fallthru
          _
        // Predicated region
        $region57: #{decoder_forward.1} parent=27 // pred_check
          %p1006 = pneg %p309
        $region58: #{decoder_forward.1} parent=27 // pred_check_branch
          %1008 = sbr.rel (%p1006) target = $region60
        $region59: #{decoder_forward.1} parent=27 // pred_region
          %p1009 = scmp.lt.s32.totalorder %s82, 1
          %s1010 = scalar_select %p1009, %s82, 1
          %s1011 = smul.addr %s1010, 4
          %s1012 = smul.addr %s1011, 4
          %s1013 = scalar_lea.vmem %s17, %s1012
        $region60: #{decoder_forward.1} parent=27 // pred_fallthru
          _
        // Predicated region
        $region61: #{decoder_forward.1} parent=27 // pred_check
          %p1014 = pneg %p335
        $region62: #{decoder_forward.1} parent=27 // pred_check_branch
          %1016 = sbr.rel (%p1014) target = $region64
        $region63: #{decoder_forward.1} parent=27 // pred_region
          %p1017 = scmp.lt.s32.totalorder %s82, 1
          %s1018 = scalar_select %p1017, %s82, 1
          %s1019 = scalar_lea.vmem %s19, %s1018
        $region64: #{decoder_forward.1} parent=27 // pred_fallthru
          _
        // Predicated region
        $region65: #{decoder_forward.1} parent=27 // pred_check
          %p1020 = pneg %p361
        $region66: #{decoder_forward.1} parent=27 // pred_check_branch
          %1022 = sbr.rel (%p1020) target = $region68
        $region67: #{decoder_forward.1} parent=27 // pred_region
          %p1023 = scmp.lt.s32.totalorder %s82, 1
          %s1024 = scalar_select %p1023, %s82, 1
          %s1025 = smul.addr %s1024, 4
          %s1026 = smul.addr %s1025, 4
          %s1027 = scalar_lea.vmem %s21, %s1026
        $region68: #{decoder_forward.1} parent=27 // pred_fallthru
          _
        // Predicated region
        $region69: #{decoder_forward.1} parent=27 // pred_check
          %p1028 = pneg %p387
        $region70: #{decoder_forward.1} parent=27 // pred_check_branch
          %1030 = sbr.rel (%p1028) target = $region72
        $region71: #{decoder_forward.1} parent=27 // pred_region
          %p1031 = scmp.lt.s32.totalorder %s82, 1
          %s1032 = scalar_select %p1031, %s82, 1
          %s1033 = scalar_lea.vmem %s23, %s1032
        $region72: #{decoder_forward.1} parent=27 // pred_fallthru
          _
        // Predicated region
        $region73: #{decoder_forward.1} parent=27 // pred_check
          %p1034 = pneg %p413
        $region74: #{decoder_forward.1} parent=27 // pred_check_branch
          %1036 = sbr.rel (%p1034) target = $region76
        $region75: #{decoder_forward.1} parent=27 // pred_region
          %p1037 = scmp.lt.s32.totalorder %s82, 1
          %s1038 = scalar_select %p1037, %s82, 1
          %s1039 = smul.addr %s1038, 4
          %s1040 = smul.addr %s1039, 4
          %s1041 = scalar_lea.vmem %s25, %s1040
        $region76: #{decoder_forward.1} parent=27 // pred_fallthru
          _
        // Predicated region
        $region77: #{decoder_forward.1} parent=27 // pred_check
          %p1042 = pneg %p439
        $region78: #{decoder_forward.1} parent=27 // pred_check_branch
          %1044 = sbr.rel (%p1042) target = $region80
        $region79: #{decoder_forward.1} parent=27 // pred_region
          %p1045 = scmp.lt.s32.totalorder %s82, 1
          %s1046 = scalar_select %p1045, %s82, 1
          %s1047 = scalar_lea.vmem %s27, %s1046
        $region80: #{decoder_forward.1} parent=27 // pred_fallthru
          _
        // Predicated region
        $region81: #{decoder_forward.1} parent=27 // pred_check
          %p1048 = pneg %p465
        $region82: #{decoder_forward.1} parent=27 // pred_check_branch
          %1050 = sbr.rel (%p1048) target = $region84
        $region83: #{decoder_forward.1} parent=27 // pred_region
          %p1051 = scmp.lt.s32.totalorder %s82, 1
          %s1052 = scalar_select %p1051, %s82, 1
          %s1053 = smul.addr %s1052, 4
          %s1054 = smul.addr %s1053, 4
          %s1055 = scalar_lea.vmem %s29, %s1054
        $region84: #{decoder_forward.1} parent=27 // pred_fallthru
          _
        // Predicated region
        $region85: #{decoder_forward.1} parent=27 // pred_check
          %p1056 = pneg %p491
        $region86: #{decoder_forward.1} parent=27 // pred_check_branch
          %1058 = sbr.rel (%p1056) target = $region88
        $region87: #{decoder_forward.1} parent=27 // pred_region
          %p1059 = scmp.lt.s32.totalorder %s82, 1
          %s1060 = scalar_select %p1059, %s82, 1
          %s1061 = scalar_lea.vmem %s31, %s1060
        $region88: #{decoder_forward.1} parent=27 // pred_fallthru
          _
        // Predicated region
        $region89: #{decoder_forward.1} parent=27 // pred_check
          %p1062 = pneg %p517
        $region90: #{decoder_forward.1} parent=27 // pred_check_branch
          %1064 = sbr.rel (%p1062) target = $region92
        $region91: #{decoder_forward.1} parent=27 // pred_region
          %p1065 = scmp.lt.s32.totalorder %s82, 1
          %s1066 = scalar_select %p1065, %s82, 1
          %s1067 = smul.addr %s1066, 4
          %s1068 = smul.addr %s1067, 4
          %s1069 = scalar_lea.vmem %s33, %s1068
        $region92: #{decoder_forward.1} parent=27 // pred_fallthru
          _
        // Predicated region
        $region93: #{decoder_forward.1} parent=27 // pred_check
          %p1070 = pneg %p543
        $region94: #{decoder_forward.1} parent=27 // pred_check_branch
          %1072 = sbr.rel (%p1070) target = $region96
        $region95: #{decoder_forward.1} parent=27 // pred_region
          %p1073 = scmp.lt.s32.totalorder %s82, 1
          %s1074 = scalar_select %p1073, %s82, 1
          %s1075 = scalar_lea.vmem %s35, %s1074
        $region96: #{decoder_forward.1} parent=27 // pred_fallthru
          _
        // Predicated region
        $region97: #{decoder_forward.1} parent=27 // pred_check
          %p1076 = pneg %p569
        $region98: #{decoder_forward.1} parent=27 // pred_check_branch
          %1078 = sbr.rel (%p1076) target = $region100
        $region99: #{decoder_forward.1} parent=27 // pred_region
          %p1079 = scmp.lt.s32.totalorder %s82, 1
          %s1080 = scalar_select %p1079, %s82, 1
          %s1081 = smul.addr %s1080, 4
          %s1082 = smul.addr %s1081, 4
          %s1083 = scalar_lea.vmem %s37, %s1082
        $region100: #{decoder_forward.1} parent=27 // pred_fallthru
          _
        // Predicated region
        $region101: #{decoder_forward.1} parent=27 // pred_check
          %p1084 = pneg %p595
        $region102: #{decoder_forward.1} parent=27 // pred_check_branch
          %1086 = sbr.rel (%p1084) target = $region104
        $region103: #{decoder_forward.1} parent=27 // pred_region
          %p1087 = scmp.lt.s32.totalorder %s82, 1
          %s1088 = scalar_select %p1087, %s82, 1
          %s1089 = scalar_lea.vmem %s39, %s1088
        $region104: #{decoder_forward.1} parent=27 // pred_fallthru
          _
        // Predicated region
        $region105: #{decoder_forward.1} parent=27 // pred_check
          %p1090 = pneg %p621
        $region106: #{decoder_forward.1} parent=27 // pred_check_branch
          %1092 = sbr.rel (%p1090) target = $region108
        $region107: #{decoder_forward.1} parent=27 // pred_region
          %p1093 = scmp.lt.s32.totalorder %s82, 1
          %s1094 = scalar_select %p1093, %s82, 1
          %s1095 = smul.addr %s1094, 4
          %s1096 = smul.addr %s1095, 4
          %s1097 = scalar_lea.vmem %s41, %s1096
        $region108: #{decoder_forward.1} parent=27 // pred_fallthru
          _
        // Predicated region
        $region109: #{decoder_forward.1} parent=27 // pred_check
          %p1098 = pneg %p647
        $region110: #{decoder_forward.1} parent=27 // pred_check_branch
          %1100 = sbr.rel (%p1098) target = $region112
        $region111: #{decoder_forward.1} parent=27 // pred_region
          %p1101 = scmp.lt.s32.totalorder %s82, 1
          %s1102 = scalar_select %p1101, %s82, 1
          %s1103 = scalar_lea.vmem %s43, %s1102
        $region112: #{decoder_forward.1} parent=27 // pred_fallthru
          _
        // Predicated region
        $region113: #{decoder_forward.1} parent=27 // pred_check
          %p1104 = pneg %p673
        $region114: #{decoder_forward.1} parent=27 // pred_check_branch
          %1106 = sbr.rel (%p1104) target = $region116
        $region115: #{decoder_forward.1} parent=27 // pred_region
          %p1107 = scmp.lt.s32.totalorder %s82, 1
          %s1108 = scalar_select %p1107, %s82, 1
          %s1109 = smul.addr %s1108, 8
          %s1110 = smul.addr %s1109, 4
          %s1111 = scalar_lea.vmem %s45, %s1110
        $region116: #{decoder_forward.1} parent=27 // pred_fallthru
          _
        // Predicated region
        $region117: #{decoder_forward.1} parent=27 // pred_check
          %p1112 = pneg %p699
        $region118: #{decoder_forward.1} parent=27 // pred_check_branch
          %1114 = sbr.rel (%p1112) target = $region120
        $region119: #{decoder_forward.1} parent=27 // pred_region
          %p1115 = scmp.lt.s32.totalorder %s82, 1
          %s1116 = scalar_select %p1115, %s82, 1
          %s1117 = scalar_lea.vmem %s47, %s1116
        $region120: #{decoder_forward.1} parent=27 // pred_fallthru
          _
        // Predicated region
        $region121: #{decoder_forward.1} parent=27 // pred_check
          %p1118 = pneg %p725
        $region122: #{decoder_forward.1} parent=27 // pred_check_branch
          %1120 = sbr.rel (%p1118) target = $region124
        $region123: #{decoder_forward.1} parent=27 // pred_region
          %p1121 = scmp.lt.s32.totalorder %s82, 1
          %s1122 = scalar_select %p1121, %s82, 1
          %s1123 = scalar_lea.vmem %s49, %s1122
        $region124: #{decoder_forward.1} parent=27 // pred_fallthru
          _
        // Predicated region
        $region125: #{decoder_forward.1} parent=27 // pred_check
          %p1124 = pneg %p751
        $region126: #{decoder_forward.1} parent=27 // pred_check_branch
          %1126 = sbr.rel (%p1124) target = $region128
        $region127: #{decoder_forward.1} parent=27 // pred_region
          %p1127 = scmp.lt.s32.totalorder %s82, 1
          %s1128 = scalar_select %p1127, %s82, 1
          %s1129 = scalar_lea.vmem %s51, %s1128
        $region128: #{decoder_forward.1} parent=27 // pred_fallthru
          _
        // Predicated region
        $region129: #{decoder_forward.1} parent=27 // pred_check
          %p1130 = pneg %p777
        $region130: #{decoder_forward.1} parent=27 // pred_check_branch
          %1132 = sbr.rel (%p1130) target = $region132
        $region131: #{decoder_forward.1} parent=27 // pred_region
          %p1133 = scmp.lt.s32.totalorder %s82, 1
          %s1134 = scalar_select %p1133, %s82, 1
          %s1135 = scalar_lea.vmem %s53, %s1134
        $region132: #{decoder_forward.1} parent=27 // pred_fallthru
          _
        // Predicated region
        $region133: #{decoder_forward.1} parent=27 // pred_check
          %p1136 = pneg %p803
        $region134: #{decoder_forward.1} parent=27 // pred_check_branch
          %1138 = sbr.rel (%p1136) target = $region136
        $region135: #{decoder_forward.1} parent=27 // pred_region
          %p1139 = scmp.lt.s32.totalorder %s82, 1
          %s1140 = scalar_select %p1139, %s82, 1
          %s1141 = scalar_lea.vmem %s55, %s1140
        $region136: #{decoder_forward.1} parent=27 // pred_fallthru
          _
        // Predicated region
        $region137: #{decoder_forward.1} parent=27 // pred_check
          %p1142 = pneg %p829
        $region138: #{decoder_forward.1} parent=27 // pred_check_branch
          %1144 = sbr.rel (%p1142) target = $region140
        $region139: #{decoder_forward.1} parent=27 // pred_region
          %p1145 = scmp.lt.s32.totalorder %s82, 1
          %s1146 = scalar_select %p1145, %s82, 1
          %s1147 = scalar_lea.vmem %s57, %s1146
        $region140: #{decoder_forward.1} parent=27 // pred_fallthru
          _
        // Predicated region
        $region141: #{decoder_forward.1} parent=27 // pred_check
          %p1148 = pneg %p855
        $region142: #{decoder_forward.1} parent=27 // pred_check_branch
          %1150 = sbr.rel (%p1148) target = $region144
        $region143: #{decoder_forward.1} parent=27 // pred_region
          %p1151 = scmp.lt.s32.totalorder %s82, 1
          %s1152 = scalar_select %p1151, %s82, 1
          %s1153 = scalar_lea.vmem %s59, %s1152
        $region144: #{decoder_forward.1} parent=27 // pred_fallthru
          _
      $region28: #{decoder_forward.1} parent=5 // pred_fallthru
        _
      %p1154 = scmp.le.s32.totalorder 1, %s74
      %p1155 = scmp.lt.s32.totalorder %s74, 5
      %p1156 = pnand %p1154, %p1155
      %p1157 = pneg %p1156
      // Predicated region
      $region145: #{decoder_forward.1} parent=5 // pred_check
        _
      $region146: #{decoder_forward.1} parent=5 // pred_check_branch
        %1159 = sbr.rel (%p1156) target = $region148
      $region147: #{decoder_forward.1} parent=5 // pred_region
        %s1160 = ssub.s32 %s74, 1
        %p1161 = scmp.lt.s32.totalorder %s83, 1
        %s1162 = scalar_select %p1161, %s83, 1
        %s1163 = smul.addr %s1162, 8
        %s1164 = scalar_lea.vmem %s1, %s1163
        %p1165 = pneg %p112
        %p1166 = pneg %p109
        %p1167 = scmp.lt.s32.totalorder %s83, 1
        %s1168 = scalar_select %p1167, %s83, 1
        %s1169 = smul.addr %s1168, 2
        %s1170 = smul.addr %s1169, 8
        %s1171 = scalar_lea.vmem %s3, %s1170
        %p1172 = pneg %p138
        %p1173 = pneg %p135
        %p1174 = scmp.lt.s32.totalorder %s83, 1
        %s1175 = scalar_select %p1174, %s83, 1
        %s1176 = scalar_lea.vmem %s5, %s1175
        %p1177 = pneg %p164
        %p1178 = pneg %p161
        %p1179 = pneg %p185
        %p1180 = pneg %p182
        %p1181 = scmp.lt.s32.totalorder %s84, 1
        %s1182 = scalar_select %p1181, %s84, 1
        %s1183 = smul.addr %s1182, 4
        %s1184 = smul.addr %s1183, 4
        %s1185 = scalar_lea.vmem %s9, %s1184
        %p1186 = pneg %p211
        %p1187 = pneg %p208
        %p1188 = scmp.lt.s32.totalorder %s84, 1
        %s1189 = scalar_select %p1188, %s84, 1
        %s1190 = scalar_lea.vmem %s11, %s1189
        %p1191 = pneg %p237
        %p1192 = pneg %p234
        %p1193 = scmp.lt.s32.totalorder %s84, 1
        %s1194 = scalar_select %p1193, %s84, 1
        %s1195 = smul.addr %s1194, 4
        %s1196 = smul.addr %s1195, 4
        %s1197 = scalar_lea.vmem %s13, %s1196
        %p1198 = pneg %p263
        %p1199 = pneg %p260
        %p1200 = scmp.lt.s32.totalorder %s84, 1
        %s1201 = scalar_select %p1200, %s84, 1
        %s1202 = scalar_lea.vmem %s15, %s1201
        %p1203 = pneg %p289
        %p1204 = pneg %p286
        %p1205 = scmp.lt.s32.totalorder %s84, 1
        %s1206 = scalar_select %p1205, %s84, 1
        %s1207 = smul.addr %s1206, 4
        %s1208 = smul.addr %s1207, 4
        %s1209 = scalar_lea.vmem %s17, %s1208
        %p1210 = pneg %p315
        %p1211 = pneg %p312
        %p1212 = scmp.lt.s32.totalorder %s84, 1
        %s1213 = scalar_select %p1212, %s84, 1
        %s1214 = scalar_lea.vmem %s19, %s1213
        %p1215 = pneg %p341
        %p1216 = pneg %p338
        %p1217 = scmp.lt.s32.totalorder %s84, 1
        %s1218 = scalar_select %p1217, %s84, 1
        %s1219 = smul.addr %s1218, 4
        %s1220 = smul.addr %s1219, 4
        %s1221 = scalar_lea.vmem %s21, %s1220
        %p1222 = pneg %p367
        %p1223 = pneg %p364
        %p1224 = scmp.lt.s32.totalorder %s84, 1
        %s1225 = scalar_select %p1224, %s84, 1
        %s1226 = scalar_lea.vmem %s23, %s1225
        %p1227 = pneg %p393
        %p1228 = pneg %p390
        %p1229 = scmp.lt.s32.totalorder %s84, 1
        %s1230 = scalar_select %p1229, %s84, 1
        %s1231 = smul.addr %s1230, 4
        %s1232 = smul.addr %s1231, 4
        %s1233 = scalar_lea.vmem %s25, %s1232
        %p1234 = pneg %p419
        %p1235 = pneg %p416
        %p1236 = scmp.lt.s32.totalorder %s84, 1
        %s1237 = scalar_select %p1236, %s84, 1
        %s1238 = scalar_lea.vmem %s27, %s1237
        %p1239 = pneg %p445
        %p1240 = pneg %p442
        %p1241 = scmp.lt.s32.totalorder %s84, 1
        %s1242 = scalar_select %p1241, %s84, 1
        %s1243 = smul.addr %s1242, 4
        %s1244 = smul.addr %s1243, 4
        %s1245 = scalar_lea.vmem %s29, %s1244
        %p1246 = pneg %p471
        %p1247 = pneg %p468
        %p1248 = scmp.lt.s32.totalorder %s84, 1
        %s1249 = scalar_select %p1248, %s84, 1
        %s1250 = scalar_lea.vmem %s31, %s1249
        %p1251 = pneg %p497
        %p1252 = pneg %p494
        %p1253 = scmp.lt.s32.totalorder %s84, 1
        %s1254 = scalar_select %p1253, %s84, 1
        %s1255 = smul.addr %s1254, 4
        %s1256 = smul.addr %s1255, 4
        %s1257 = scalar_lea.vmem %s33, %s1256
        %p1258 = pneg %p523
        %p1259 = pneg %p520
        %p1260 = scmp.lt.s32.totalorder %s84, 1
        %s1261 = scalar_select %p1260, %s84, 1
        %s1262 = scalar_lea.vmem %s35, %s1261
        %p1263 = pneg %p549
        %p1264 = pneg %p546
        %p1265 = scmp.lt.s32.totalorder %s84, 1
        %s1266 = scalar_select %p1265, %s84, 1
        %s1267 = smul.addr %s1266, 4
        %s1268 = smul.addr %s1267, 4
        %s1269 = scalar_lea.vmem %s37, %s1268
        %p1270 = pneg %p575
        %p1271 = pneg %p572
        %p1272 = scmp.lt.s32.totalorder %s84, 1
        %s1273 = scalar_select %p1272, %s84, 1
        %s1274 = scalar_lea.vmem %s39, %s1273
        %p1275 = pneg %p601
        %p1276 = pneg %p598
        %p1277 = scmp.lt.s32.totalorder %s84, 1
        %s1278 = scalar_select %p1277, %s84, 1
        %s1279 = smul.addr %s1278, 4
        %s1280 = smul.addr %s1279, 4
        %s1281 = scalar_lea.vmem %s41, %s1280
        %p1282 = pneg %p627
        %p1283 = pneg %p624
        %p1284 = scmp.lt.s32.totalorder %s84, 1
        %s1285 = scalar_select %p1284, %s84, 1
        %s1286 = scalar_lea.vmem %s43, %s1285
        %p1287 = pneg %p653
        %p1288 = pneg %p650
        %p1289 = scmp.lt.s32.totalorder %s84, 1
        %s1290 = scalar_select %p1289, %s84, 1
        %s1291 = smul.addr %s1290, 8
        %s1292 = smul.addr %s1291, 4
        %s1293 = scalar_lea.vmem %s45, %s1292
        %p1294 = pneg %p679
        %p1295 = pneg %p676
        %p1296 = scmp.lt.s32.totalorder %s84, 1
        %s1297 = scalar_select %p1296, %s84, 1
        %s1298 = scalar_lea.vmem %s47, %s1297
        %p1299 = pneg %p705
        %p1300 = pneg %p702
        %p1301 = scmp.lt.s32.totalorder %s84, 1
        %s1302 = scalar_select %p1301, %s84, 1
        %s1303 = scalar_lea.vmem %s49, %s1302
        %p1304 = pneg %p731
        %p1305 = pneg %p728
        %p1306 = scmp.lt.s32.totalorder %s84, 1
        %s1307 = scalar_select %p1306, %s84, 1
        %s1308 = scalar_lea.vmem %s51, %s1307
        %p1309 = pneg %p757
        %p1310 = pneg %p754
        %p1311 = scmp.lt.s32.totalorder %s84, 1
        %s1312 = scalar_select %p1311, %s84, 1
        %s1313 = scalar_lea.vmem %s53, %s1312
        %p1314 = pneg %p783
        %p1315 = pneg %p780
        %p1316 = scmp.lt.s32.totalorder %s84, 1
        %s1317 = scalar_select %p1316, %s84, 1
        %s1318 = scalar_lea.vmem %s55, %s1317
        %p1319 = pneg %p809
        %p1320 = pneg %p806
        %p1321 = scmp.lt.s32.totalorder %s84, 1
        %s1322 = scalar_select %p1321, %s84, 1
        %s1323 = scalar_lea.vmem %s57, %s1322
        %p1324 = pneg %p835
        %p1325 = pneg %p832
        %p1326 = scmp.lt.s32.totalorder %s84, 1
        %s1327 = scalar_select %p1326, %s84, 1
        %s1328 = scalar_lea.vmem %s59, %s1327
        %p1329 = pneg %p861
        %p1330 = pneg %p858
        %p1331 = pneg %p882
        %p1332 = pneg %p879
        %p1333 = pneg %p903
        %p1334 = pneg %p900
        %p1335 = pneg %p929
        %p1336 = pneg %p926
        %s1337 = sand.u32 %s916, 1
        %s1338 = scalar_lea.sflag [#allocation4], %s1337
        %s1339 = sand.u32 %s916, 1
        %s1340 = smul.addr %s1339, 8
        %s1341 = scalar_lea.vmem [#allocation3], %s1340
        %p1342 = scmp.lt.s32.totalorder %s83, 1
        %s1343 = scalar_select %p1342, %s83, 1
        %s1344 = smul.addr %s1343, 8
        %s1345 = scalar_lea.vmem %s1, %s1344
        %p1346 = scmp.lt.s32.totalorder %s83, 1
        %s1347 = scalar_select %p1346, %s83, 1
        %s1348 = smul.addr %s1347, 2
        %s1349 = smul.addr %s1348, 8
        %s1350 = scalar_lea.vmem %s3, %s1349
        %p1351 = scmp.lt.s32.totalorder %s83, 1
        %s1352 = scalar_select %p1351, %s83, 1
        %s1353 = scalar_lea.vmem %s5, %s1352
        %p1354 = scmp.lt.s32.totalorder %s84, 1
        %s1355 = scalar_select %p1354, %s84, 1
        %s1356 = smul.addr %s1355, 4
        %s1357 = smul.addr %s1356, 4
        %s1358 = scalar_lea.vmem %s9, %s1357
        %p1359 = scmp.lt.s32.totalorder %s84, 1
        %s1360 = scalar_select %p1359, %s84, 1
        %s1361 = scalar_lea.vmem %s11, %s1360
        %p1362 = scmp.lt.s32.totalorder %s84, 1
        %s1363 = scalar_select %p1362, %s84, 1
        %s1364 = smul.addr %s1363, 4
        %s1365 = smul.addr %s1364, 4
        %s1366 = scalar_lea.vmem %s13, %s1365
        %p1367 = scmp.lt.s32.totalorder %s84, 1
        %s1368 = scalar_select %p1367, %s84, 1
        %s1369 = scalar_lea.vmem %s15, %s1368
        %p1370 = scmp.lt.s32.totalorder %s84, 1
        %s1371 = scalar_select %p1370, %s84, 1
        %s1372 = smul.addr %s1371, 4
        %s1373 = smul.addr %s1372, 4
        %s1374 = scalar_lea.vmem %s17, %s1373
        %p1375 = scmp.lt.s32.totalorder %s84, 1
        %s1376 = scalar_select %p1375, %s84, 1
        %s1377 = scalar_lea.vmem %s19, %s1376
        %p1378 = scmp.lt.s32.totalorder %s84, 1
        %s1379 = scalar_select %p1378, %s84, 1
        %s1380 = smul.addr %s1379, 4
        %s1381 = smul.addr %s1380, 4
        %s1382 = scalar_lea.vmem %s21, %s1381
        %p1383 = scmp.lt.s32.totalorder %s84, 1
        %s1384 = scalar_select %p1383, %s84, 1
        %s1385 = scalar_lea.vmem %s23, %s1384
        %p1386 = scmp.lt.s32.totalorder %s84, 1
        %s1387 = scalar_select %p1386, %s84, 1
        %s1388 = smul.addr %s1387, 4
        %s1389 = smul.addr %s1388, 4
        %s1390 = scalar_lea.vmem %s25, %s1389
        %p1391 = scmp.lt.s32.totalorder %s84, 1
        %s1392 = scalar_select %p1391, %s84, 1
        %s1393 = scalar_lea.vmem %s27, %s1392
        %p1394 = scmp.lt.s32.totalorder %s84, 1
        %s1395 = scalar_select %p1394, %s84, 1
        %s1396 = smul.addr %s1395, 4
        %s1397 = smul.addr %s1396, 4
        %s1398 = scalar_lea.vmem %s29, %s1397
        %p1399 = scmp.lt.s32.totalorder %s84, 1
        %s1400 = scalar_select %p1399, %s84, 1
        %s1401 = scalar_lea.vmem %s31, %s1400
        %p1402 = scmp.lt.s32.totalorder %s84, 1
        %s1403 = scalar_select %p1402, %s84, 1
        %s1404 = smul.addr %s1403, 4
        %s1405 = smul.addr %s1404, 4
        %s1406 = scalar_lea.vmem %s33, %s1405
        %p1407 = scmp.lt.s32.totalorder %s84, 1
        %s1408 = scalar_select %p1407, %s84, 1
        %s1409 = scalar_lea.vmem %s35, %s1408
        %p1410 = scmp.lt.s32.totalorder %s84, 1
        %s1411 = scalar_select %p1410, %s84, 1
        %s1412 = smul.addr %s1411, 4
        %s1413 = smul.addr %s1412, 4
        %s1414 = scalar_lea.vmem %s37, %s1413
        %p1415 = scmp.lt.s32.totalorder %s84, 1
        %s1416 = scalar_select %p1415, %s84, 1
        %s1417 = scalar_lea.vmem %s39, %s1416
        %p1418 = scmp.lt.s32.totalorder %s84, 1
        %s1419 = scalar_select %p1418, %s84, 1
        %s1420 = smul.addr %s1419, 4
        %s1421 = smul.addr %s1420, 4
        %s1422 = scalar_lea.vmem %s41, %s1421
        %p1423 = scmp.lt.s32.totalorder %s84, 1
        %s1424 = scalar_select %p1423, %s84, 1
        %s1425 = scalar_lea.vmem %s43, %s1424
        %p1426 = scmp.lt.s32.totalorder %s84, 1
        %s1427 = scalar_select %p1426, %s84, 1
        %s1428 = smul.addr %s1427, 8
        %s1429 = smul.addr %s1428, 4
        %s1430 = scalar_lea.vmem %s45, %s1429
        %p1431 = scmp.lt.s32.totalorder %s84, 1
        %s1432 = scalar_select %p1431, %s84, 1
        %s1433 = scalar_lea.vmem %s47, %s1432
        %p1434 = scmp.lt.s32.totalorder %s84, 1
        %s1435 = scalar_select %p1434, %s84, 1
        %s1436 = scalar_lea.vmem %s49, %s1435
        %p1437 = scmp.lt.s32.totalorder %s84, 1
        %s1438 = scalar_select %p1437, %s84, 1
        %s1439 = scalar_lea.vmem %s51, %s1438
        %p1440 = scmp.lt.s32.totalorder %s84, 1
        %s1441 = scalar_select %p1440, %s84, 1
        %s1442 = scalar_lea.vmem %s53, %s1441
        %p1443 = scmp.lt.s32.totalorder %s84, 1
        %s1444 = scalar_select %p1443, %s84, 1
        %s1445 = scalar_lea.vmem %s55, %s1444
        %p1446 = scmp.lt.s32.totalorder %s84, 1
        %s1447 = scalar_select %p1446, %s84, 1
        %s1448 = scalar_lea.vmem %s57, %s1447
        %p1449 = scmp.lt.s32.totalorder %s84, 1
        %s1450 = scalar_select %p1449, %s84, 1
        %s1451 = scalar_lea.vmem %s59, %s1450
        %p1453 = scmp.eq.s32.totalorder %s84, 0
        // Predicated region
        $region149: #{decoder_forward.1} parent=147 // pred_check
          %p1454 = pneg %p1453
        $region150: #{decoder_forward.1} parent=147 // pred_check_branch
          %1456 = sbr.rel (%p1454) target = $region152
        $region151: #{decoder_forward.1} parent=147 // pred_region
          %v1457 = vld [vmem:[%s1345] sm:$0xff]
          %vm1458 = vcmask 261120
          %1459 = vst.msk [vmem:[#allocation2] sm:$0xff] %vm1458, %v1457
        $region152: #{decoder_forward.1} parent=147 // pred_fallthru
          _
        %v1460 = vld [vmem:[#allocation2] sm:$0xff]
        %v1461 = vld [vmem:[%s1350] sm:$0xff]
        %v1462 = vld [vmem:[%s1350 + $0x8] sm:$0xf]
        %v1463 = vld [vmem:[%s1353] sm:$0x1]
        %v1464 = vld [vmem:[%s7] sm:$0xff]
        %v1465 = vld [vmem:[%s1436] sm:$0x1]
        %v1466 = vld [vmem:[%s1439] sm:$0x1]
        %vm1467 = vcmask 261120
        %v1468 = vsel %vm1467, %v1460, 0.0
        %1469 = vadd.xlane.f32.xlu0 %v1468
        %v1470 = vpop.xlane.xlu0 %1469
        %v1471 = vrcp.pop 32.0
        %v1472 = vmul.f32 32.0, %v1471
        %v1473 = vsub.f32 1.0, %v1472
        %v1474 = vmul.f32 %v1471, %v1473
        %v1475 = vadd.f32 %v1471, %v1474
        %vm1476 = vweird.f32 %v1471
        %v1477 = vsel %vm1476, %v1471, %v1475
        %v1478 = vmul.f32 %v1470, %v1477
        %v1479 = vsub.f32 %v1460, %v1478
        %v1480 = vmul.f32 %v1479, %v1479
        %v1481 = vsel %vm1467, %v1480, 0.0
        %1482 = vadd.xlane.f32.xlu0 %v1481
        %v1483 = vpop.xlane.xlu0 %1482
        %v1484 = vmul.f32 %v1483, 0.032258064
        %v1485 = vrsqrt.pop %v1484
        %v1486 = vmul.f32 %v1485, %v1484
        %v1487 = vmul.f32 %v1486, %v1485
        %v1488 = vmul.f32 0.5, %v1487
        %v1489 = vsub.f32 1.5, %v1488
        %v1490 = vmul.f32 %v1485, %v1489
        %v1491 = vmul.f32 %v1484, %v1490
        %vm1492 = vcmp.eq.f32.partialorder %v1484, inf
        %v1493 = vsel %vm1492, %v1484, %v1491
        %vm1494 = vcmp.eq.f32.partialorder %v1484, 0.0
        %v1495 = vand.u32 %v1484, 2147483648
        %v1496 = vsel %vm1494, %v1495, %v1493
        %v1497 = vadd.f32 %v1496, 1e-06
        %v1498 = vrcp.pop %v1497
        %v1500 = vperm.slane %v1465, 0
        %v1502 = vmul.f32 %v1500, %v1479
        %v1503 = vmul.f32 %v1502, %v1498
        %v1505 = vperm.slane %v1466, 0
        %v1507 = vadd.f32 %v1503, %v1505
        %v1508 = vld [vmem:[%s1358] sm:$0xf]
        %v1509 = vld [vmem:[%s1358 + $0x4] sm:$0xf]
        %v1510 = vld [vmem:[%s1358 + $0x8] sm:$0xf]
        %v1511 = vld [vmem:[%s1358 + $0xc] sm:$0xf]
        %v1512 = vld [vmem:[%s1361] sm:$0x1]
        %v1513 = vld [vmem:[%s1366] sm:$0xf]
        %v1514 = vld [vmem:[%s1366 + $0x4] sm:$0xf]
        %v1515 = vld [vmem:[%s1366 + $0x8] sm:$0xf]
        %v1516 = vld [vmem:[%s1366 + $0xc] sm:$0xf]
        %v1517 = vld [vmem:[%s1369] sm:$0x1]
        %v1518 = vld [vmem:[%s1374] sm:$0xf]
        %v1519 = vld [vmem:[%s1374 + $0x4] sm:$0xf]
        %v1520 = vld [vmem:[%s1374 + $0x8] sm:$0xf]
        %v1521 = vld [vmem:[%s1374 + $0xc] sm:$0xf]
        %v1522 = vld [vmem:[%s1377] sm:$0x1]
        %v1523 = vld [vmem:[%s1382] sm:$0xf]
        %v1524 = vld [vmem:[%s1382 + $0x4] sm:$0xf]
        %v1525 = vld [vmem:[%s1382 + $0x8] sm:$0xf]
        %v1526 = vld [vmem:[%s1382 + $0xc] sm:$0xf]
        %v1527 = vld [vmem:[%s1385] sm:$0x1]
        %v1528 = vpack.c.bf16 %v1507, %v1507
        %v1530 = vperm.slane %v1512, 0
        %v1536 = vunpack.c.l.b16 %v1508
        %v1537 = vunpack.c.l.b16 %v1509
        %v1538 = vunpack.c.l.b16 %v1510
        %v1539 = vunpack.c.l.b16 %v1511
        %v1540 = vpack.c.b16 %v1537, %v1536
        %v1541 = vpack.c.b16 %v1539, %v1538
        %v1545 = vsel %vm1467, %v1528, 0
        %1547 = vmatpush.bf16.msra.mxu0 0
        %1548 = vmatpush.bf16.msra.mxu0 0
        %1549 = vmatpush.bf16.msra.mxu0 0
        %1550 = vmatpush.bf16.msra.mxu0 0
        %1551 = vmatpush.bf16.msra.mxu0 0
        %1552 = vmatpush.bf16.msra.mxu0 0
        %1553 = vmatpush.bf16.msra.mxu0 %v1541
        %1554 = vmatpush.bf16.msra.mxu0 %v1540
        %1555 = vmatmul.bf16.gmra.mxu0 %v1545
        %v1556 = vpop.f32.mrf.mxu0
        %v1557 = vadd.f32 %v1530, %v1556
        %v1558 = vpop.f32.mrf.mxu0
        %1559 = vdwg.mxu0
        %v1561 = vperm.slane %v1517, 0
        %v1567 = vunpack.c.l.b16 %v1513
        %v1568 = vunpack.c.l.b16 %v1514
        %v1569 = vunpack.c.l.b16 %v1515
        %v1570 = vunpack.c.l.b16 %v1516
        %v1571 = vpack.c.b16 %v1568, %v1567
        %v1572 = vpack.c.b16 %v1570, %v1569
        %1575 = vmatpush.bf16.msra.mxu0 0
        %1576 = vmatpush.bf16.msra.mxu0 0
        %1577 = vmatpush.bf16.msra.mxu0 0
        %1578 = vmatpush.bf16.msra.mxu0 0
        %1579 = vmatpush.bf16.msra.mxu0 0
        %1580 = vmatpush.bf16.msra.mxu0 0
        %1581 = vmatpush.bf16.msra.mxu0 %v1572
        %1582 = vmatpush.bf16.msra.mxu0 %v1571
        %1583 = vmatmul.bf16.gmra.mxu0 %v1545
        %v1584 = vpop.f32.mrf.mxu0
        %v1585 = vadd.f32 %v1561, %v1584
        %v1586 = vpop.f32.mrf.mxu0
        %1587 = vdwg.mxu0
        %v1589 = vperm.slane %v1522, 0
        %v1595 = vunpack.c.l.b16 %v1518
        %v1596 = vunpack.c.l.b16 %v1519
        %v1597 = vunpack.c.l.b16 %v1520
        %v1598 = vunpack.c.l.b16 %v1521
        %v1599 = vpack.c.b16 %v1596, %v1595
        %v1600 = vpack.c.b16 %v1598, %v1597
        %1603 = vmatpush.bf16.msra.mxu0 0
        %1604 = vmatpush.bf16.msra.mxu0 0
        %1605 = vmatpush.bf16.msra.mxu0 0
        %1606 = vmatpush.bf16.msra.mxu0 0
        %1607 = vmatpush.bf16.msra.mxu0 0
        %1608 = vmatpush.bf16.msra.mxu0 0
        %1609 = vmatpush.bf16.msra.mxu0 %v1600
        %1610 = vmatpush.bf16.msra.mxu0 %v1599
        %1611 = vmatmul.bf16.gmra.mxu0 %v1545
        %v1612 = vpop.f32.mrf.mxu0
        %v1613 = vadd.f32 %v1589, %v1612
        %v1614 = vpop.f32.mrf.mxu0
        %1615 = vdwg.mxu0
        %1617 = vrot.lane.b32.xlu0 %v1557, 120
        %v1618 = vpop.permute.xlu0 %1617
        %1620 = vrot.lane.b32.xlu0 %v1557, 112
        %v1621 = vpop.permute.xlu0 %1620
        %1623 = vrot.lane.b32.xlu0 %v1557, 104
        %v1624 = vpop.permute.xlu0 %1623
        %v1626 = vrot.slane %v1621, 4
        %vm1627 = vcmask 1047556
        %v1628 = vsel %vm1627, %v1626, %v1557
        %v1629 = vrot.slane %v1557, 4
        %v1630 = vsel %vm1627, %v1621, %v1629
        %v1632 = vunpack.c.l.s4 1983009808
        %v1633 = vunpack.c.0.s8 %v1632
        %v1634 = vperm.slane %v1628, %v1633
        %v1636 = vunpack.c.l.s4 1983009808
        %v1637 = vunpack.c.0.s8 %v1636
        %v1638 = vperm.slane %v1630, %v1637
        %v1639 = vrot.slane %v1624, 4
        %v1640 = vsel %vm1627, %v1639, %v1618
        %v1641 = vrot.slane %v1618, 4
        %v1642 = vsel %vm1627, %v1624, %v1641
        %v1644 = vunpack.c.l.s4 1983009808
        %v1645 = vunpack.c.0.s8 %v1644
        %v1646 = vperm.slane %v1640, %v1645
        %v1648 = vunpack.c.l.s4 1983009808
        %v1649 = vunpack.c.0.s8 %v1648
        %v1650 = vperm.slane %v1642, %v1649
        %v1651 = vrot.slane %v1646, 4
        %v1652 = vsel %vm1627, %v1651, %v1634
        %v1653 = vrot.slane %v1634, 4
        %v1654 = vsel %vm1627, %v1646, %v1653
        %v1656 = vunpack.c.l.s4 1934713408
        %v1657 = vunpack.c.0.s8 %v1656
        %v1658 = vperm.slane %v1652, %v1657
        %v1660 = vunpack.c.l.s4 1934713408
        %v1661 = vunpack.c.0.s8 %v1660
        %v1662 = vperm.slane %v1654, %v1661
        %v1663 = vrot.slane %v1650, 4
        %v1664 = vsel %vm1627, %v1663, %v1638
        %v1665 = vrot.slane %v1638, 4
        %v1666 = vsel %vm1627, %v1650, %v1665
        %v1668 = vunpack.c.l.s4 1934713408
        %v1669 = vunpack.c.0.s8 %v1668
        %v1670 = vperm.slane %v1664, %v1669
        %v1672 = vunpack.c.l.s4 1934713408
        %v1673 = vunpack.c.0.s8 %v1672
        %v1674 = vperm.slane %v1666, %v1673
        %v1675 = vrot.slane %v1658, 4
        %v1676 = vsel %vm1627, 0.0, %v1675
        %v1677 = vrot.slane %v1662, 4
        %v1678 = vsel %vm1627, 0.0, %v1677
        %v1679 = vrot.slane %v1670, 4
        %v1680 = vsel %vm1627, 0.0, %v1679
        %v1681 = vrot.slane %v1674, 4
        %v1682 = vsel %vm1627, 0.0, %v1681
        %v1683 = vsel %vm1627, %v1677, %v1658
        %v1685 = vunpack.c.l.s4 1983009808
        %v1686 = vunpack.c.0.s8 %v1685
        %v1687 = vperm.slane %v1683, %v1686
        %v1688 = vrot.slane %v1678, 4
        %v1689 = vsel %vm1627, %v1688, %v1676
        %v1691 = vunpack.c.l.s4 1983009808
        %v1692 = vunpack.c.0.s8 %v1691
        %v1693 = vperm.slane %v1689, %v1692
        %v1694 = vsel %vm1627, %v1681, %v1670
        %v1696 = vunpack.c.l.s4 1983009808
        %v1697 = vunpack.c.0.s8 %v1696
        %v1698 = vperm.slane %v1694, %v1697
        %v1699 = vrot.slane %v1682, 4
        %v1700 = vsel %vm1627, %v1699, %v1680
        %v1702 = vunpack.c.l.s4 1983009808
        %v1703 = vunpack.c.0.s8 %v1702
        %v1704 = vperm.slane %v1700, %v1703
        %v1705 = vrot.slane %v1693, 4
        %v1706 = vsel %vm1627, %v1705, %v1687
        %v1707 = vrot.slane %v1687, 4
        %v1708 = vsel %vm1627, %v1693, %v1707
        %v1710 = vunpack.c.l.s4 1934713408
        %v1711 = vunpack.c.0.s8 %v1710
        %v1712 = vperm.slane %v1706, %v1711
        %v1714 = vunpack.c.l.s4 1934713408
        %v1715 = vunpack.c.0.s8 %v1714
        %v1716 = vperm.slane %v1708, %v1715
        %v1717 = vrot.slane %v1704, 4
        %v1718 = vsel %vm1627, %v1717, %v1698
        %v1719 = vrot.slane %v1698, 4
        %v1720 = vsel %vm1627, %v1704, %v1719
        %v1722 = vunpack.c.l.s4 1934713408
        %v1723 = vunpack.c.0.s8 %v1722
        %v1724 = vperm.slane %v1718, %v1723
        %v1726 = vunpack.c.l.s4 1934713408
        %v1727 = vunpack.c.0.s8 %v1726
        %v1728 = vperm.slane %v1720, %v1727
        %v1729 = vrot.slane %v1724, 4
        %v1730 = vsel %vm1627, %v1729, %v1712
        %v1731 = vrot.slane %v1712, 4
        %v1732 = vsel %vm1627, %v1724, %v1731
        %v1733 = vrot.slane %v1728, 4
        %v1734 = vsel %vm1627, %v1733, %v1716
        %v1735 = vrot.slane %v1716, 4
        %v1736 = vsel %vm1627, %v1728, %v1735
        %v1737 = vpack.c.bf16 %v1730, %v1730
        %v1738 = vpack.c.bf16 %v1732, %v1732
        %v1739 = vpack.c.bf16 %v1734, %v1734
        %v1740 = vpack.c.bf16 %v1736, %v1736
        %1742 = vrot.lane.b32.xlu0 %v1585, 120
        %v1743 = vpop.permute.xlu0 %1742
        %1745 = vrot.lane.b32.xlu0 %v1585, 112
        %v1746 = vpop.permute.xlu0 %1745
        %1748 = vrot.lane.b32.xlu0 %v1585, 104
        %v1749 = vpop.permute.xlu0 %1748
        %v1751 = vrot.slane %v1746, 4
        %v1752 = vsel %vm1627, %v1751, %v1585
        %v1753 = vrot.slane %v1585, 4
        %v1754 = vsel %vm1627, %v1746, %v1753
        %v1756 = vunpack.c.l.s4 1983009808
        %v1757 = vunpack.c.0.s8 %v1756
        %v1758 = vperm.slane %v1752, %v1757
        %v1760 = vunpack.c.l.s4 1983009808
        %v1761 = vunpack.c.0.s8 %v1760
        %v1762 = vperm.slane %v1754, %v1761
        %v1763 = vrot.slane %v1749, 4
        %v1764 = vsel %vm1627, %v1763, %v1743
        %v1765 = vrot.slane %v1743, 4
        %v1766 = vsel %vm1627, %v1749, %v1765
        %v1768 = vunpack.c.l.s4 1983009808
        %v1769 = vunpack.c.0.s8 %v1768
        %v1770 = vperm.slane %v1764, %v1769
        %v1772 = vunpack.c.l.s4 1983009808
        %v1773 = vunpack.c.0.s8 %v1772
        %v1774 = vperm.slane %v1766, %v1773
        %v1775 = vrot.slane %v1770, 4
        %v1776 = vsel %vm1627, %v1775, %v1758
        %v1777 = vrot.slane %v1758, 4
        %v1778 = vsel %vm1627, %v1770, %v1777
        %v1780 = vunpack.c.l.s4 1934713408
        %v1781 = vunpack.c.0.s8 %v1780
        %v1782 = vperm.slane %v1776, %v1781
        %v1784 = vunpack.c.l.s4 1934713408
        %v1785 = vunpack.c.0.s8 %v1784
        %v1786 = vperm.slane %v1778, %v1785
        %v1787 = vrot.slane %v1774, 4
        %v1788 = vsel %vm1627, %v1787, %v1762
        %v1789 = vrot.slane %v1762, 4
        %v1790 = vsel %vm1627, %v1774, %v1789
        %v1792 = vunpack.c.l.s4 1934713408
        %v1793 = vunpack.c.0.s8 %v1792
        %v1794 = vperm.slane %v1788, %v1793
        %v1796 = vunpack.c.l.s4 1934713408
        %v1797 = vunpack.c.0.s8 %v1796
        %v1798 = vperm.slane %v1790, %v1797
        %v1799 = vrot.slane %v1782, 4
        %v1800 = vsel %vm1627, 0.0, %v1799
        %v1801 = vrot.slane %v1786, 4
        %v1802 = vsel %vm1627, 0.0, %v1801
        %v1803 = vrot.slane %v1794, 4
        %v1804 = vsel %vm1627, 0.0, %v1803
        %v1805 = vrot.slane %v1798, 4
        %v1806 = vsel %vm1627, 0.0, %v1805
        %v1807 = vsel %vm1627, %v1801, %v1782
        %v1809 = vunpack.c.l.s4 1983009808
        %v1810 = vunpack.c.0.s8 %v1809
        %v1811 = vperm.slane %v1807, %v1810
        %v1812 = vrot.slane %v1802, 4
        %v1813 = vsel %vm1627, %v1812, %v1800
        %v1815 = vunpack.c.l.s4 1983009808
        %v1816 = vunpack.c.0.s8 %v1815
        %v1817 = vperm.slane %v1813, %v1816
        %v1818 = vsel %vm1627, %v1805, %v1794
        %v1820 = vunpack.c.l.s4 1983009808
        %v1821 = vunpack.c.0.s8 %v1820
        %v1822 = vperm.slane %v1818, %v1821
        %v1823 = vrot.slane %v1806, 4
        %v1824 = vsel %vm1627, %v1823, %v1804
        %v1826 = vunpack.c.l.s4 1983009808
        %v1827 = vunpack.c.0.s8 %v1826
        %v1828 = vperm.slane %v1824, %v1827
        %v1829 = vrot.slane %v1817, 4
        %v1830 = vsel %vm1627, %v1829, %v1811
        %v1831 = vrot.slane %v1811, 4
        %v1832 = vsel %vm1627, %v1817, %v1831
        %v1834 = vunpack.c.l.s4 1934713408
        %v1835 = vunpack.c.0.s8 %v1834
        %v1836 = vperm.slane %v1830, %v1835
        %v1838 = vunpack.c.l.s4 1934713408
        %v1839 = vunpack.c.0.s8 %v1838
        %v1840 = vperm.slane %v1832, %v1839
        %v1841 = vrot.slane %v1828, 4
        %v1842 = vsel %vm1627, %v1841, %v1822
        %v1843 = vrot.slane %v1822, 4
        %v1844 = vsel %vm1627, %v1828, %v1843
        %v1846 = vunpack.c.l.s4 1934713408
        %v1847 = vunpack.c.0.s8 %v1846
        %v1848 = vperm.slane %v1842, %v1847
        %v1850 = vunpack.c.l.s4 1934713408
        %v1851 = vunpack.c.0.s8 %v1850
        %v1852 = vperm.slane %v1844, %v1851
        %v1853 = vrot.slane %v1848, 4
        %v1854 = vsel %vm1627, %v1853, %v1836
        %v1855 = vrot.slane %v1836, 4
        %v1856 = vsel %vm1627, %v1848, %v1855
        %v1857 = vrot.slane %v1852, 4
        %v1858 = vsel %vm1627, %v1857, %v1840
        %v1859 = vrot.slane %v1840, 4
        %v1860 = vsel %vm1627, %v1852, %v1859
        %v1861 = vpack.c.bf16 %v1854, %v1854
        %v1862 = vpack.c.bf16 %v1856, %v1856
        %v1863 = vpack.c.bf16 %v1858, %v1858
        %v1864 = vpack.c.bf16 %v1860, %v1860
        %1866 = vrot.lane.b32.xlu0 %v1613, 120
        %v1867 = vpop.permute.xlu0 %1866
        %1869 = vrot.lane.b32.xlu0 %v1613, 112
        %v1870 = vpop.permute.xlu0 %1869
        %1872 = vrot.lane.b32.xlu0 %v1613, 104
        %v1873 = vpop.permute.xlu0 %1872
        %v1875 = vrot.slane %v1870, 4
        %v1876 = vsel %vm1627, %v1875, %v1613
        %v1877 = vrot.slane %v1613, 4
        %v1878 = vsel %vm1627, %v1870, %v1877
        %v1880 = vunpack.c.l.s4 1983009808
        %v1881 = vunpack.c.0.s8 %v1880
        %v1882 = vperm.slane %v1876, %v1881
        %v1884 = vunpack.c.l.s4 1983009808
        %v1885 = vunpack.c.0.s8 %v1884
        %v1886 = vperm.slane %v1878, %v1885
        %v1887 = vrot.slane %v1873, 4
        %v1888 = vsel %vm1627, %v1887, %v1867
        %v1889 = vrot.slane %v1867, 4
        %v1890 = vsel %vm1627, %v1873, %v1889
        %v1892 = vunpack.c.l.s4 1983009808
        %v1893 = vunpack.c.0.s8 %v1892
        %v1894 = vperm.slane %v1888, %v1893
        %v1896 = vunpack.c.l.s4 1983009808
        %v1897 = vunpack.c.0.s8 %v1896
        %v1898 = vperm.slane %v1890, %v1897
        %v1899 = vrot.slane %v1894, 4
        %v1900 = vsel %vm1627, %v1899, %v1882
        %v1901 = vrot.slane %v1882, 4
        %v1902 = vsel %vm1627, %v1894, %v1901
        %v1904 = vunpack.c.l.s4 1934713408
        %v1905 = vunpack.c.0.s8 %v1904
        %v1906 = vperm.slane %v1900, %v1905
        %v1908 = vunpack.c.l.s4 1934713408
        %v1909 = vunpack.c.0.s8 %v1908
        %v1910 = vperm.slane %v1902, %v1909
        %v1911 = vrot.slane %v1898, 4
        %v1912 = vsel %vm1627, %v1911, %v1886
        %v1913 = vrot.slane %v1886, 4
        %v1914 = vsel %vm1627, %v1898, %v1913
        %v1916 = vunpack.c.l.s4 1934713408
        %v1917 = vunpack.c.0.s8 %v1916
        %v1918 = vperm.slane %v1912, %v1917
        %v1920 = vunpack.c.l.s4 1934713408
        %v1921 = vunpack.c.0.s8 %v1920
        %v1922 = vperm.slane %v1914, %v1921
        %v1923 = vrot.slane %v1906, 4
        %v1924 = vsel %vm1627, 0.0, %v1923
        %v1925 = vrot.slane %v1910, 4
        %v1926 = vsel %vm1627, 0.0, %v1925
        %v1927 = vrot.slane %v1918, 4
        %v1928 = vsel %vm1627, 0.0, %v1927
        %v1929 = vrot.slane %v1922, 4
        %v1930 = vsel %vm1627, 0.0, %v1929
        %v1931 = vsel %vm1627, %v1925, %v1906
        %v1933 = vunpack.c.l.s4 1983009808
        %v1934 = vunpack.c.0.s8 %v1933
        %v1935 = vperm.slane %v1931, %v1934
        %v1936 = vrot.slane %v1926, 4
        %v1937 = vsel %vm1627, %v1936, %v1924
        %v1939 = vunpack.c.l.s4 1983009808
        %v1940 = vunpack.c.0.s8 %v1939
        %v1941 = vperm.slane %v1937, %v1940
        %v1942 = vsel %vm1627, %v1929, %v1918
        %v1944 = vunpack.c.l.s4 1983009808
        %v1945 = vunpack.c.0.s8 %v1944
        %v1946 = vperm.slane %v1942, %v1945
        %v1947 = vrot.slane %v1930, 4
        %v1948 = vsel %vm1627, %v1947, %v1928
        %v1950 = vunpack.c.l.s4 1983009808
        %v1951 = vunpack.c.0.s8 %v1950
        %v1952 = vperm.slane %v1948, %v1951
        %v1953 = vrot.slane %v1941, 4
        %v1954 = vsel %vm1627, %v1953, %v1935
        %v1955 = vrot.slane %v1935, 4
        %v1956 = vsel %vm1627, %v1941, %v1955
        %v1958 = vunpack.c.l.s4 1934713408
        %v1959 = vunpack.c.0.s8 %v1958
        %v1960 = vperm.slane %v1954, %v1959
        %v1962 = vunpack.c.l.s4 1934713408
        %v1963 = vunpack.c.0.s8 %v1962
        %v1964 = vperm.slane %v1956, %v1963
        %v1965 = vrot.slane %v1952, 4
        %v1966 = vsel %vm1627, %v1965, %v1946
        %v1967 = vrot.slane %v1946, 4
        %v1968 = vsel %vm1627, %v1952, %v1967
        %v1970 = vunpack.c.l.s4 1934713408
        %v1971 = vunpack.c.0.s8 %v1970
        %v1972 = vperm.slane %v1966, %v1971
        %v1974 = vunpack.c.l.s4 1934713408
        %v1975 = vunpack.c.0.s8 %v1974
        %v1976 = vperm.slane %v1968, %v1975
        %v1977 = vrot.slane %v1972, 4
        %v1978 = vsel %vm1627, %v1977, %v1960
        %v1979 = vrot.slane %v1960, 4
        %v1980 = vsel %vm1627, %v1972, %v1979
        %v1981 = vrot.slane %v1976, 4
        %v1982 = vsel %vm1627, %v1981, %v1964
        %v1983 = vrot.slane %v1964, 4
        %v1984 = vsel %vm1627, %v1976, %v1983
        %v1985 = vpack.c.bf16 %v1978, %v1978
        %v1986 = vpack.c.bf16 %v1980, %v1980
        %v1987 = vpack.c.bf16 %v1982, %v1982
        %v1988 = vpack.c.bf16 %v1984, %v1984
        %vm1989 = vcmask 64512
        %v1991 = vsel %vm1989, %v1737, 0
        %v1994 = vsel %vm1989, %v1861, 0
        %1996 = vmatpush.bf16.xpose.msra.mxu0 0
        %1997 = vmatpush.bf16.xpose.msra.mxu0 0
        %1998 = vmatpush.bf16.xpose.msra.mxu0 0
        %1999 = vmatpush.bf16.xpose.msra.mxu0 0
        %2000 = vmatpush.bf16.xpose.msra.mxu0 0
        %2001 = vmatpush.bf16.xpose.msra.mxu0 0
        %2002 = vmatpush.bf16.xpose.msra.mxu0 0
        %2003 = vmatpush.bf16.xpose.msra.mxu0 %v1994
        %2004 = vmatmul.bf16.gmra.mxu0 %v1991
        %v2005 = vpop.f32.mrf.mxu0
        %v2006 = vadd.f32 0.0, %v2005
        %v2007 = vpop.f32.mrf.mxu0
        %2008 = vdwg.mxu0
        %v2010 = vsel %vm1989, %v1738, 0
        %v2013 = vsel %vm1989, %v1862, 0
        %2015 = vmatpush.bf16.xpose.msra.mxu0 0
        %2016 = vmatpush.bf16.xpose.msra.mxu0 0
        %2017 = vmatpush.bf16.xpose.msra.mxu0 0
        %2018 = vmatpush.bf16.xpose.msra.mxu0 0
        %2019 = vmatpush.bf16.xpose.msra.mxu0 0
        %2020 = vmatpush.bf16.xpose.msra.mxu0 0
        %2021 = vmatpush.bf16.xpose.msra.mxu0 0
        %2022 = vmatpush.bf16.xpose.msra.mxu0 %v2013
        %2023 = vmatmul.bf16.gmra.mxu0 %v2010
        %v2024 = vpop.f32.mrf.mxu0
        %v2025 = vadd.f32 0.0, %v2024
        %v2026 = vpop.f32.mrf.mxu0
        %2027 = vdwg.mxu0
        %v2029 = vsel %vm1989, %v1739, 0
        %v2032 = vsel %vm1989, %v1863, 0
        %2034 = vmatpush.bf16.xpose.msra.mxu0 0
        %2035 = vmatpush.bf16.xpose.msra.mxu0 0
        %2036 = vmatpush.bf16.xpose.msra.mxu0 0
        %2037 = vmatpush.bf16.xpose.msra.mxu0 0
        %2038 = vmatpush.bf16.xpose.msra.mxu0 0
        %2039 = vmatpush.bf16.xpose.msra.mxu0 0
        %2040 = vmatpush.bf16.xpose.msra.mxu0 0
        %2041 = vmatpush.bf16.xpose.msra.mxu0 %v2032
        %2042 = vmatmul.bf16.gmra.mxu0 %v2029
        %v2043 = vpop.f32.mrf.mxu0
        %v2044 = vadd.f32 0.0, %v2043
        %v2045 = vpop.f32.mrf.mxu0
        %2046 = vdwg.mxu0
        %v2048 = vsel %vm1989, %v1740, 0
        %v2051 = vsel %vm1989, %v1864, 0
        %2053 = vmatpush.bf16.xpose.msra.mxu0 0
        %2054 = vmatpush.bf16.xpose.msra.mxu0 0
        %2055 = vmatpush.bf16.xpose.msra.mxu0 0
        %2056 = vmatpush.bf16.xpose.msra.mxu0 0
        %2057 = vmatpush.bf16.xpose.msra.mxu0 0
        %2058 = vmatpush.bf16.xpose.msra.mxu0 0
        %2059 = vmatpush.bf16.xpose.msra.mxu0 0
        %2060 = vmatpush.bf16.xpose.msra.mxu0 %v2051
        %2061 = vmatmul.bf16.gmra.mxu0 %v2048
        %v2062 = vpop.f32.mrf.mxu0
        %v2063 = vadd.f32 0.0, %v2062
        %v2064 = vpop.f32.mrf.mxu0
        %2065 = vdwg.mxu0
        %v2066 = vmul.f32 %v2006, 0.35355338
        %v2067 = vmul.f32 %v2025, 0.35355338
        %v2068 = vmul.f32 %v2044, 0.35355338
        %v2069 = vmul.f32 %v2063, 0.35355338
        %v2070 = vadd.f32 %v2066, %v1464
        %v2071 = vadd.f32 %v2067, %v1464
        %v2072 = vadd.f32 %v2068, %v1464
        %v2073 = vadd.f32 %v2069, %v1464
        %v2074 = vsel %vm1989, %v2070, -inf
        %2075 = vmax.xlane.f32.xlu0 %v2074
        %v2076 = vpop.xlane.xlu0 %2075
        %v2077 = vsel %vm1989, %v2071, -inf
        %2078 = vmax.xlane.f32.xlu0 %v2077
        %v2079 = vpop.xlane.xlu0 %2078
        %v2080 = vsel %vm1989, %v2072, -inf
        %2081 = vmax.xlane.f32.xlu0 %v2080
        %v2082 = vpop.xlane.xlu0 %2081
        %v2083 = vsel %vm1989, %v2073, -inf
        %2084 = vmax.xlane.f32.xlu0 %v2083
        %v2085 = vpop.xlane.xlu0 %2084
        %v2086 = vsub.f32 %v2070, %v2076
        %v2087 = vsub.f32 %v2071, %v2079
        %v2088 = vsub.f32 %v2072, %v2082
        %v2089 = vsub.f32 %v2073, %v2085
        %v2090 = vmul.f32 %v2086, 1.442695
        %v2091 = vpow.pop %v2090
        %v2092 = vmul.f32 %v2087, 1.442695
        %v2093 = vpow.pop %v2092
        %v2094 = vmul.f32 %v2088, 1.442695
        %v2095 = vpow.pop %v2094
        %v2096 = vmul.f32 %v2089, 1.442695
        %v2097 = vpow.pop %v2096
        %v2098 = vsel %vm1989, %v2091, 0.0
        %2099 = vadd.xlane.f32.xlu0 %v2098
        %v2100 = vpop.xlane.xlu0 %2099
        %v2101 = vsel %vm1989, %v2093, 0.0
        %2102 = vadd.xlane.f32.xlu0 %v2101
        %v2103 = vpop.xlane.xlu0 %2102
        %v2104 = vsel %vm1989, %v2095, 0.0
        %2105 = vadd.xlane.f32.xlu0 %v2104
        %v2106 = vpop.xlane.xlu0 %2105
        %v2107 = vsel %vm1989, %v2097, 0.0
        %2108 = vadd.xlane.f32.xlu0 %v2107
        %v2109 = vpop.xlane.xlu0 %2108
        %v2110 = vrcp.pop %v2100
        %v2111 = vrcp.pop %v2103
        %v2112 = vrcp.pop %v2106
        %v2113 = vrcp.pop %v2109
        %v2114 = vmul.f32 %v2091, %v2110
        %v2115 = vmul.f32 %v2093, %v2111
        %v2116 = vmul.f32 %v2095, %v2112
        %v2117 = vmul.f32 %v2097, %v2113
        %v2118 = vpack.c.bf16 %v2114, %v2114
        %v2119 = vpack.c.bf16 %v2115, %v2115
        %v2120 = vpack.c.bf16 %v2116, %v2116
        %v2121 = vpack.c.bf16 %v2117, %v2117
        %v2123 = vsel %vm1989, %v2118, 0
        %vm2125 = vcmask 1043456
        %v2127 = vsel %vm2125, %v1985, 0
        %2129 = vmatpush.bf16.msra.mxu0 0
        %2130 = vmatpush.bf16.msra.mxu0 0
        %2131 = vmatpush.bf16.msra.mxu0 0
        %2132 = vmatpush.bf16.msra.mxu0 0
        %2133 = vmatpush.bf16.msra.mxu0 0
        %2134 = vmatpush.bf16.msra.mxu0 0
        %2135 = vmatpush.bf16.msra.mxu0 0
        %2136 = vmatpush.bf16.msra.mxu0 %v2127
        %2137 = vmatmul.bf16.gmra.mxu0 %v2123
        %v2138 = vpop.f32.mrf.mxu0
        %v2139 = vadd.f32 0.0, %v2138
        %v2140 = vpop.f32.mrf.mxu0
        %2141 = vdwg.mxu0
        %v2143 = vsel %vm1989, %v2119, 0
        %v2146 = vsel %vm2125, %v1986, 0
        %2148 = vmatpush.bf16.msra.mxu0 0
        %2149 = vmatpush.bf16.msra.mxu0 0
        %2150 = vmatpush.bf16.msra.mxu0 0
        %2151 = vmatpush.bf16.msra.mxu0 0
        %2152 = vmatpush.bf16.msra.mxu0 0
        %2153 = vmatpush.bf16.msra.mxu0 0
        %2154 = vmatpush.bf16.msra.mxu0 0
        %2155 = vmatpush.bf16.msra.mxu0 %v2146
        %2156 = vmatmul.bf16.gmra.mxu0 %v2143
        %v2157 = vpop.f32.mrf.mxu0
        %v2158 = vadd.f32 0.0, %v2157
        %v2159 = vpop.f32.mrf.mxu0
        %2160 = vdwg.mxu0
        %v2162 = vsel %vm1989, %v2120, 0
        %v2165 = vsel %vm2125, %v1987, 0
        %2167 = vmatpush.bf16.msra.mxu0 0
        %2168 = vmatpush.bf16.msra.mxu0 0
        %2169 = vmatpush.bf16.msra.mxu0 0
        %2170 = vmatpush.bf16.msra.mxu0 0
        %2171 = vmatpush.bf16.msra.mxu0 0
        %2172 = vmatpush.bf16.msra.mxu0 0
        %2173 = vmatpush.bf16.msra.mxu0 0
        %2174 = vmatpush.bf16.msra.mxu0 %v2165
        %2175 = vmatmul.bf16.gmra.mxu0 %v2162
        %v2176 = vpop.f32.mrf.mxu0
        %v2177 = vadd.f32 0.0, %v2176
        %v2178 = vpop.f32.mrf.mxu0
        %2179 = vdwg.mxu0
        %v2181 = vsel %vm1989, %v2121, 0
        %v2184 = vsel %vm2125, %v1988, 0
        %2186 = vmatpush.bf16.msra.mxu0 0
        %2187 = vmatpush.bf16.msra.mxu0 0
        %2188 = vmatpush.bf16.msra.mxu0 0
        %2189 = vmatpush.bf16.msra.mxu0 0
        %2190 = vmatpush.bf16.msra.mxu0 0
        %2191 = vmatpush.bf16.msra.mxu0 0
        %2192 = vmatpush.bf16.msra.mxu0 0
        %2193 = vmatpush.bf16.msra.mxu0 %v2184
        %2194 = vmatmul.bf16.gmra.mxu0 %v2181
        %v2195 = vpop.f32.mrf.mxu0
        %v2196 = vadd.f32 0.0, %v2195
        %v2197 = vpop.f32.mrf.mxu0
        %2198 = vdwg.mxu0
        %v2199 = vrot.slane %v2177, 4
        %v2200 = vsel %vm1627, %v2199, %v2139
        %v2201 = vrot.slane %v2139, 4
        %v2202 = vsel %vm1627, %v2177, %v2201
        %v2204 = vunpack.c.l.s4 1983009808
        %v2205 = vunpack.c.0.s8 %v2204
        %v2206 = vperm.slane %v2200, %v2205
        %v2208 = vunpack.c.l.s4 1983009808
        %v2209 = vunpack.c.0.s8 %v2208
        %v2210 = vperm.slane %v2202, %v2209
        %v2211 = vrot.slane %v2196, 4
        %v2212 = vsel %vm1627, %v2211, %v2158
        %v2213 = vrot.slane %v2158, 4
        %v2214 = vsel %vm1627, %v2196, %v2213
        %v2216 = vunpack.c.l.s4 1983009808
        %v2217 = vunpack.c.0.s8 %v2216
        %v2218 = vperm.slane %v2212, %v2217
        %v2220 = vunpack.c.l.s4 1983009808
        %v2221 = vunpack.c.0.s8 %v2220
        %v2222 = vperm.slane %v2214, %v2221
        %v2223 = vrot.slane %v2218, 4
        %v2224 = vsel %vm1627, %v2223, %v2206
        %v2225 = vrot.slane %v2206, 4
        %v2226 = vsel %vm1627, %v2218, %v2225
        %v2228 = vunpack.c.l.s4 1934713408
        %v2229 = vunpack.c.0.s8 %v2228
        %v2230 = vperm.slane %v2224, %v2229
        %v2232 = vunpack.c.l.s4 1934713408
        %v2233 = vunpack.c.0.s8 %v2232
        %v2234 = vperm.slane %v2226, %v2233
        %v2235 = vrot.slane %v2222, 4
        %v2236 = vsel %vm1627, %v2235, %v2210
        %v2237 = vrot.slane %v2210, 4
        %v2238 = vsel %vm1627, %v2222, %v2237
        %v2240 = vunpack.c.l.s4 1934713408
        %v2241 = vunpack.c.0.s8 %v2240
        %v2242 = vperm.slane %v2236, %v2241
        %v2244 = vunpack.c.l.s4 1934713408
        %v2245 = vunpack.c.0.s8 %v2244
        %v2246 = vperm.slane %v2238, %v2245
        %v2247 = vrot.slane %v2230, 4
        %v2248 = vsel %vm1627, 0.0, %v2247
        %v2249 = vrot.slane %v2234, 4
        %v2250 = vsel %vm1627, 0.0, %v2249
        %v2251 = vrot.slane %v2242, 4
        %v2252 = vsel %vm1627, 0.0, %v2251
        %v2253 = vrot.slane %v2246, 4
        %v2254 = vsel %vm1627, 0.0, %v2253
        %v2255 = vsel %vm1627, %v2249, %v2230
        %v2257 = vunpack.c.l.s4 1983009808
        %v2258 = vunpack.c.0.s8 %v2257
        %v2259 = vperm.slane %v2255, %v2258
        %v2260 = vrot.slane %v2250, 4
        %v2261 = vsel %vm1627, %v2260, %v2248
        %v2263 = vunpack.c.l.s4 1983009808
        %v2264 = vunpack.c.0.s8 %v2263
        %v2265 = vperm.slane %v2261, %v2264
        %v2266 = vsel %vm1627, %v2253, %v2242
        %v2268 = vunpack.c.l.s4 1983009808
        %v2269 = vunpack.c.0.s8 %v2268
        %v2270 = vperm.slane %v2266, %v2269
        %v2271 = vrot.slane %v2254, 4
        %v2272 = vsel %vm1627, %v2271, %v2252
        %v2274 = vunpack.c.l.s4 1983009808
        %v2275 = vunpack.c.0.s8 %v2274
        %v2276 = vperm.slane %v2272, %v2275
        %v2277 = vrot.slane %v2265, 4
        %v2278 = vsel %vm1627, %v2277, %v2259
        %v2279 = vrot.slane %v2259, 4
        %v2280 = vsel %vm1627, %v2265, %v2279
        %v2282 = vunpack.c.l.s4 1934713408
        %v2283 = vunpack.c.0.s8 %v2282
        %v2284 = vperm.slane %v2278, %v2283
        %v2286 = vunpack.c.l.s4 1934713408
        %v2287 = vunpack.c.0.s8 %v2286
        %v2288 = vperm.slane %v2280, %v2287
        %v2289 = vrot.slane %v2276, 4
        %v2290 = vsel %vm1627, %v2289, %v2270
        %v2291 = vrot.slane %v2270, 4
        %v2292 = vsel %vm1627, %v2276, %v2291
        %v2294 = vunpack.c.l.s4 1934713408
        %v2295 = vunpack.c.0.s8 %v2294
        %v2296 = vperm.slane %v2290, %v2295
        %v2298 = vunpack.c.l.s4 1934713408
        %v2299 = vunpack.c.0.s8 %v2298
        %v2300 = vperm.slane %v2292, %v2299
        %v2301 = vrot.slane %v2296, 4
        %v2302 = vsel %vm1627, %v2301, %v2284
        %v2303 = vrot.slane %v2284, 4
        %v2304 = vsel %vm1627, %v2296, %v2303
        %v2305 = vrot.slane %v2300, 4
        %v2306 = vsel %vm1627, %v2305, %v2288
        %v2307 = vrot.slane %v2288, 4
        %v2308 = vsel %vm1627, %v2300, %v2307
        %2310 = vrot.lane.b32.xlu0 %v2304, 8
        %v2311 = vpop.permute.xlu0 %2310
        %2314 = vrot.lane.b32.xlu0 %v2306, 16
        %v2315 = vpop.permute.xlu0 %2314
        %2318 = vrot.lane.b32.xlu0 %v2308, 24
        %v2319 = vpop.permute.xlu0 %2318
        %v2321 = vsel %vm1989, %v2302, %v2311
        %vm2322 = vcmask 130048
        %v2323 = vsel %vm2322, %v2321, %v2315
        %vm2324 = vcmask 195584
        %v2325 = vsel %vm2324, %v2323, %v2319
        %v2326 = vpack.c.bf16 %v2325, %v2325
        %v2328 = vperm.slane %v1527, 0
        %v2334 = vunpack.c.l.b16 %v1523
        %v2335 = vunpack.c.l.b16 %v1524
        %v2336 = vunpack.c.l.b16 %v1525
        %v2337 = vunpack.c.l.b16 %v1526
        %v2338 = vpack.c.b16 %v2335, %v2334
        %v2339 = vpack.c.b16 %v2337, %v2336
        %v2343 = vsel %vm1467, %v2326, 0
        %2345 = vmatpush.bf16.msra.mxu0 0
        %2346 = vmatpush.bf16.msra.mxu0 0
        %2347 = vmatpush.bf16.msra.mxu0 0
        %2348 = vmatpush.bf16.msra.mxu0 0
        %2349 = vmatpush.bf16.msra.mxu0 0
        %2350 = vmatpush.bf16.msra.mxu0 0
        %2351 = vmatpush.bf16.msra.mxu0 %v2339
        %2352 = vmatpush.bf16.msra.mxu0 %v2338
        %2353 = vmatmul.bf16.gmra.mxu0 %v2343
        %v2354 = vpop.f32.mrf.mxu0
        %v2355 = vadd.f32 %v2328, %v2354
        %v2356 = vpop.f32.mrf.mxu0
        %2357 = vdwg.mxu0
        %v2358 = vadd.f32 %v1460, %v2355
        %v2359 = vld [vmem:[%s1442] sm:$0x1]
        %v2360 = vld [vmem:[%s1445] sm:$0x1]
        %v2361 = vsel %vm1467, %v2358, 0.0
        %2362 = vadd.xlane.f32.xlu0 %v2361
        %v2363 = vpop.xlane.xlu0 %2362
        %v2364 = vmul.f32 %v2363, %v1477
        %v2365 = vsub.f32 %v2358, %v2364
        %v2366 = vmul.f32 %v2365, %v2365
        %v2367 = vsel %vm1467, %v2366, 0.0
        %2368 = vadd.xlane.f32.xlu0 %v2367
        %v2369 = vpop.xlane.xlu0 %2368
        %v2370 = vmul.f32 %v2369, 0.032258064
        %v2371 = vrsqrt.pop %v2370
        %v2372 = vmul.f32 %v2371, %v2370
        %v2373 = vmul.f32 %v2372, %v2371
        %v2374 = vmul.f32 0.5, %v2373
        %v2375 = vsub.f32 1.5, %v2374
        %v2376 = vmul.f32 %v2371, %v2375
        %v2377 = vmul.f32 %v2370, %v2376
        %vm2378 = vcmp.eq.f32.partialorder %v2370, inf
        %v2379 = vsel %vm2378, %v2370, %v2377
        %vm2380 = vcmp.eq.f32.partialorder %v2370, 0.0
        %v2381 = vand.u32 %v2370, 2147483648
        %v2382 = vsel %vm2380, %v2381, %v2379
        %v2383 = vadd.f32 %v2382, 1e-06
        %v2384 = vrcp.pop %v2383
        %v2386 = vperm.slane %v2359, 0
        %v2388 = vmul.f32 %v2386, %v2365
        %v2389 = vmul.f32 %v2388, %v2384
        %v2391 = vperm.slane %v2360, 0
        %v2393 = vadd.f32 %v2389, %v2391
        %v2394 = vld [vmem:[%s1390] sm:$0xf]
        %v2395 = vld [vmem:[%s1390 + $0x4] sm:$0xf]
        %v2396 = vld [vmem:[%s1390 + $0x8] sm:$0xf]
        %v2397 = vld [vmem:[%s1390 + $0xc] sm:$0xf]
        %v2398 = vld [vmem:[%s1393] sm:$0x1]
        %v2399 = vld [vmem:[%s1398] sm:$0xf]
        %v2400 = vld [vmem:[%s1398 + $0x4] sm:$0xf]
        %v2401 = vld [vmem:[%s1398 + $0x8] sm:$0xf]
        %v2402 = vld [vmem:[%s1398 + $0xc] sm:$0xf]
        %v2403 = vld [vmem:[%s1401] sm:$0x1]
        %v2404 = vld [vmem:[%s1406] sm:$0xf]
        %v2405 = vld [vmem:[%s1406 + $0x4] sm:$0xf]
        %v2406 = vld [vmem:[%s1406 + $0x8] sm:$0xf]
        %v2407 = vld [vmem:[%s1406 + $0xc] sm:$0xf]
        %v2408 = vld [vmem:[%s1409] sm:$0x1]
        %v2409 = vld [vmem:[%s1414] sm:$0xf]
        %v2410 = vld [vmem:[%s1414 + $0x4] sm:$0xf]
        %v2411 = vld [vmem:[%s1414 + $0x8] sm:$0xf]
        %v2412 = vld [vmem:[%s1414 + $0xc] sm:$0xf]
        %v2413 = vld [vmem:[%s1417] sm:$0x1]
        %v2414 = vpack.c.bf16 %v2393, %v2393
        %v2415 = vpack.c.bf16 %v1462, %v1461
        %v2417 = vperm.slane %v2398, 0
        %v2423 = vunpack.c.l.b16 %v2394
        %v2424 = vunpack.c.l.b16 %v2395
        %v2425 = vunpack.c.l.b16 %v2396
        %v2426 = vunpack.c.l.b16 %v2397
        %v2427 = vpack.c.b16 %v2424, %v2423
        %v2428 = vpack.c.b16 %v2426, %v2425
        %v2432 = vsel %vm1467, %v2414, 0
        %2434 = vmatpush.bf16.msra.mxu0 0
        %2435 = vmatpush.bf16.msra.mxu0 0
        %2436 = vmatpush.bf16.msra.mxu0 0
        %2437 = vmatpush.bf16.msra.mxu0 0
        %2438 = vmatpush.bf16.msra.mxu0 0
        %2439 = vmatpush.bf16.msra.mxu0 0
        %2440 = vmatpush.bf16.msra.mxu0 %v2428
        %2441 = vmatpush.bf16.msra.mxu0 %v2427
        %2442 = vmatmul.bf16.gmra.mxu0 %v2432
        %v2443 = vpop.f32.mrf.mxu0
        %v2444 = vadd.f32 %v2417, %v2443
        %v2445 = vpop.f32.mrf.mxu0
        %2446 = vdwg.mxu0
        %v2448 = vperm.slane %v2403, 0
        %v2454 = vunpack.c.l.b16 %v2399
        %v2455 = vunpack.c.l.b16 %v2400
        %v2456 = vunpack.c.l.b16 %v2401
        %v2457 = vunpack.c.l.b16 %v2402
        %v2458 = vpack.c.b16 %v2455, %v2454
        %v2459 = vpack.c.b16 %v2457, %v2456
        %v2463 = vsel %vm1467, %v2415, 0
        %2465 = vmatpush.bf16.msra.mxu0 0
        %2466 = vmatpush.bf16.msra.mxu0 0
        %2467 = vmatpush.bf16.msra.mxu0 0
        %2468 = vmatpush.bf16.msra.mxu0 0
        %2469 = vmatpush.bf16.msra.mxu0 0
        %2470 = vmatpush.bf16.msra.mxu0 0
        %2471 = vmatpush.bf16.msra.mxu0 %v2459
        %2472 = vmatpush.bf16.msra.mxu0 %v2458
        %2473 = vmatmul.bf16.gmra.mxu0 %v2463
        %v2474 = vpop.f32.mrf.mxu0
        %v2475 = vadd.f32 %v2448, %v2474
        %v2476 = vpop.f32.mrf.mxu0
        %v2477 = vadd.f32 %v2448, %v2476
        %2478 = vdwg.mxu0
        %v2480 = vperm.slane %v2408, 0
        %v2486 = vunpack.c.l.b16 %v2404
        %v2487 = vunpack.c.l.b16 %v2405
        %v2488 = vunpack.c.l.b16 %v2406
        %v2489 = vunpack.c.l.b16 %v2407
        %v2490 = vpack.c.b16 %v2487, %v2486
        %v2491 = vpack.c.b16 %v2489, %v2488
        %2494 = vmatpush.bf16.msra.mxu0 0
        %2495 = vmatpush.bf16.msra.mxu0 0
        %2496 = vmatpush.bf16.msra.mxu0 0
        %2497 = vmatpush.bf16.msra.mxu0 0
        %2498 = vmatpush.bf16.msra.mxu0 0
        %2499 = vmatpush.bf16.msra.mxu0 0
        %2500 = vmatpush.bf16.msra.mxu0 %v2491
        %2501 = vmatpush.bf16.msra.mxu0 %v2490
        %2502 = vmatmul.bf16.gmra.mxu0 %v2463
        %v2503 = vpop.f32.mrf.mxu0
        %v2504 = vadd.f32 %v2480, %v2503
        %v2505 = vpop.f32.mrf.mxu0
        %v2506 = vadd.f32 %v2480, %v2505
        %2507 = vdwg.mxu0
        %2509 = vrot.lane.b32.xlu0 %v2444, 120
        %v2510 = vpop.permute.xlu0 %2509
        %2512 = vrot.lane.b32.xlu0 %v2444, 112
        %v2513 = vpop.permute.xlu0 %2512
        %2515 = vrot.lane.b32.xlu0 %v2444, 104
        %v2516 = vpop.permute.xlu0 %2515
        %v2518 = vrot.slane %v2513, 4
        %v2519 = vsel %vm1627, %v2518, %v2444
        %v2520 = vrot.slane %v2444, 4
        %v2521 = vsel %vm1627, %v2513, %v2520
        %v2523 = vunpack.c.l.s4 1983009808
        %v2524 = vunpack.c.0.s8 %v2523
        %v2525 = vperm.slane %v2519, %v2524
        %v2527 = vunpack.c.l.s4 1983009808
        %v2528 = vunpack.c.0.s8 %v2527
        %v2529 = vperm.slane %v2521, %v2528
        %v2530 = vrot.slane %v2516, 4
        %v2531 = vsel %vm1627, %v2530, %v2510
        %v2532 = vrot.slane %v2510, 4
        %v2533 = vsel %vm1627, %v2516, %v2532
        %v2535 = vunpack.c.l.s4 1983009808
        %v2536 = vunpack.c.0.s8 %v2535
        %v2537 = vperm.slane %v2531, %v2536
        %v2539 = vunpack.c.l.s4 1983009808
        %v2540 = vunpack.c.0.s8 %v2539
        %v2541 = vperm.slane %v2533, %v2540
        %v2542 = vrot.slane %v2537, 4
        %v2543 = vsel %vm1627, %v2542, %v2525
        %v2544 = vrot.slane %v2525, 4
        %v2545 = vsel %vm1627, %v2537, %v2544
        %v2547 = vunpack.c.l.s4 1934713408
        %v2548 = vunpack.c.0.s8 %v2547
        %v2549 = vperm.slane %v2543, %v2548
        %v2551 = vunpack.c.l.s4 1934713408
        %v2552 = vunpack.c.0.s8 %v2551
        %v2553 = vperm.slane %v2545, %v2552
        %v2554 = vrot.slane %v2541, 4
        %v2555 = vsel %vm1627, %v2554, %v2529
        %v2556 = vrot.slane %v2529, 4
        %v2557 = vsel %vm1627, %v2541, %v2556
        %v2559 = vunpack.c.l.s4 1934713408
        %v2560 = vunpack.c.0.s8 %v2559
        %v2561 = vperm.slane %v2555, %v2560
        %v2563 = vunpack.c.l.s4 1934713408
        %v2564 = vunpack.c.0.s8 %v2563
        %v2565 = vperm.slane %v2557, %v2564
        %v2566 = vrot.slane %v2549, 4
        %v2567 = vsel %vm1627, 0.0, %v2566
        %v2568 = vrot.slane %v2553, 4
        %v2569 = vsel %vm1627, 0.0, %v2568
        %v2570 = vrot.slane %v2561, 4
        %v2571 = vsel %vm1627, 0.0, %v2570
        %v2572 = vrot.slane %v2565, 4
        %v2573 = vsel %vm1627, 0.0, %v2572
        %v2574 = vsel %vm1627, %v2568, %v2549
        %v2576 = vunpack.c.l.s4 1983009808
        %v2577 = vunpack.c.0.s8 %v2576
        %v2578 = vperm.slane %v2574, %v2577
        %v2579 = vrot.slane %v2569, 4
        %v2580 = vsel %vm1627, %v2579, %v2567
        %v2582 = vunpack.c.l.s4 1983009808
        %v2583 = vunpack.c.0.s8 %v2582
        %v2584 = vperm.slane %v2580, %v2583
        %v2585 = vsel %vm1627, %v2572, %v2561
        %v2587 = vunpack.c.l.s4 1983009808
        %v2588 = vunpack.c.0.s8 %v2587
        %v2589 = vperm.slane %v2585, %v2588
        %v2590 = vrot.slane %v2573, 4
        %v2591 = vsel %vm1627, %v2590, %v2571
        %v2593 = vunpack.c.l.s4 1983009808
        %v2594 = vunpack.c.0.s8 %v2593
        %v2595 = vperm.slane %v2591, %v2594
        %v2596 = vrot.slane %v2584, 4
        %v2597 = vsel %vm1627, %v2596, %v2578
        %v2598 = vrot.slane %v2578, 4
        %v2599 = vsel %vm1627, %v2584, %v2598
        %v2601 = vunpack.c.l.s4 1934713408
        %v2602 = vunpack.c.0.s8 %v2601
        %v2603 = vperm.slane %v2597, %v2602
        %v2605 = vunpack.c.l.s4 1934713408
        %v2606 = vunpack.c.0.s8 %v2605
        %v2607 = vperm.slane %v2599, %v2606
        %v2608 = vrot.slane %v2595, 4
        %v2609 = vsel %vm1627, %v2608, %v2589
        %v2610 = vrot.slane %v2589, 4
        %v2611 = vsel %vm1627, %v2595, %v2610
        %v2613 = vunpack.c.l.s4 1934713408
        %v2614 = vunpack.c.0.s8 %v2613
        %v2615 = vperm.slane %v2609, %v2614
        %v2617 = vunpack.c.l.s4 1934713408
        %v2618 = vunpack.c.0.s8 %v2617
        %v2619 = vperm.slane %v2611, %v2618
        %v2620 = vrot.slane %v2615, 4
        %v2621 = vsel %vm1627, %v2620, %v2603
        %v2622 = vrot.slane %v2603, 4
        %v2623 = vsel %vm1627, %v2615, %v2622
        %v2624 = vrot.slane %v2619, 4
        %v2625 = vsel %vm1627, %v2624, %v2607
        %v2626 = vrot.slane %v2607, 4
        %v2627 = vsel %vm1627, %v2619, %v2626
        %v2628 = vpack.c.bf16 %v2621, %v2621
        %v2629 = vpack.c.bf16 %v2623, %v2623
        %v2630 = vpack.c.bf16 %v2625, %v2625
        %v2631 = vpack.c.bf16 %v2627, %v2627
        %2634 = vrot.lane.b32.xlu0 %v2475, 120
        %v2635 = vpop.permute.xlu0 %2634
        %2636 = vrot.lane.b32.xlu0 %v2477, 120
        %v2637 = vpop.permute.xlu0 %2636
        %2640 = vrot.lane.b32.xlu0 %v2475, 112
        %v2641 = vpop.permute.xlu0 %2640
        %2642 = vrot.lane.b32.xlu0 %v2477, 112
        %v2643 = vpop.permute.xlu0 %2642
        %2646 = vrot.lane.b32.xlu0 %v2475, 104
        %v2647 = vpop.permute.xlu0 %2646
        %2648 = vrot.lane.b32.xlu0 %v2477, 104
        %v2649 = vpop.permute.xlu0 %2648
        %v2652 = vrot.slane %v2641, 4
        %v2653 = vsel %vm1627, %v2652, %v2475
        %v2654 = vrot.slane %v2475, 4
        %v2655 = vsel %vm1627, %v2641, %v2654
        %v2657 = vunpack.c.l.s4 1983009808
        %v2658 = vunpack.c.0.s8 %v2657
        %v2659 = vperm.slane %v2653, %v2658
        %v2661 = vunpack.c.l.s4 1983009808
        %v2662 = vunpack.c.0.s8 %v2661
        %v2663 = vperm.slane %v2655, %v2662
        %v2664 = vrot.slane %v2647, 4
        %v2665 = vsel %vm1627, %v2664, %v2635
        %v2666 = vrot.slane %v2635, 4
        %v2667 = vsel %vm1627, %v2647, %v2666
        %v2669 = vunpack.c.l.s4 1983009808
        %v2670 = vunpack.c.0.s8 %v2669
        %v2671 = vperm.slane %v2665, %v2670
        %v2673 = vunpack.c.l.s4 1983009808
        %v2674 = vunpack.c.0.s8 %v2673
        %v2675 = vperm.slane %v2667, %v2674
        %v2676 = vrot.slane %v2671, 4
        %v2677 = vsel %vm1627, %v2676, %v2659
        %v2678 = vrot.slane %v2659, 4
        %v2679 = vsel %vm1627, %v2671, %v2678
        %v2681 = vunpack.c.l.s4 1934713408
        %v2682 = vunpack.c.0.s8 %v2681
        %v2683 = vperm.slane %v2677, %v2682
        %v2685 = vunpack.c.l.s4 1934713408
        %v2686 = vunpack.c.0.s8 %v2685
        %v2687 = vperm.slane %v2679, %v2686
        %v2688 = vrot.slane %v2675, 4
        %v2689 = vsel %vm1627, %v2688, %v2663
        %v2690 = vrot.slane %v2663, 4
        %v2691 = vsel %vm1627, %v2675, %v2690
        %v2693 = vunpack.c.l.s4 1934713408
        %v2694 = vunpack.c.0.s8 %v2693
        %v2695 = vperm.slane %v2689, %v2694
        %v2697 = vunpack.c.l.s4 1934713408
        %v2698 = vunpack.c.0.s8 %v2697
        %v2699 = vperm.slane %v2691, %v2698
        %v2700 = vrot.slane %v2683, 4
        %v2701 = vsel %vm1627, 0.0, %v2700
        %v2702 = vrot.slane %v2687, 4
        %v2703 = vsel %vm1627, 0.0, %v2702
        %v2704 = vrot.slane %v2695, 4
        %v2705 = vsel %vm1627, 0.0, %v2704
        %v2706 = vrot.slane %v2699, 4
        %v2707 = vsel %vm1627, 0.0, %v2706
        %v2708 = vrot.slane %v2643, 4
        %v2709 = vsel %vm1627, %v2708, %v2477
        %v2711 = vunpack.c.l.s4 1983009808
        %v2712 = vunpack.c.0.s8 %v2711
        %v2713 = vperm.slane %v2709, %v2712
        %v2714 = vrot.slane %v2649, 4
        %v2715 = vsel %vm1627, %v2714, %v2637
        %v2717 = vunpack.c.l.s4 1983009808
        %v2718 = vunpack.c.0.s8 %v2717
        %v2719 = vperm.slane %v2715, %v2718
        %v2720 = vrot.slane %v2719, 4
        %v2721 = vsel %vm1627, %v2720, %v2713
        %v2722 = vrot.slane %v2713, 4
        %v2723 = vsel %vm1627, %v2719, %v2722
        %v2725 = vunpack.c.l.s4 1934713408
        %v2726 = vunpack.c.0.s8 %v2725
        %v2727 = vperm.slane %v2721, %v2726
        %v2729 = vunpack.c.l.s4 1934713408
        %v2730 = vunpack.c.0.s8 %v2729
        %v2731 = vperm.slane %v2723, %v2730
        %v2732 = vrot.slane %v2727, 4
        %v2733 = vsel %vm1627, 0.0, %v2732
        %v2734 = vrot.slane %v2731, 4
        %v2735 = vsel %vm1627, 0.0, %v2734
        %v2736 = vsel %vm1627, %v2702, %v2683
        %v2738 = vunpack.c.l.s4 1983009808
        %v2739 = vunpack.c.0.s8 %v2738
        %v2740 = vperm.slane %v2736, %v2739
        %v2741 = vrot.slane %v2703, 4
        %v2742 = vsel %vm1627, %v2741, %v2701
        %v2744 = vunpack.c.l.s4 1983009808
        %v2745 = vunpack.c.0.s8 %v2744
        %v2746 = vperm.slane %v2742, %v2745
        %v2747 = vsel %vm1627, %v2706, %v2695
        %v2749 = vunpack.c.l.s4 1983009808
        %v2750 = vunpack.c.0.s8 %v2749
        %v2751 = vperm.slane %v2747, %v2750
        %v2752 = vrot.slane %v2707, 4
        %v2753 = vsel %vm1627, %v2752, %v2705
        %v2755 = vunpack.c.l.s4 1983009808
        %v2756 = vunpack.c.0.s8 %v2755
        %v2757 = vperm.slane %v2753, %v2756
        %v2758 = vrot.slane %v2746, 4
        %v2759 = vsel %vm1627, %v2758, %v2740
        %v2760 = vrot.slane %v2740, 4
        %v2761 = vsel %vm1627, %v2746, %v2760
        %v2763 = vunpack.c.l.s4 1934713408
        %v2764 = vunpack.c.0.s8 %v2763
        %v2765 = vperm.slane %v2759, %v2764
        %v2767 = vunpack.c.l.s4 1934713408
        %v2768 = vunpack.c.0.s8 %v2767
        %v2769 = vperm.slane %v2761, %v2768
        %v2770 = vrot.slane %v2757, 4
        %v2771 = vsel %vm1627, %v2770, %v2751
        %v2772 = vrot.slane %v2751, 4
        %v2773 = vsel %vm1627, %v2757, %v2772
        %v2775 = vunpack.c.l.s4 1934713408
        %v2776 = vunpack.c.0.s8 %v2775
        %v2777 = vperm.slane %v2771, %v2776
        %v2779 = vunpack.c.l.s4 1934713408
        %v2780 = vunpack.c.0.s8 %v2779
        %v2781 = vperm.slane %v2773, %v2780
        %v2782 = vrot.slane %v2777, 4
        %v2783 = vsel %vm1627, %v2782, %v2765
        %v2784 = vrot.slane %v2765, 4
        %v2785 = vsel %vm1627, %v2777, %v2784
        %v2786 = vrot.slane %v2781, 4
        %v2787 = vsel %vm1627, %v2786, %v2769
        %v2788 = vrot.slane %v2769, 4
        %v2789 = vsel %vm1627, %v2781, %v2788
        %v2790 = vsel %vm1627, %v2734, %v2727
        %v2792 = vunpack.c.l.s4 1983009808
        %v2793 = vunpack.c.0.s8 %v2792
        %v2794 = vperm.slane %v2790, %v2793
        %v2795 = vrot.slane %v2735, 4
        %v2796 = vsel %vm1627, %v2795, %v2733
        %v2798 = vunpack.c.l.s4 1983009808
        %v2799 = vunpack.c.0.s8 %v2798
        %v2800 = vperm.slane %v2796, %v2799
        %v2801 = vrot.slane %v2800, 4
        %v2802 = vsel %vm1627, %v2801, %v2794
        %v2803 = vrot.slane %v2794, 4
        %v2804 = vsel %vm1627, %v2800, %v2803
        %v2806 = vunpack.c.l.s4 1934713408
        %v2807 = vunpack.c.0.s8 %v2806
        %v2808 = vperm.slane %v2802, %v2807
        %v2810 = vunpack.c.l.s4 1934713408
        %v2811 = vunpack.c.0.s8 %v2810
        %v2812 = vperm.slane %v2804, %v2811
        %v2813 = vrot.slane %v2808, 4
        %v2814 = vsel %vm1627, 0.0, %v2813
        %v2815 = vrot.slane %v2812, 4
        %v2816 = vsel %vm1627, 0.0, %v2815
        %v2817 = vpack.c.bf16 %v2783, %v2783
        %v2818 = vpack.c.bf16 %v2808, %v2808
        %v2819 = vpack.c.bf16 %v2785, %v2785
        %v2820 = vpack.c.bf16 %v2814, %v2814
        %v2821 = vpack.c.bf16 %v2787, %v2787
        %v2822 = vpack.c.bf16 %v2812, %v2812
        %v2823 = vpack.c.bf16 %v2789, %v2789
        %v2824 = vpack.c.bf16 %v2816, %v2816
        %2827 = vrot.lane.b32.xlu0 %v2504, 120
        %v2828 = vpop.permute.xlu0 %2827
        %2829 = vrot.lane.b32.xlu0 %v2506, 120
        %v2830 = vpop.permute.xlu0 %2829
        %2833 = vrot.lane.b32.xlu0 %v2504, 112
        %v2834 = vpop.permute.xlu0 %2833
        %2835 = vrot.lane.b32.xlu0 %v2506, 112
        %v2836 = vpop.permute.xlu0 %2835
        %2839 = vrot.lane.b32.xlu0 %v2504, 104
        %v2840 = vpop.permute.xlu0 %2839
        %2841 = vrot.lane.b32.xlu0 %v2506, 104
        %v2842 = vpop.permute.xlu0 %2841
        %v2845 = vrot.slane %v2834, 4
        %v2846 = vsel %vm1627, %v2845, %v2504
        %v2847 = vrot.slane %v2504, 4
        %v2848 = vsel %vm1627, %v2834, %v2847
        %v2850 = vunpack.c.l.s4 1983009808
        %v2851 = vunpack.c.0.s8 %v2850
        %v2852 = vperm.slane %v2846, %v2851
        %v2854 = vunpack.c.l.s4 1983009808
        %v2855 = vunpack.c.0.s8 %v2854
        %v2856 = vperm.slane %v2848, %v2855
        %v2857 = vrot.slane %v2840, 4
        %v2858 = vsel %vm1627, %v2857, %v2828
        %v2859 = vrot.slane %v2828, 4
        %v2860 = vsel %vm1627, %v2840, %v2859
        %v2862 = vunpack.c.l.s4 1983009808
        %v2863 = vunpack.c.0.s8 %v2862
        %v2864 = vperm.slane %v2858, %v2863
        %v2866 = vunpack.c.l.s4 1983009808
        %v2867 = vunpack.c.0.s8 %v2866
        %v2868 = vperm.slane %v2860, %v2867
        %v2869 = vrot.slane %v2864, 4
        %v2870 = vsel %vm1627, %v2869, %v2852
        %v2871 = vrot.slane %v2852, 4
        %v2872 = vsel %vm1627, %v2864, %v2871
        %v2874 = vunpack.c.l.s4 1934713408
        %v2875 = vunpack.c.0.s8 %v2874
        %v2876 = vperm.slane %v2870, %v2875
        %v2878 = vunpack.c.l.s4 1934713408
        %v2879 = vunpack.c.0.s8 %v2878
        %v2880 = vperm.slane %v2872, %v2879
        %v2881 = vrot.slane %v2868, 4
        %v2882 = vsel %vm1627, %v2881, %v2856
        %v2883 = vrot.slane %v2856, 4
        %v2884 = vsel %vm1627, %v2868, %v2883
        %v2886 = vunpack.c.l.s4 1934713408
        %v2887 = vunpack.c.0.s8 %v2886
        %v2888 = vperm.slane %v2882, %v2887
        %v2890 = vunpack.c.l.s4 1934713408
        %v2891 = vunpack.c.0.s8 %v2890
        %v2892 = vperm.slane %v2884, %v2891
        %v2893 = vrot.slane %v2876, 4
        %v2894 = vsel %vm1627, 0.0, %v2893
        %v2895 = vrot.slane %v2880, 4
        %v2896 = vsel %vm1627, 0.0, %v2895
        %v2897 = vrot.slane %v2888, 4
        %v2898 = vsel %vm1627, 0.0, %v2897
        %v2899 = vrot.slane %v2892, 4
        %v2900 = vsel %vm1627, 0.0, %v2899
        %v2901 = vrot.slane %v2836, 4
        %v2902 = vsel %vm1627, %v2901, %v2506
        %v2904 = vunpack.c.l.s4 1983009808
        %v2905 = vunpack.c.0.s8 %v2904
        %v2906 = vperm.slane %v2902, %v2905
        %v2907 = vrot.slane %v2842, 4
        %v2908 = vsel %vm1627, %v2907, %v2830
        %v2910 = vunpack.c.l.s4 1983009808
        %v2911 = vunpack.c.0.s8 %v2910
        %v2912 = vperm.slane %v2908, %v2911
        %v2913 = vrot.slane %v2912, 4
        %v2914 = vsel %vm1627, %v2913, %v2906
        %v2915 = vrot.slane %v2906, 4
        %v2916 = vsel %vm1627, %v2912, %v2915
        %v2918 = vunpack.c.l.s4 1934713408
        %v2919 = vunpack.c.0.s8 %v2918
        %v2920 = vperm.slane %v2914, %v2919
        %v2922 = vunpack.c.l.s4 1934713408
        %v2923 = vunpack.c.0.s8 %v2922
        %v2924 = vperm.slane %v2916, %v2923
        %v2925 = vrot.slane %v2920, 4
        %v2926 = vsel %vm1627, 0.0, %v2925
        %v2927 = vrot.slane %v2924, 4
        %v2928 = vsel %vm1627, 0.0, %v2927
        %v2929 = vsel %vm1627, %v2895, %v2876
        %v2931 = vunpack.c.l.s4 1983009808
        %v2932 = vunpack.c.0.s8 %v2931
        %v2933 = vperm.slane %v2929, %v2932
        %v2934 = vrot.slane %v2896, 4
        %v2935 = vsel %vm1627, %v2934, %v2894
        %v2937 = vunpack.c.l.s4 1983009808
        %v2938 = vunpack.c.0.s8 %v2937
        %v2939 = vperm.slane %v2935, %v2938
        %v2940 = vsel %vm1627, %v2899, %v2888
        %v2942 = vunpack.c.l.s4 1983009808
        %v2943 = vunpack.c.0.s8 %v2942
        %v2944 = vperm.slane %v2940, %v2943
        %v2945 = vrot.slane %v2900, 4
        %v2946 = vsel %vm1627, %v2945, %v2898
        %v2948 = vunpack.c.l.s4 1983009808
        %v2949 = vunpack.c.0.s8 %v2948
        %v2950 = vperm.slane %v2946, %v2949
        %v2951 = vrot.slane %v2939, 4
        %v2952 = vsel %vm1627, %v2951, %v2933
        %v2953 = vrot.slane %v2933, 4
        %v2954 = vsel %vm1627, %v2939, %v2953
        %v2956 = vunpack.c.l.s4 1934713408
        %v2957 = vunpack.c.0.s8 %v2956
        %v2958 = vperm.slane %v2952, %v2957
        %v2960 = vunpack.c.l.s4 1934713408
        %v2961 = vunpack.c.0.s8 %v2960
        %v2962 = vperm.slane %v2954, %v2961
        %v2963 = vrot.slane %v2950, 4
        %v2964 = vsel %vm1627, %v2963, %v2944
        %v2965 = vrot.slane %v2944, 4
        %v2966 = vsel %vm1627, %v2950, %v2965
        %v2968 = vunpack.c.l.s4 1934713408
        %v2969 = vunpack.c.0.s8 %v2968
        %v2970 = vperm.slane %v2964, %v2969
        %v2972 = vunpack.c.l.s4 1934713408
        %v2973 = vunpack.c.0.s8 %v2972
        %v2974 = vperm.slane %v2966, %v2973
        %v2975 = vrot.slane %v2970, 4
        %v2976 = vsel %vm1627, %v2975, %v2958
        %v2977 = vrot.slane %v2958, 4
        %v2978 = vsel %vm1627, %v2970, %v2977
        %v2979 = vrot.slane %v2974, 4
        %v2980 = vsel %vm1627, %v2979, %v2962
        %v2981 = vrot.slane %v2962, 4
        %v2982 = vsel %vm1627, %v2974, %v2981
        %v2983 = vsel %vm1627, %v2927, %v2920
        %v2985 = vunpack.c.l.s4 1983009808
        %v2986 = vunpack.c.0.s8 %v2985
        %v2987 = vperm.slane %v2983, %v2986
        %v2988 = vrot.slane %v2928, 4
        %v2989 = vsel %vm1627, %v2988, %v2926
        %v2991 = vunpack.c.l.s4 1983009808
        %v2992 = vunpack.c.0.s8 %v2991
        %v2993 = vperm.slane %v2989, %v2992
        %v2994 = vrot.slane %v2993, 4
        %v2995 = vsel %vm1627, %v2994, %v2987
        %v2996 = vrot.slane %v2987, 4
        %v2997 = vsel %vm1627, %v2993, %v2996
        %v2999 = vunpack.c.l.s4 1934713408
        %v3000 = vunpack.c.0.s8 %v2999
        %v3001 = vperm.slane %v2995, %v3000
        %v3003 = vunpack.c.l.s4 1934713408
        %v3004 = vunpack.c.0.s8 %v3003
        %v3005 = vperm.slane %v2997, %v3004
        %v3006 = vrot.slane %v3001, 4
        %v3007 = vsel %vm1627, 0.0, %v3006
        %v3008 = vrot.slane %v3005, 4
        %v3009 = vsel %vm1627, 0.0, %v3008
        %v3010 = vpack.c.bf16 %v2976, %v2976
        %v3011 = vpack.c.bf16 %v3001, %v3001
        %v3012 = vpack.c.bf16 %v2978, %v2978
        %v3013 = vpack.c.bf16 %v3007, %v3007
        %v3014 = vpack.c.bf16 %v2980, %v2980
        %v3015 = vpack.c.bf16 %v3005, %v3005
        %v3016 = vpack.c.bf16 %v2982, %v2982
        %v3017 = vpack.c.bf16 %v3009, %v3009
        %v3020 = vunpack.c.l.b16 %v2817
        %v3021 = vunpack.c.l.b16 %v2818
        %v3022 = vpack.c.b16 %v3021, %v3020
        %v3024 = vsel %vm1989, %v2628, 0
        %v3027 = vsel %vm1989, %v3022, 0
        %3029 = vmatpush.bf16.xpose.msra.mxu0 0
        %3030 = vmatpush.bf16.xpose.msra.mxu0 0
        %3031 = vmatpush.bf16.xpose.msra.mxu0 0
        %3032 = vmatpush.bf16.xpose.msra.mxu0 0
        %3033 = vmatpush.bf16.xpose.msra.mxu0 0
        %3034 = vmatpush.bf16.xpose.msra.mxu0 0
        %3035 = vmatpush.bf16.xpose.msra.mxu0 0
        %3036 = vmatpush.bf16.xpose.msra.mxu0 %v3027
        %3037 = vmatmul.bf16.gmra.mxu0 %v3024
        %v3038 = vpop.f32.mrf.mxu0
        %v3039 = vadd.f32 0.0, %v3038
        %v3040 = vpop.f32.mrf.mxu0
        %3041 = vdwg.mxu0
        %v3044 = vunpack.c.l.b16 %v2819
        %v3045 = vunpack.c.l.b16 %v2820
        %v3046 = vpack.c.b16 %v3045, %v3044
        %v3048 = vsel %vm1989, %v2629, 0
        %v3051 = vsel %vm1989, %v3046, 0
        %3053 = vmatpush.bf16.xpose.msra.mxu0 0
        %3054 = vmatpush.bf16.xpose.msra.mxu0 0
        %3055 = vmatpush.bf16.xpose.msra.mxu0 0
        %3056 = vmatpush.bf16.xpose.msra.mxu0 0
        %3057 = vmatpush.bf16.xpose.msra.mxu0 0
        %3058 = vmatpush.bf16.xpose.msra.mxu0 0
        %3059 = vmatpush.bf16.xpose.msra.mxu0 0
        %3060 = vmatpush.bf16.xpose.msra.mxu0 %v3051
        %3061 = vmatmul.bf16.gmra.mxu0 %v3048
        %v3062 = vpop.f32.mrf.mxu0
        %v3063 = vadd.f32 0.0, %v3062
        %v3064 = vpop.f32.mrf.mxu0
        %3065 = vdwg.mxu0
        %v3068 = vunpack.c.l.b16 %v2821
        %v3069 = vunpack.c.l.b16 %v2822
        %v3070 = vpack.c.b16 %v3069, %v3068
        %v3072 = vsel %vm1989, %v2630, 0
        %v3075 = vsel %vm1989, %v3070, 0
        %3077 = vmatpush.bf16.xpose.msra.mxu0 0
        %3078 = vmatpush.bf16.xpose.msra.mxu0 0
        %3079 = vmatpush.bf16.xpose.msra.mxu0 0
        %3080 = vmatpush.bf16.xpose.msra.mxu0 0
        %3081 = vmatpush.bf16.xpose.msra.mxu0 0
        %3082 = vmatpush.bf16.xpose.msra.mxu0 0
        %3083 = vmatpush.bf16.xpose.msra.mxu0 0
        %3084 = vmatpush.bf16.xpose.msra.mxu0 %v3075
        %3085 = vmatmul.bf16.gmra.mxu0 %v3072
        %v3086 = vpop.f32.mrf.mxu0
        %v3087 = vadd.f32 0.0, %v3086
        %v3088 = vpop.f32.mrf.mxu0
        %3089 = vdwg.mxu0
        %v3092 = vunpack.c.l.b16 %v2823
        %v3093 = vunpack.c.l.b16 %v2824
        %v3094 = vpack.c.b16 %v3093, %v3092
        %v3096 = vsel %vm1989, %v2631, 0
        %v3099 = vsel %vm1989, %v3094, 0
        %3101 = vmatpush.bf16.xpose.msra.mxu0 0
        %3102 = vmatpush.bf16.xpose.msra.mxu0 0
        %3103 = vmatpush.bf16.xpose.msra.mxu0 0
        %3104 = vmatpush.bf16.xpose.msra.mxu0 0
        %3105 = vmatpush.bf16.xpose.msra.mxu0 0
        %3106 = vmatpush.bf16.xpose.msra.mxu0 0
        %3107 = vmatpush.bf16.xpose.msra.mxu0 0
        %3108 = vmatpush.bf16.xpose.msra.mxu0 %v3099
        %3109 = vmatmul.bf16.gmra.mxu0 %v3096
        %v3110 = vpop.f32.mrf.mxu0
        %v3111 = vadd.f32 0.0, %v3110
        %v3112 = vpop.f32.mrf.mxu0
        %3113 = vdwg.mxu0
        %v3114 = vmul.f32 %v3039, 0.35355338
        %v3115 = vmul.f32 %v3063, 0.35355338
        %v3116 = vmul.f32 %v3087, 0.35355338
        %v3117 = vmul.f32 %v3111, 0.35355338
        %v3119 = vperm.slane %v1463, 0
        %v3121 = vadd.f32 %v3114, %v3119
        %v3122 = vadd.f32 %v3115, %v3119
        %v3123 = vadd.f32 %v3116, %v3119
        %v3124 = vadd.f32 %v3117, %v3119
        %vm3125 = vcmask 97280
        %v3126 = vsel %vm3125, %v3121, -inf
        %3127 = vmax.xlane.f32.xlu0 %v3126
        %v3128 = vpop.xlane.xlu0 %3127
        %v3129 = vsel %vm3125, %v3122, -inf
        %3130 = vmax.xlane.f32.xlu0 %v3129
        %v3131 = vpop.xlane.xlu0 %3130
        %v3132 = vsel %vm3125, %v3123, -inf
        %3133 = vmax.xlane.f32.xlu0 %v3132
        %v3134 = vpop.xlane.xlu0 %3133
        %v3135 = vsel %vm3125, %v3124, -inf
        %3136 = vmax.xlane.f32.xlu0 %v3135
        %v3137 = vpop.xlane.xlu0 %3136
        %v3138 = vsub.f32 %v3121, %v3128
        %v3139 = vsub.f32 %v3122, %v3131
        %v3140 = vsub.f32 %v3123, %v3134
        %v3141 = vsub.f32 %v3124, %v3137
        %v3142 = vmul.f32 %v3138, 1.442695
        %v3143 = vpow.pop %v3142
        %v3144 = vmul.f32 %v3139, 1.442695
        %v3145 = vpow.pop %v3144
        %v3146 = vmul.f32 %v3140, 1.442695
        %v3147 = vpow.pop %v3146
        %v3148 = vmul.f32 %v3141, 1.442695
        %v3149 = vpow.pop %v3148
        %v3150 = vsel %vm3125, %v3143, 0.0
        %3151 = vadd.xlane.f32.xlu0 %v3150
        %v3152 = vpop.xlane.xlu0 %3151
        %v3153 = vsel %vm3125, %v3145, 0.0
        %3154 = vadd.xlane.f32.xlu0 %v3153
        %v3155 = vpop.xlane.xlu0 %3154
        %v3156 = vsel %vm3125, %v3147, 0.0
        %3157 = vadd.xlane.f32.xlu0 %v3156
        %v3158 = vpop.xlane.xlu0 %3157
        %v3159 = vsel %vm3125, %v3149, 0.0
        %3160 = vadd.xlane.f32.xlu0 %v3159
        %v3161 = vpop.xlane.xlu0 %3160
        %v3162 = vrcp.pop %v3152
        %v3163 = vrcp.pop %v3155
        %v3164 = vrcp.pop %v3158
        %v3165 = vrcp.pop %v3161
        %v3166 = vmul.f32 %v3143, %v3162
        %v3167 = vmul.f32 %v3145, %v3163
        %v3168 = vmul.f32 %v3147, %v3164
        %v3169 = vmul.f32 %v3149, %v3165
        %v3170 = vpack.c.bf16 %v3166, %v3166
        %v3171 = vpack.c.bf16 %v3167, %v3167
        %v3172 = vpack.c.bf16 %v3168, %v3168
        %v3173 = vpack.c.bf16 %v3169, %v3169
        %v3176 = vunpack.c.l.b16 %v3010
        %v3177 = vunpack.c.l.b16 %v3011
        %v3178 = vpack.c.b16 %v3177, %v3176
        %v3180 = vsel %vm3125, %v3170, 0
        %vm3182 = vcmask 1045504
        %v3184 = vsel %vm3182, %v3178, 0
        %3186 = vmatpush.bf16.msra.mxu0 0
        %3187 = vmatpush.bf16.msra.mxu0 0
        %3188 = vmatpush.bf16.msra.mxu0 0
        %3189 = vmatpush.bf16.msra.mxu0 0
        %3190 = vmatpush.bf16.msra.mxu0 0
        %3191 = vmatpush.bf16.msra.mxu0 0
        %3192 = vmatpush.bf16.msra.mxu0 0
        %3193 = vmatpush.bf16.msra.mxu0 %v3184
        %3194 = vmatmul.bf16.gmra.mxu0 %v3180
        %v3195 = vpop.f32.mrf.mxu0
        %v3196 = vadd.f32 0.0, %v3195
        %v3197 = vpop.f32.mrf.mxu0
        %3198 = vdwg.mxu0
        %v3201 = vunpack.c.l.b16 %v3012
        %v3202 = vunpack.c.l.b16 %v3013
        %v3203 = vpack.c.b16 %v3202, %v3201
        %v3205 = vsel %vm3125, %v3171, 0
        %v3208 = vsel %vm3182, %v3203, 0
        %3210 = vmatpush.bf16.msra.mxu0 0
        %3211 = vmatpush.bf16.msra.mxu0 0
        %3212 = vmatpush.bf16.msra.mxu0 0
        %3213 = vmatpush.bf16.msra.mxu0 0
        %3214 = vmatpush.bf16.msra.mxu0 0
        %3215 = vmatpush.bf16.msra.mxu0 0
        %3216 = vmatpush.bf16.msra.mxu0 0
        %3217 = vmatpush.bf16.msra.mxu0 %v3208
        %3218 = vmatmul.bf16.gmra.mxu0 %v3205
        %v3219 = vpop.f32.mrf.mxu0
        %v3220 = vadd.f32 0.0, %v3219
        %v3221 = vpop.f32.mrf.mxu0
        %3222 = vdwg.mxu0
        %v3225 = vunpack.c.l.b16 %v3014
        %v3226 = vunpack.c.l.b16 %v3015
        %v3227 = vpack.c.b16 %v3226, %v3225
        %v3229 = vsel %vm3125, %v3172, 0
        %v3232 = vsel %vm3182, %v3227, 0
        %3234 = vmatpush.bf16.msra.mxu0 0
        %3235 = vmatpush.bf16.msra.mxu0 0
        %3236 = vmatpush.bf16.msra.mxu0 0
        %3237 = vmatpush.bf16.msra.mxu0 0
        %3238 = vmatpush.bf16.msra.mxu0 0
        %3239 = vmatpush.bf16.msra.mxu0 0
        %3240 = vmatpush.bf16.msra.mxu0 0
        %3241 = vmatpush.bf16.msra.mxu0 %v3232
        %3242 = vmatmul.bf16.gmra.mxu0 %v3229
        %v3243 = vpop.f32.mrf.mxu0
        %v3244 = vadd.f32 0.0, %v3243
        %v3245 = vpop.f32.mrf.mxu0
        %3246 = vdwg.mxu0
        %v3249 = vunpack.c.l.b16 %v3016
        %v3250 = vunpack.c.l.b16 %v3017
        %v3251 = vpack.c.b16 %v3250, %v3249
        %v3253 = vsel %vm3125, %v3173, 0
        %v3256 = vsel %vm3182, %v3251, 0
        %3258 = vmatpush.bf16.msra.mxu0 0
        %3259 = vmatpush.bf16.msra.mxu0 0
        %3260 = vmatpush.bf16.msra.mxu0 0
        %3261 = vmatpush.bf16.msra.mxu0 0
        %3262 = vmatpush.bf16.msra.mxu0 0
        %3263 = vmatpush.bf16.msra.mxu0 0
        %3264 = vmatpush.bf16.msra.mxu0 0
        %3265 = vmatpush.bf16.msra.mxu0 %v3256
        %3266 = vmatmul.bf16.gmra.mxu0 %v3253
        %v3267 = vpop.f32.mrf.mxu0
        %v3268 = vadd.f32 0.0, %v3267
        %v3269 = vpop.f32.mrf.mxu0
        %3270 = vdwg.mxu0
        %v3271 = vrot.slane %v3244, 4
        %v3272 = vsel %vm1627, %v3271, %v3196
        %v3273 = vrot.slane %v3196, 4
        %v3274 = vsel %vm1627, %v3244, %v3273
        %v3276 = vunpack.c.l.s4 1983009808
        %v3277 = vunpack.c.0.s8 %v3276
        %v3278 = vperm.slane %v3272, %v3277
        %v3280 = vunpack.c.l.s4 1983009808
        %v3281 = vunpack.c.0.s8 %v3280
        %v3282 = vperm.slane %v3274, %v3281
        %v3283 = vrot.slane %v3268, 4
        %v3284 = vsel %vm1627, %v3283, %v3220
        %v3285 = vrot.slane %v3220, 4
        %v3286 = vsel %vm1627, %v3268, %v3285
        %v3288 = vunpack.c.l.s4 1983009808
        %v3289 = vunpack.c.0.s8 %v3288
        %v3290 = vperm.slane %v3284, %v3289
        %v3292 = vunpack.c.l.s4 1983009808
        %v3293 = vunpack.c.0.s8 %v3292
        %v3294 = vperm.slane %v3286, %v3293
        %v3295 = vrot.slane %v3290, 4
        %v3296 = vsel %vm1627, %v3295, %v3278
        %v3297 = vrot.slane %v3278, 4
        %v3298 = vsel %vm1627, %v3290, %v3297
        %v3300 = vunpack.c.l.s4 1934713408
        %v3301 = vunpack.c.0.s8 %v3300
        %v3302 = vperm.slane %v3296, %v3301
        %v3304 = vunpack.c.l.s4 1934713408
        %v3305 = vunpack.c.0.s8 %v3304
        %v3306 = vperm.slane %v3298, %v3305
        %v3307 = vrot.slane %v3294, 4
        %v3308 = vsel %vm1627, %v3307, %v3282
        %v3309 = vrot.slane %v3282, 4
        %v3310 = vsel %vm1627, %v3294, %v3309
        %v3312 = vunpack.c.l.s4 1934713408
        %v3313 = vunpack.c.0.s8 %v3312
        %v3314 = vperm.slane %v3308, %v3313
        %v3316 = vunpack.c.l.s4 1934713408
        %v3317 = vunpack.c.0.s8 %v3316
        %v3318 = vperm.slane %v3310, %v3317
        %v3319 = vrot.slane %v3302, 4
        %v3320 = vsel %vm1627, 0.0, %v3319
        %v3321 = vrot.slane %v3306, 4
        %v3322 = vsel %vm1627, 0.0, %v3321
        %v3323 = vrot.slane %v3314, 4
        %v3324 = vsel %vm1627, 0.0, %v3323
        %v3325 = vrot.slane %v3318, 4
        %v3326 = vsel %vm1627, 0.0, %v3325
        %v3327 = vsel %vm1627, %v3321, %v3302
        %v3329 = vunpack.c.l.s4 1983009808
        %v3330 = vunpack.c.0.s8 %v3329
        %v3331 = vperm.slane %v3327, %v3330
        %v3332 = vrot.slane %v3322, 4
        %v3333 = vsel %vm1627, %v3332, %v3320
        %v3335 = vunpack.c.l.s4 1983009808
        %v3336 = vunpack.c.0.s8 %v3335
        %v3337 = vperm.slane %v3333, %v3336
        %v3338 = vsel %vm1627, %v3325, %v3314
        %v3340 = vunpack.c.l.s4 1983009808
        %v3341 = vunpack.c.0.s8 %v3340
        %v3342 = vperm.slane %v3338, %v3341
        %v3343 = vrot.slane %v3326, 4
        %v3344 = vsel %vm1627, %v3343, %v3324
        %v3346 = vunpack.c.l.s4 1983009808
        %v3347 = vunpack.c.0.s8 %v3346
        %v3348 = vperm.slane %v3344, %v3347
        %v3349 = vrot.slane %v3337, 4
        %v3350 = vsel %vm1627, %v3349, %v3331
        %v3351 = vrot.slane %v3331, 4
        %v3352 = vsel %vm1627, %v3337, %v3351
        %v3354 = vunpack.c.l.s4 1934713408
        %v3355 = vunpack.c.0.s8 %v3354
        %v3356 = vperm.slane %v3350, %v3355
        %v3358 = vunpack.c.l.s4 1934713408
        %v3359 = vunpack.c.0.s8 %v3358
        %v3360 = vperm.slane %v3352, %v3359
        %v3361 = vrot.slane %v3348, 4
        %v3362 = vsel %vm1627, %v3361, %v3342
        %v3363 = vrot.slane %v3342, 4
        %v3364 = vsel %vm1627, %v3348, %v3363
        %v3366 = vunpack.c.l.s4 1934713408
        %v3367 = vunpack.c.0.s8 %v3366
        %v3368 = vperm.slane %v3362, %v3367
        %v3370 = vunpack.c.l.s4 1934713408
        %v3371 = vunpack.c.0.s8 %v3370
        %v3372 = vperm.slane %v3364, %v3371
        %v3373 = vrot.slane %v3368, 4
        %v3374 = vsel %vm1627, %v3373, %v3356
        %v3375 = vrot.slane %v3356, 4
        %v3376 = vsel %vm1627, %v3368, %v3375
        %v3377 = vrot.slane %v3372, 4
        %v3378 = vsel %vm1627, %v3377, %v3360
        %v3379 = vrot.slane %v3360, 4
        %v3380 = vsel %vm1627, %v3372, %v3379
        %3382 = vrot.lane.b32.xlu0 %v3376, 8
        %v3383 = vpop.permute.xlu0 %3382
        %3386 = vrot.lane.b32.xlu0 %v3378, 16
        %v3387 = vpop.permute.xlu0 %3386
        %3390 = vrot.lane.b32.xlu0 %v3380, 24
        %v3391 = vpop.permute.xlu0 %3390
        %v3393 = vsel %vm1989, %v3374, %v3383
        %v3394 = vsel %vm2322, %v3393, %v3387
        %v3395 = vsel %vm2324, %v3394, %v3391
        %v3396 = vpack.c.bf16 %v3395, %v3395
        %v3398 = vperm.slane %v2413, 0
        %v3404 = vunpack.c.l.b16 %v2409
        %v3405 = vunpack.c.l.b16 %v2410
        %v3406 = vunpack.c.l.b16 %v2411
        %v3407 = vunpack.c.l.b16 %v2412
        %v3408 = vpack.c.b16 %v3405, %v3404
        %v3409 = vpack.c.b16 %v3407, %v3406
        %v3413 = vsel %vm1467, %v3396, 0
        %3415 = vmatpush.bf16.msra.mxu0 0
        %3416 = vmatpush.bf16.msra.mxu0 0
        %3417 = vmatpush.bf16.msra.mxu0 0
        %3418 = vmatpush.bf16.msra.mxu0 0
        %3419 = vmatpush.bf16.msra.mxu0 0
        %3420 = vmatpush.bf16.msra.mxu0 0
        %3421 = vmatpush.bf16.msra.mxu0 %v3409
        %3422 = vmatpush.bf16.msra.mxu0 %v3408
        %3423 = vmatmul.bf16.gmra.mxu0 %v3413
        %v3424 = vpop.f32.mrf.mxu0
        %v3425 = vadd.f32 %v3398, %v3424
        %v3426 = vpop.f32.mrf.mxu0
        %3427 = vdwg.mxu0
        %v3428 = vadd.f32 %v2358, %v3425
        %v3429 = vld [vmem:[%s1448] sm:$0x1]
        %v3430 = vld [vmem:[%s1451] sm:$0x1]
        %v3431 = vsel %vm1467, %v3428, 0.0
        %3432 = vadd.xlane.f32.xlu0 %v3431
        %v3433 = vpop.xlane.xlu0 %3432
        %v3434 = vmul.f32 %v3433, %v1477
        %v3435 = vsub.f32 %v3428, %v3434
        %v3436 = vmul.f32 %v3435, %v3435
        %v3437 = vsel %vm1467, %v3436, 0.0
        %3438 = vadd.xlane.f32.xlu0 %v3437
        %v3439 = vpop.xlane.xlu0 %3438
        %v3440 = vmul.f32 %v3439, 0.032258064
        %v3441 = vrsqrt.pop %v3440
        %v3442 = vmul.f32 %v3441, %v3440
        %v3443 = vmul.f32 %v3442, %v3441
        %v3444 = vmul.f32 0.5, %v3443
        %v3445 = vsub.f32 1.5, %v3444
        %v3446 = vmul.f32 %v3441, %v3445
        %v3447 = vmul.f32 %v3440, %v3446
        %vm3448 = vcmp.eq.f32.partialorder %v3440, inf
        %v3449 = vsel %vm3448, %v3440, %v3447
        %vm3450 = vcmp.eq.f32.partialorder %v3440, 0.0
        %v3451 = vand.u32 %v3440, 2147483648
        %v3452 = vsel %vm3450, %v3451, %v3449
        %v3453 = vadd.f32 %v3452, 1e-06
        %v3454 = vrcp.pop %v3453
        %v3456 = vperm.slane %v3429, 0
        %v3458 = vmul.f32 %v3456, %v3435
        %v3459 = vmul.f32 %v3458, %v3454
        %v3461 = vperm.slane %v3430, 0
        %v3463 = vadd.f32 %v3459, %v3461
        %v3464 = vpack.c.bf16 %v3463, %v3463
        %v3465 = vld [vmem:[%s1422] sm:$0xf]
        %v3466 = vld [vmem:[%s1422 + $0x4] sm:$0xf]
        %v3467 = vld [vmem:[%s1422 + $0x8] sm:$0xf]
        %v3468 = vld [vmem:[%s1422 + $0xc] sm:$0xf]
        %v3469 = vld [vmem:[%s1425] sm:$0x1]
        %v3471 = vperm.slane %v3469, 0
        %v3477 = vunpack.c.l.b16 %v3465
        %v3478 = vunpack.c.l.b16 %v3466
        %v3479 = vunpack.c.l.b16 %v3467
        %v3480 = vunpack.c.l.b16 %v3468
        %v3481 = vpack.c.b16 %v3478, %v3477
        %v3482 = vpack.c.b16 %v3480, %v3479
        %v3486 = vsel %vm1467, %v3464, 0
        %3488 = vmatpush.bf16.msra.mxu0 0
        %3489 = vmatpush.bf16.msra.mxu0 0
        %3490 = vmatpush.bf16.msra.mxu0 0
        %3491 = vmatpush.bf16.msra.mxu0 0
        %3492 = vmatpush.bf16.msra.mxu0 0
        %3493 = vmatpush.bf16.msra.mxu0 0
        %3494 = vmatpush.bf16.msra.mxu0 %v3482
        %3495 = vmatpush.bf16.msra.mxu0 %v3481
        %3496 = vmatmul.bf16.gmra.mxu0 %v3486
        %v3497 = vpop.f32.mrf.mxu0
        %v3498 = vadd.f32 %v3471, %v3497
        %v3499 = vpop.f32.mrf.mxu0
        %3500 = vdwg.mxu0
        %v3501 = vmax.f32 %v3498, 0.0
        %v3502 = vpack.c.bf16 %v3501, %v3501
        %v3503 = vld [vmem:[%s1430] sm:$0xf]
        %v3504 = vld [vmem:[%s1430 + $0x4] sm:$0xf]
        %v3505 = vld [vmem:[%s1430 + $0x8] sm:$0xf]
        %v3506 = vld [vmem:[%s1430 + $0xc] sm:$0xf]
        %v3507 = vld [vmem:[%s1430 + $0x10] sm:$0xf]
        %v3508 = vld [vmem:[%s1430 + $0x14] sm:$0xf]
        %v3509 = vld [vmem:[%s1430 + $0x18] sm:$0xf]
        %v3510 = vld [vmem:[%s1430 + $0x1c] sm:$0xf]
        %v3519 = vunpack.c.l.b16 %v3503
        %v3520 = vunpack.c.l.b16 %v3504
        %v3521 = vunpack.c.l.b16 %v3505
        %v3522 = vunpack.c.l.b16 %v3506
        %v3523 = vunpack.c.l.b16 %v3507
        %v3524 = vunpack.c.l.b16 %v3508
        %v3525 = vunpack.c.l.b16 %v3509
        %v3526 = vunpack.c.l.b16 %v3510
        %v3527 = vpack.c.b16 %v3520, %v3519
        %v3528 = vpack.c.b16 %v3522, %v3521
        %v3529 = vpack.c.b16 %v3524, %v3523
        %v3530 = vpack.c.b16 %v3526, %v3525
        %vm3535 = vcmask 523264
        %v3537 = vsel %vm3535, %v3502, 0
        %3539 = vmatpush.bf16.msra.mxu0 0
        %3540 = vmatpush.bf16.msra.mxu0 0
        %3541 = vmatpush.bf16.msra.mxu0 0
        %3542 = vmatpush.bf16.msra.mxu0 0
        %3543 = vmatpush.bf16.msra.mxu0 %v3530
        %3544 = vmatpush.bf16.msra.mxu0 %v3529
        %3545 = vmatpush.bf16.msra.mxu0 %v3528
        %3546 = vmatpush.bf16.msra.mxu0 %v3527
        %3547 = vmatmul.bf16.gmra.mxu0 %v3537
        %v3548 = vpop.f32.mrf.mxu0
        %v3549 = vadd.f32 0.0, %v3548
        %v3550 = vpop.f32.mrf.mxu0
        %3551 = vdwg.mxu0
        %v3552 = vadd.f32 %v3428, %v3549
        %v3553 = vld [vmem:[%s1433] sm:$0x1]
        %v3555 = vperm.slane %v3553, 0
        %v3557 = vadd.f32 %v3552, %v3555
        %3558 = vst.msk [vmem:[#allocation2] sm:$0xff] %vm1467, %v3557
        %3559 = vst.msk [vmem:[%s1341] sm:$0xff] %vm1467, %v3557
        %p3560 = scmp.eq.s32.totalorder %s84, 1
        // Predicated region
        $region153: #{decoder_forward.1} parent=147 // pred_check
          %p3561 = pneg %p3560
        $region154: #{decoder_forward.1} parent=147 // pred_check_branch
          %3563 = sbr.rel (%p3561) target = $region156
        $region155: #{decoder_forward.1} parent=147 // pred_region
          %v3564 = vld [vmem:[%s61] sm:$0x1]
          %v3565 = vld [vmem:[%s63] sm:$0x1]
          %v3566 = vsel %vm1467, %v3557, 0.0
          %3567 = vadd.xlane.f32.xlu0 %v3566
          %v3568 = vpop.xlane.xlu0 %3567
          %v3569 = vmul.f32 %v3568, %v1477
          %v3570 = vsub.f32 %v3557, %v3569
          %v3571 = vmul.f32 %v3570, %v3570
          %v3572 = vsel %vm1467, %v3571, 0.0
          %3573 = vadd.xlane.f32.xlu0 %v3572
          %v3574 = vpop.xlane.xlu0 %3573
          %v3575 = vmul.f32 %v3574, 0.032258064
          %v3576 = vrsqrt.pop %v3575
          %v3577 = vmul.f32 %v3576, %v3575
          %v3578 = vmul.f32 %v3577, %v3576
          %v3579 = vmul.f32 0.5, %v3578
          %v3580 = vsub.f32 1.5, %v3579
          %v3581 = vmul.f32 %v3576, %v3580
          %v3582 = vmul.f32 %v3575, %v3581
          %vm3583 = vcmp.eq.f32.partialorder %v3575, inf
          %v3584 = vsel %vm3583, %v3575, %v3582
          %vm3585 = vcmp.eq.f32.partialorder %v3575, 0.0
          %v3586 = vand.u32 %v3575, 2147483648
          %v3587 = vsel %vm3585, %v3586, %v3584
          %v3588 = vadd.f32 %v3587, 1e-06
          %v3589 = vrcp.pop %v3588
          %v3591 = vperm.slane %v3564, 0
          %v3593 = vmul.f32 %v3591, %v3570
          %v3594 = vmul.f32 %v3593, %v3589
          %v3596 = vperm.slane %v3565, 0
          %v3598 = vadd.f32 %v3594, %v3596
          %3599 = vst.msk [vmem:[%s1341] sm:$0xff] %vm1467, %v3598
        $region156: #{decoder_forward.1} parent=147 // pred_fallthru
          _
        %s3600 = sand.u32 %s916, 1
        %s3601 = scalar_lea.sflag [#allocation4], %s3600
        %s3602 = sand.u32 %s916, 1
        %s3603 = smul.addr %s3602, 8
        %s3604 = scalar_lea.vmem [#allocation3], %s3603
        // Predicated region
        $region157: #{decoder_forward.1} parent=147 // pred_check
          %p3605 = pneg %p926
        $region158: #{decoder_forward.1} parent=147 // pred_check_branch
          %3607 = sbr.rel (%p3605) target = $region160
        $region159: #{decoder_forward.1} parent=147 // pred_region
          %3609 = vsyncadd %s3601, 0
          %s3610 = smul.addr %s83, 8
          %s3611 = scalar_lea.hbm %s65, %s3610
          %s3613 = sshll.u32 %s3604, 4
          %s3614 = int_to_ptr.vmem [resolvable:$true] %s3613
          %s3615 = sshll.u32 %s3611, 4
          %s3616 = int_to_ptr.hbm [resolvable:$true] %s3615
          %3618 = dma.vmem_to_hbm [thread:$0]  %s3614, 128, %s3616, %s3601
        $region160: #{decoder_forward.1} parent=147 // pred_fallthru
          _
      $region148: #{decoder_forward.1} parent=5 // pred_fallthru
        _
      %p3619 = scmp.le.s32.totalorder 2, %s74
      // Predicated region
      $region161: #{decoder_forward.1} parent=5 // pred_check
        %p3620 = pneg %p3619
      $region162: #{decoder_forward.1} parent=5 // pred_check_branch
        %3622 = sbr.rel (%p3620) target = $region164
      $region163: #{decoder_forward.1} parent=5 // pred_region
        %s3623 = ssub.s32 %s74, 2
        // Predicated region
        $region165: #{decoder_forward.1} parent=163 // pred_check
          %p3624 = pneg %p932
        $region166: #{decoder_forward.1} parent=163 // pred_check_branch
          %3626 = sbr.rel (%p3624) target = $region168
        $region167: #{decoder_forward.1} parent=163 // pred_region
          %s3627 = sand.u32 %s917, 1
          %s3628 = scalar_lea.sflag [#allocation4], %s3627
          %s3629 = sand.u32 %s917, 1
          %s3630 = smul.addr %s3629, 8
          %s3631 = scalar_lea.vmem [#allocation3], %s3630
          %3633 = dma.done %s3628, 128
        $region168: #{decoder_forward.1} parent=163 // pred_fallthru
          _
      $region164: #{decoder_forward.1} parent=5 // pred_fallthru
        _
    $region6: #{decoder_forward.1} parent=1 // loop_footer
      %s78 = sadd.s32 1, %s74
    $region7: #{decoder_forward.1} parent=1 // loop_footer_branch
      %73 = sbr.rel target = $region3
    $region8: #{decoder_forward.1} parent=1 // loop_exit
      _
    %3634 = vsyncpa [#allocation4], 1
    %s3635 = scalar_lea.sflag [#allocation4], 1
    %3636 = vsyncpa %s3635, 1

</llo_original>
